<compile_context>
chip_gen: v5e
topology: v5e:2x2
jax: 0.10.0
libtpu: 0.0.40
codegen_flags: <defaults>
</compile_context>

<pallas_src>
import jax
import jax.numpy as jnp
from jax import lax
from jax.experimental import pallas as pl
from jax.experimental.pallas import tpu as pltpu

NEG = -1e30  # stand-in for -inf used by the 3x3 maxpool padding


def make_inception_kernel(H, W, c1, c20, c21, c30, c31, c4):
    HW = H * W
    P3 = W + 1      # flat-pad width needed for 3x3 taps (and the 3x3 maxpool)
    P5 = 2 * W + 2  # flat-pad width needed for 5x5 taps

    def kernel(x_ref, wA_ref, bA_ref, w22_ref, b22_ref, w32_ref, b32_ref,
               w4_ref, b4_ref, o_ref, pad2, pad3, padx, patch2, patch3):
        x = x_ref[0]                                         # (Cin, HW)

        # column index of every flattened pixel (for masking W-direction wrap)
        col = lax.broadcasted_iota(jnp.int32, (1, HW), 1) % W

        def mm(w, a):
            return jnp.dot(w, a, preferred_element_type=jnp.float32)

        # ---- fused 1x1 reduce convs (branches 1, 2a, 3a): one MXU pass -----
        hA = jnp.maximum(mm(wA_ref[...], x) + bA_ref[...], 0.0)
        p1 = hA[:c1]                                         # (c1,  HW)
        h2 = hA[c1:c1 + c20]                                 # (c20, HW)
        h3 = hA[c1 + c20:c1 + c20 + c30]                     # (c30, HW)

        def write_flat_pad(ref, val, pad, fill):
            # only the small borders + interior are written (no full re-zero)
            c = val.shape[0]
            ref[:, :pad] = jnp.full((c, pad), fill, jnp.float32)
            ref[:, pad + HW:] = jnp.full((c, pad), fill, jnp.float32)
            ref[:, pad:pad + HW] = val

        def fill_patches(patch_ref, pad_ref, pad, r, c):
            # im2col: stack the (2r+1)^2 shifted taps along the K dimension
            i = 0
            for oy in range(-r, r + 1):
                for ox in range(-r, r + 1):
                    start = pad + oy * W + ox
                    tap = pad_ref[:, start:start + HW]
                    ok = (col + ox >= 0) & (col + ox < W)
                    patch_ref[i * c:(i + 1) * c, :] = jnp.where(ok, tap, 0.0)
                    i += 1

        # ---- branch 2: 3x3 conv (pad=1) as ONE matmul, K = 9*c20 -----------
        write_flat_pad(pad2, h2, P3, 0.0)
        fill_patches(patch2, pad2, P3, 1, c20)
        p2 = jnp.maximum(mm(w22_ref[...], patch2[...]) + b22_ref[...], 0.0)

        # ---- branch 3: 5x5 conv (pad=2) as ONE matmul, K = 25*c30 ----------
        write_flat_pad(pad3, h3, P5, 0.0)
        fill_patches(patch3, pad3, P5, 2, c30)
        p3 = jnp.maximum(mm(w32_ref[...], patch3[...]) + b32_ref[...], 0.0)

        # ---- branch 4: 3x3 maxpool (stride 1, -inf pad=1) -> 1x1 conv ------
        write_flat_pad(padx, x, P3, NEG)
        pool = None
        for oy in (-1, 0, 1):
            for ox in (-1, 0, 1):
                start = P3 + oy * W + ox
                tap = padx[:, start:start + HW]
                ok = (col + ox >= 0) & (col + ox < W)
                t = jnp.where(ok, tap, NEG)
                pool = t if pool is None else jnp.maximum(pool, t)
        p4 = jnp.maximum(mm(w4_ref[...], pool) + b4_ref[...], 0.0)

        # ---- channel concat (== torch.cat(..., dim=1) in NCHW) -------------
        o_ref[0, :c1, :] = p1
        o_ref[0, c1:c1 + c21, :] = p2
        o_ref[0, c1 + c21:c1 + c21 + c31, :] = p3
        o_ref[0, c1 + c21 + c31:, :] = p4

    return kernel


def inception_forward(x_nchw, params):
    N, Cin, H, W = x_nchw.shape
    HW = H * W
    (w1, b1, w21, b21, w22, b22, w31, b31, w32, b32, w4, b4) = params
    c1, c20, c21 = w1.shape[1], w21.shape[1], w22.shape[-1]
    c30, c31, c4 = w31.shape[1], w32.shape[-1], w4.shape[1]
    Cout = c1 + c21 + c31 + c4

    # NCHW with flattened spatial dim -> lane-dense (C, H*W) tiles, no transpose
    x = x_nchw.reshape(N, Cin, HW).astype(jnp.float32)

    # Host-side weight prep (tiny, one-off): fuse the 1x1 reduce convs and
    # flatten the spatial kernels so each conv is a single matmul in-kernel.
    wA = jnp.concatenate([w1, w21, w31], axis=1).T           # (c1+c20+c30, Cin)
    bA = jnp.concatenate([b1, b21, b31], axis=1).T           # (c1+c20+c30, 1)
    w22r = w22.reshape(9 * c20, c21).T                       # (c21, 9*c20)
    w32r = w32.reshape(25 * c30, c31).T                      # (c31, 25*c30)
    weights = (wA, bA, w22r, b22.T, w32r, b32.T, w4.T, b4.T)

    kern = make_inception_kernel(H, W, c1, c20, c21, c30, c31, c4)

    P3, P5 = W + 1, 2 * W + 2
    in_specs = [pl.BlockSpec((1, Cin, HW), lambda n: (n, 0, 0))]
    in_specs += [pl.BlockSpec(wgt.shape, lambda n: (0, 0)) for wgt in weights]

    flops = 2 * N * HW * (Cin * (c1 + c20 + c30) + 9 * c20 * c21
                          + 25 * c30 * c31 + Cin * c4)
    bytes_accessed = 4 * (int(x.size) + N * Cout * HW
                          + sum(int(wgt.size) for wgt in weights))

    out = pl.pallas_call(
        kern,
        out_shape=jax.ShapeDtypeStruct((N, Cout, HW), jnp.float32),
        grid_spec=pltpu.PrefetchScalarGridSpec(
            num_scalar_prefetch=0,
            grid=(N,),
            in_specs=in_specs,
            out_specs=pl.BlockSpec((1, Cout, HW), lambda n: (n, 0, 0)),
            scratch_shapes=[
                pltpu.VMEM((c20, HW + 2 * P3), jnp.float32),   # padded h2
                pltpu.VMEM((c30, HW + 2 * P5), jnp.float32),   # padded h3
                pltpu.VMEM((Cin, HW + 2 * P3), jnp.float32),   # padded x (pool)
                pltpu.VMEM((9 * c20, HW), jnp.float32),        # im2col 3x3
                pltpu.VMEM((25 * c30, HW), jnp.float32),       # im2col 5x5
            ]),
        compiler_params=pltpu.CompilerParams(
            dimension_semantics=("parallel",)),
        cost_estimate=pl.CostEstimate(flops=flops, transcendentals=0,
                                      bytes_accessed=bytes_accessed),
    )(x, *weights)
    return out.reshape(N, Cout, H, W)


def init_params(key, in_channels, c1, c2, c3, c4):
    ks = jax.random.split(key, 12)
    w = lambda k, s: jax.random.normal(k, s, jnp.float32) * 0.1
    return (
        w(ks[0], (in_channels, c1)),        w(ks[1], (1, c1)),
        w(ks[2], (in_channels, c2[0])),     w(ks[3], (1, c2[0])),
        w(ks[4], (3, 3, c2[0], c2[1])),     w(ks[5], (1, c2[1])),
        w(ks[6], (in_channels, c3[0])),     w(ks[7], (1, c3[0])),
        w(ks[8], (5, 5, c3[0], c3[1])),     w(ks[9], (1, c3[1])),
        w(ks[10], (in_channels, c4)),       w(ks[11], (1, c4)),
    )


def reference(x_nchw, params):
    """Pure-JAX reference matching the PyTorch forward semantics."""
    x = jnp.transpose(x_nchw, (0, 2, 3, 1)).astype(jnp.float32)
    (w1, b1, w21, b21, w22, b22, w31, b31, w32, b32, w4, b4) = params
    dn = ('NHWC', 'HWIO', 'NHWC')

    def conv(inp, w, b, pad):
        if w.ndim == 2:
            w = w.reshape(1, 1, *w.shape)
        out = lax.conv_general_dilated(inp, w, (1, 1),
                                       [(pad, pad), (pad, pad)],
                                       dimension_numbers=dn)
        return out + b.reshape(1, 1, 1, -1)

    relu = lambda v: jnp.maximum(v, 0.0)
    p1 = relu(conv(x, w1, b1, 0))
    p2 = relu(conv(relu(conv(x, w21, b21, 0)), w22, b22, 1))
    p3 = relu(conv(relu(conv(x, w31, b31, 0)), w32, b32, 2))
    pool = lax.reduce_window(x, -jnp.inf, lax.max, (1, 3, 3, 1), (1, 1, 1, 1),
                             [(0, 0), (1, 1), (1, 1), (0, 0)])
    p4 = relu(conv(pool, w4, b4, 0))
    out = jnp.concatenate([p1, p2, p3, p4], axis=-1)
    return jnp.transpose(out, (0, 3, 1, 2))


if __name__ == "__main__":
    key = jax.random.PRNGKey(0)
    kx, kp = jax.random.split(key)

    N, Cin, H, W = 2, 4, 16, 16
    c1, c2, c3, c4 = 4, (4, 8), (2, 4), 4

    x = jax.random.normal(kx, (N, Cin, H, W), jnp.float32)
    params = init_params(kp, Cin, c1, c2, c3, c4)

    out = inception_forward(x, params)
    out = jax.block_until_ready(out)

    ref = reference(x, params)
    assert out.shape == (N, c1 + c2[1] + c3[1] + c4, H, W), out.shape
    assert jnp.allclose(out, ref, atol=1e-4, rtol=1e-4), \
        float(jnp.max(jnp.abs(out - ref)))

    print("KERNEL_OK")
</pallas_src>

<mosaic_0001>
module attributes {stable_mosaic.version = 11 : i64} {
  func.func @kernel(%arg0: i32, %arg1: memref<1x4x256xf32, #tpu.memory_space<vmem>>, %arg2: memref<10x4xf32, #tpu.memory_space<vmem>>, %arg3: memref<10x1xf32, #tpu.memory_space<vmem>>, %arg4: memref<8x36xf32, #tpu.memory_space<vmem>>, %arg5: memref<8x1xf32, #tpu.memory_space<vmem>>, %arg6: memref<4x50xf32, #tpu.memory_space<vmem>>, %arg7: memref<4x1xf32, #tpu.memory_space<vmem>>, %arg8: memref<4x4xf32, #tpu.memory_space<vmem>>, %arg9: memref<4x1xf32, #tpu.memory_space<vmem>>, %arg10: memref<1x20x256xf32, #tpu.memory_space<vmem>>, %arg11: memref<4x290xf32, #tpu.memory_space<vmem>>, %arg12: memref<2x324xf32, #tpu.memory_space<vmem>>, %arg13: memref<4x290xf32, #tpu.memory_space<vmem>>, %arg14: memref<36x256xf32, #tpu.memory_space<vmem>>, %arg15: memref<50x256xf32, #tpu.memory_space<vmem>>) attributes {dimension_semantics = [#tpu.dimension_semantics<parallel>], iteration_bounds = array<i64: 2>, scalar_prefetch = 0 : i64, scratch_operands = 5 : i64, tpu.core_type = #tpu.core_type<tc>, window_params = [{transform_indices = @transform_0, window_bounds = array<i64: 1, 4, 256>}, {pipeline_mode = #tpu.pipeline_mode<synchronous>, transform_indices = @transform_1, window_bounds = array<i64: 10, 4>}, {pipeline_mode = #tpu.pipeline_mode<synchronous>, transform_indices = @transform_2, window_bounds = array<i64: 10, 1>}, {pipeline_mode = #tpu.pipeline_mode<synchronous>, transform_indices = @transform_3, window_bounds = array<i64: 8, 36>}, {pipeline_mode = #tpu.pipeline_mode<synchronous>, transform_indices = @transform_4, window_bounds = array<i64: 8, 1>}, {pipeline_mode = #tpu.pipeline_mode<synchronous>, transform_indices = @transform_5, window_bounds = array<i64: 4, 50>}, {pipeline_mode = #tpu.pipeline_mode<synchronous>, transform_indices = @transform_6, window_bounds = array<i64: 4, 1>}, {pipeline_mode = #tpu.pipeline_mode<synchronous>, transform_indices = @transform_7, window_bounds = array<i64: 4, 4>}, {pipeline_mode = #tpu.pipeline_mode<synchronous>, transform_indices = @transform_8, window_bounds = array<i64: 4, 1>}, {transform_indices = @transform_9, window_bounds = array<i64: 1, 20, 256>}]} {
    %c0 = arith.constant 0 : index
    %c0_0 = arith.constant 0 : index
    %c0_1 = arith.constant 0 : index
    %0 = vector.load %arg1[%c0, %c0_0, %c0_1] : memref<1x4x256xf32, #tpu.memory_space<vmem>>, vector<1x4x256xf32>
    %1 = vector.shape_cast %0 : vector<1x4x256xf32> to vector<4x256xf32>
    %2 = tpu.iota {dimensions = array<i32: 1>} : vector<1x256xi32>
    %c16_i32 = arith.constant 16 : i32
    %c0_i32 = arith.constant 0 : i32
    %3 = arith.cmpi eq, %c16_i32, %c0_i32 : i32
    %c1_i32 = arith.constant 1 : i32
    %4 = arith.select %3, %c1_i32, %c16_i32 : i32
    %5 = vector.broadcast %4 : i32 to vector<1x256xi32>
    %6 = arith.remsi %2, %5 : vector<1x256xi32>
    %c0_i32_2 = arith.constant 0 : i32
    %7 = vector.broadcast %c0_i32_2 : i32 to vector<1x256xi32>
    %8 = arith.cmpi ne, %6, %7 : vector<1x256xi32>
    %c0_i32_3 = arith.constant 0 : i32
    %9 = vector.broadcast %c0_i32_3 : i32 to vector<1x256xi32>
    %10 = arith.cmpi slt, %6, %9 : vector<1x256xi32>
    %c0_i32_4 = arith.constant 0 : i32
    %11 = arith.cmpi slt, %4, %c0_i32_4 : i32
    %12 = vector.broadcast %11 : i1 to vector<1x256xi1>
    %13 = vector.broadcast %12 : vector<1x256xi1> to vector<1x256xi1>
    %14 = arith.xori %10, %13 : vector<1x256xi1>
    %15 = arith.andi %14, %8 : vector<1x256xi1>
    %16 = vector.broadcast %4 : i32 to vector<1x256xi32>
    %17 = arith.addi %6, %16 : vector<1x256xi32>
    %18 = arith.select %15, %17, %6 : vector<1x256xi1>, vector<1x256xi32>
    %c0_5 = arith.constant 0 : index
    %c0_6 = arith.constant 0 : index
    %19 = vector.load %arg2[%c0_5, %c0_6] : memref<10x4xf32, #tpu.memory_space<vmem>>, vector<10x4xf32>
    %cst = arith.constant dense<0.000000e+00> : vector<10x256xf32>
    %20 = tpu.matmul %19, %1, %cst {dimension_numbers = #tpu.dot_dimension_numbers<[1], [0], [0], [1], [0, 0, 1, 1], [], []>} : vector<10x4xf32>, vector<4x256xf32>, vector<10x256xf32> -> vector<10x256xf32>
    %c0_7 = arith.constant 0 : index
    %c0_8 = arith.constant 0 : index
    %21 = vector.load %arg3[%c0_7, %c0_8] : memref<10x1xf32, #tpu.memory_space<vmem>>, vector<10x1xf32>
    %22 = vector.broadcast %21 : vector<10x1xf32> to vector<10x256xf32>
    %23 = arith.addf %20, %22 : vector<10x256xf32>
    %cst_9 = arith.constant 0.000000e+00 : f32
    %24 = vector.broadcast %cst_9 : f32 to vector<10x256xf32>
    %25 = arith.maximumf %23, %24 : vector<10x256xf32>
    %26 = vector.extract_strided_slice %25 {offsets = [0, 0], sizes = [4, 256], strides = [1, 1]} : vector<10x256xf32> to vector<4x256xf32>
    %27 = vector.extract_strided_slice %25 {offsets = [4, 0], sizes = [4, 256], strides = [1, 1]} : vector<10x256xf32> to vector<4x256xf32>
    %28 = vector.extract_strided_slice %25 {offsets = [8, 0], sizes = [2, 256], strides = [1, 1]} : vector<10x256xf32> to vector<2x256xf32>
    %cst_10 = arith.constant 0.000000e+00 : f32
    %29 = vector.broadcast %cst_10 : f32 to vector<4x17xf32>
    %c0_11 = arith.constant 0 : index
    %c0_12 = arith.constant 0 : index
    %30 = vector.load %arg11[%c0_11, %c0_12] : memref<4x290xf32, #tpu.memory_space<vmem>>, vector<4x17xf32>
    tpu.vector_store %arg11[%c0_11, %c0_12], %29 {strides = array<i32>} : memref<4x290xf32, #tpu.memory_space<vmem>>, vector<4x17xf32>,
    %cst_13 = arith.constant 0.000000e+00 : f32
    %31 = vector.broadcast %cst_13 : f32 to vector<4x17xf32>
    %c0_14 = arith.constant 0 : index
    %c273 = arith.constant 273 : index
    %32 = vector.load %arg11[%c0_14, %c273] : memref<4x290xf32, #tpu.memory_space<vmem>>, vector<4x17xf32>
    tpu.vector_store %arg11[%c0_14, %c273], %31 {strides = array<i32>} : memref<4x290xf32, #tpu.memory_space<vmem>>, vector<4x17xf32>,
    %c0_15 = arith.constant 0 : index
    %c17 = arith.constant 17 : index
    %33 = vector.load %arg11[%c0_15, %c17] : memref<4x290xf32, #tpu.memory_space<vmem>>, vector<4x256xf32>
    tpu.vector_store %arg11[%c0_15, %c17], %27 {strides = array<i32>} : memref<4x290xf32, #tpu.memory_space<vmem>>, vector<4x256xf32>,
    %c0_16 = arith.constant 0 : index
    %c0_17 = arith.constant 0 : index
    %34 = vector.load %arg11[%c0_16, %c0_17] : memref<4x290xf32, #tpu.memory_space<vmem>>, vector<4x256xf32>
    %c-1_i32 = arith.constant -1 : i32
    %35 = vector.broadcast %c-1_i32 : i32 to vector<1x256xi32>
    %36 = arith.addi %18, %35 : vector<1x256xi32>
    %c0_i32_18 = arith.constant 0 : i32
    %37 = vector.broadcast %c0_i32_18 : i32 to vector<1x256xi32>
    %38 = arith.cmpi sge, %36, %37 : vector<1x256xi32>
    %c-1_i32_19 = arith.constant -1 : i32
    %39 = vector.broadcast %c-1_i32_19 : i32 to vector<1x256xi32>
    %40 = arith.addi %18, %39 : vector<1x256xi32>
    %c16_i32_20 = arith.constant 16 : i32
    %41 = vector.broadcast %c16_i32_20 : i32 to vector<1x256xi32>
    %42 = arith.cmpi slt, %40, %41 : vector<1x256xi32>
    %43 = arith.andi %38, %42 : vector<1x256xi1>
    %cst_21 = arith.constant 0.000000e+00 : f32
    %44 = vector.shape_cast %43 : vector<1x256xi1> to vector<1x256xi1>
    %45 = vector.broadcast %44 : vector<1x256xi1> to vector<4x256xi1>
    %46 = vector.broadcast %cst_21 : f32 to vector<4x256xf32>
    %47 = arith.select %45, %34, %46 : vector<4x256xi1>, vector<4x256xf32>
    %c0_22 = arith.constant 0 : index
    %c0_23 = arith.constant 0 : index
    %48 = vector.load %arg14[%c0_22, %c0_23] : memref<36x256xf32, #tpu.memory_space<vmem>>, vector<4x256xf32>
    tpu.vector_store %arg14[%c0_22, %c0_23], %47 {strides = array<i32>} : memref<36x256xf32, #tpu.memory_space<vmem>>, vector<4x256xf32>,
    %c0_24 = arith.constant 0 : index
    %c1 = arith.constant 1 : index
    %49 = vector.load %arg11[%c0_24, %c1] : memref<4x290xf32, #tpu.memory_space<vmem>>, vector<4x256xf32>
    %c0_i32_25 = arith.constant 0 : i32
    %50 = vector.broadcast %c0_i32_25 : i32 to vector<1x256xi32>
    %51 = arith.addi %18, %50 : vector<1x256xi32>
    %c0_i32_26 = arith.constant 0 : i32
    %52 = vector.broadcast %c0_i32_26 : i32 to vector<1x256xi32>
    %53 = arith.cmpi sge, %51, %52 : vector<1x256xi32>
    %c0_i32_27 = arith.constant 0 : i32
    %54 = vector.broadcast %c0_i32_27 : i32 to vector<1x256xi32>
    %55 = arith.addi %18, %54 : vector<1x256xi32>
    %c16_i32_28 = arith.constant 16 : i32
    %56 = vector.broadcast %c16_i32_28 : i32 to vector<1x256xi32>
    %57 = arith.cmpi slt, %55, %56 : vector<1x256xi32>
    %58 = arith.andi %53, %57 : vector<1x256xi1>
    %cst_29 = arith.constant 0.000000e+00 : f32
    %59 = vector.shape_cast %58 : vector<1x256xi1> to vector<1x256xi1>
    %60 = vector.broadcast %59 : vector<1x256xi1> to vector<4x256xi1>
    %61 = vector.broadcast %cst_29 : f32 to vector<4x256xf32>
    %62 = arith.select %60, %49, %61 : vector<4x256xi1>, vector<4x256xf32>
    %c4 = arith.constant 4 : index
    %c0_30 = arith.constant 0 : index
    %63 = vector.load %arg14[%c4, %c0_30] : memref<36x256xf32, #tpu.memory_space<vmem>>, vector<4x256xf32>
    tpu.vector_store %arg14[%c4, %c0_30], %62 {strides = array<i32>} : memref<36x256xf32, #tpu.memory_space<vmem>>, vector<4x256xf32>,
    %c0_31 = arith.constant 0 : index
    %c2 = arith.constant 2 : index
    %64 = vector.load %arg11[%c0_31, %c2] : memref<4x290xf32, #tpu.memory_space<vmem>>, vector<4x256xf32>
    %c1_i32_32 = arith.constant 1 : i32
    %65 = vector.broadcast %c1_i32_32 : i32 to vector<1x256xi32>
    %66 = arith.addi %18, %65 : vector<1x256xi32>
    %c0_i32_33 = arith.constant 0 : i32
    %67 = vector.broadcast %c0_i32_33 : i32 to vector<1x256xi32>
    %68 = arith.cmpi sge, %66, %67 : vector<1x256xi32>
    %c1_i32_34 = arith.constant 1 : i32
    %69 = vector.broadcast %c1_i32_34 : i32 to vector<1x256xi32>
    %70 = arith.addi %18, %69 : vector<1x256xi32>
    %c16_i32_35 = arith.constant 16 : i32
    %71 = vector.broadcast %c16_i32_35 : i32 to vector<1x256xi32>
    %72 = arith.cmpi slt, %70, %71 : vector<1x256xi32>
    %73 = arith.andi %68, %72 : vector<1x256xi1>
    %cst_36 = arith.constant 0.000000e+00 : f32
    %74 = vector.shape_cast %73 : vector<1x256xi1> to vector<1x256xi1>
    %75 = vector.broadcast %74 : vector<1x256xi1> to vector<4x256xi1>
    %76 = vector.broadcast %cst_36 : f32 to vector<4x256xf32>
    %77 = arith.select %75, %64, %76 : vector<4x256xi1>, vector<4x256xf32>
    %c8 = arith.constant 8 : index
    %c0_37 = arith.constant 0 : index
    %78 = vector.load %arg14[%c8, %c0_37] : memref<36x256xf32, #tpu.memory_space<vmem>>, vector<4x256xf32>
    tpu.vector_store %arg14[%c8, %c0_37], %77 {strides = array<i32>} : memref<36x256xf32, #tpu.memory_space<vmem>>, vector<4x256xf32>,
    %c0_38 = arith.constant 0 : index
    %c16 = arith.constant 16 : index
    %79 = vector.load %arg11[%c0_38, %c16] : memref<4x290xf32, #tpu.memory_space<vmem>>, vector<4x256xf32>
    %c-1_i32_39 = arith.constant -1 : i32
    %80 = vector.broadcast %c-1_i32_39 : i32 to vector<1x256xi32>
    %81 = arith.addi %18, %80 : vector<1x256xi32>
    %c0_i32_40 = arith.constant 0 : i32
    %82 = vector.broadcast %c0_i32_40 : i32 to vector<1x256xi32>
    %83 = arith.cmpi sge, %81, %82 : vector<1x256xi32>
    %c-1_i32_41 = arith.constant -1 : i32
    %84 = vector.broadcast %c-1_i32_41 : i32 to vector<1x256xi32>
    %85 = arith.addi %18, %84 : vector<1x256xi32>
    %c16_i32_42 = arith.constant 16 : i32
    %86 = vector.broadcast %c16_i32_42 : i32 to vector<1x256xi32>
    %87 = arith.cmpi slt, %85, %86 : vector<1x256xi32>
    %88 = arith.andi %83, %87 : vector<1x256xi1>
    %cst_43 = arith.constant 0.000000e+00 : f32
    %89 = vector.shape_cast %88 : vector<1x256xi1> to vector<1x256xi1>
    %90 = vector.broadcast %89 : vector<1x256xi1> to vector<4x256xi1>
    %91 = vector.broadcast %cst_43 : f32 to vector<4x256xf32>
    %92 = arith.select %90, %79, %91 : vector<4x256xi1>, vector<4x256xf32>
    %c12 = arith.constant 12 : index
    %c0_44 = arith.constant 0 : index
    %93 = vector.load %arg14[%c12, %c0_44] : memref<36x256xf32, #tpu.memory_space<vmem>>, vector<4x256xf32>
    tpu.vector_store %arg14[%c12, %c0_44], %92 {strides = array<i32>} : memref<36x256xf32, #tpu.memory_space<vmem>>, vector<4x256xf32>,
    %c0_45 = arith.constant 0 : index
    %c17_46 = arith.constant 17 : index
    %94 = vector.load %arg11[%c0_45, %c17_46] : memref<4x290xf32, #tpu.memory_space<vmem>>, vector<4x256xf32>
    %c0_i32_47 = arith.constant 0 : i32
    %95 = vector.broadcast %c0_i32_47 : i32 to vector<1x256xi32>
    %96 = arith.addi %18, %95 : vector<1x256xi32>
    %c0_i32_48 = arith.constant 0 : i32
    %97 = vector.broadcast %c0_i32_48 : i32 to vector<1x256xi32>
    %98 = arith.cmpi sge, %96, %97 : vector<1x256xi32>
    %c0_i32_49 = arith.constant 0 : i32
    %99 = vector.broadcast %c0_i32_49 : i32 to vector<1x256xi32>
    %100 = arith.addi %18, %99 : vector<1x256xi32>
    %c16_i32_50 = arith.constant 16 : i32
    %101 = vector.broadcast %c16_i32_50 : i32 to vector<1x256xi32>
    %102 = arith.cmpi slt, %100, %101 : vector<1x256xi32>
    %103 = arith.andi %98, %102 : vector<1x256xi1>
    %cst_51 = arith.constant 0.000000e+00 : f32
    %104 = vector.shape_cast %103 : vector<1x256xi1> to vector<1x256xi1>
    %105 = vector.broadcast %104 : vector<1x256xi1> to vector<4x256xi1>
    %106 = vector.broadcast %cst_51 : f32 to vector<4x256xf32>
    %107 = arith.select %105, %94, %106 : vector<4x256xi1>, vector<4x256xf32>
    %c16_52 = arith.constant 16 : index
    %c0_53 = arith.constant 0 : index
    %108 = vector.load %arg14[%c16_52, %c0_53] : memref<36x256xf32, #tpu.memory_space<vmem>>, vector<4x256xf32>
    tpu.vector_store %arg14[%c16_52, %c0_53], %107 {strides = array<i32>} : memref<36x256xf32, #tpu.memory_space<vmem>>, vector<4x256xf32>,
    %c0_54 = arith.constant 0 : index
    %c18 = arith.constant 18 : index
    %109 = vector.load %arg11[%c0_54, %c18] : memref<4x290xf32, #tpu.memory_space<vmem>>, vector<4x256xf32>
    %c1_i32_55 = arith.constant 1 : i32
    %110 = vector.broadcast %c1_i32_55 : i32 to vector<1x256xi32>
    %111 = arith.addi %18, %110 : vector<1x256xi32>
    %c0_i32_56 = arith.constant 0 : i32
    %112 = vector.broadcast %c0_i32_56 : i32 to vector<1x256xi32>
    %113 = arith.cmpi sge, %111, %112 : vector<1x256xi32>
    %c1_i32_57 = arith.constant 1 : i32
    %114 = vector.broadcast %c1_i32_57 : i32 to vector<1x256xi32>
    %115 = arith.addi %18, %114 : vector<1x256xi32>
    %c16_i32_58 = arith.constant 16 : i32
    %116 = vector.broadcast %c16_i32_58 : i32 to vector<1x256xi32>
    %117 = arith.cmpi slt, %115, %116 : vector<1x256xi32>
    %118 = arith.andi %113, %117 : vector<1x256xi1>
    %cst_59 = arith.constant 0.000000e+00 : f32
    %119 = vector.shape_cast %118 : vector<1x256xi1> to vector<1x256xi1>
    %120 = vector.broadcast %119 : vector<1x256xi1> to vector<4x256xi1>
    %121 = vector.broadcast %cst_59 : f32 to vector<4x256xf32>
    %122 = arith.select %120, %109, %121 : vector<4x256xi1>, vector<4x256xf32>
    %c20 = arith.constant 20 : index
    %c0_60 = arith.constant 0 : index
    %123 = vector.load %arg14[%c20, %c0_60] : memref<36x256xf32, #tpu.memory_space<vmem>>, vector<4x256xf32>
    tpu.vector_store %arg14[%c20, %c0_60], %122 {strides = array<i32>} : memref<36x256xf32, #tpu.memory_space<vmem>>, vector<4x256xf32>,
    %c0_61 = arith.constant 0 : index
    %c32 = arith.constant 32 : index
    %124 = vector.load %arg11[%c0_61, %c32] : memref<4x290xf32, #tpu.memory_space<vmem>>, vector<4x256xf32>
    %c-1_i32_62 = arith.constant -1 : i32
    %125 = vector.broadcast %c-1_i32_62 : i32 to vector<1x256xi32>
    %126 = arith.addi %18, %125 : vector<1x256xi32>
    %c0_i32_63 = arith.constant 0 : i32
    %127 = vector.broadcast %c0_i32_63 : i32 to vector<1x256xi32>
    %128 = arith.cmpi sge, %126, %127 : vector<1x256xi32>
    %c-1_i32_64 = arith.constant -1 : i32
    %129 = vector.broadcast %c-1_i32_64 : i32 to vector<1x256xi32>
    %130 = arith.addi %18, %129 : vector<1x256xi32>
    %c16_i32_65 = arith.constant 16 : i32
    %131 = vector.broadcast %c16_i32_65 : i32 to vector<1x256xi32>
    %132 = arith.cmpi slt, %130, %131 : vector<1x256xi32>
    %133 = arith.andi %128, %132 : vector<1x256xi1>
    %cst_66 = arith.constant 0.000000e+00 : f32
    %134 = vector.shape_cast %133 : vector<1x256xi1> to vector<1x256xi1>
    %135 = vector.broadcast %134 : vector<1x256xi1> to vector<4x256xi1>
    %136 = vector.broadcast %cst_66 : f32 to vector<4x256xf32>
    %137 = arith.select %135, %124, %136 : vector<4x256xi1>, vector<4x256xf32>
    %c24 = arith.constant 24 : index
    %c0_67 = arith.constant 0 : index
    %138 = vector.load %arg14[%c24, %c0_67] : memref<36x256xf32, #tpu.memory_space<vmem>>, vector<4x256xf32>
    tpu.vector_store %arg14[%c24, %c0_67], %137 {strides = array<i32>} : memref<36x256xf32, #tpu.memory_space<vmem>>, vector<4x256xf32>,
    %c0_68 = arith.constant 0 : index
    %c33 = arith.constant 33 : index
    %139 = vector.load %arg11[%c0_68, %c33] : memref<4x290xf32, #tpu.memory_space<vmem>>, vector<4x256xf32>
    %c0_i32_69 = arith.constant 0 : i32
    %140 = vector.broadcast %c0_i32_69 : i32 to vector<1x256xi32>
    %141 = arith.addi %18, %140 : vector<1x256xi32>
    %c0_i32_70 = arith.constant 0 : i32
    %142 = vector.broadcast %c0_i32_70 : i32 to vector<1x256xi32>
    %143 = arith.cmpi sge, %141, %142 : vector<1x256xi32>
    %c0_i32_71 = arith.constant 0 : i32
    %144 = vector.broadcast %c0_i32_71 : i32 to vector<1x256xi32>
    %145 = arith.addi %18, %144 : vector<1x256xi32>
    %c16_i32_72 = arith.constant 16 : i32
    %146 = vector.broadcast %c16_i32_72 : i32 to vector<1x256xi32>
    %147 = arith.cmpi slt, %145, %146 : vector<1x256xi32>
    %148 = arith.andi %143, %147 : vector<1x256xi1>
    %cst_73 = arith.constant 0.000000e+00 : f32
    %149 = vector.shape_cast %148 : vector<1x256xi1> to vector<1x256xi1>
    %150 = vector.broadcast %149 : vector<1x256xi1> to vector<4x256xi1>
    %151 = vector.broadcast %cst_73 : f32 to vector<4x256xf32>
    %152 = arith.select %150, %139, %151 : vector<4x256xi1>, vector<4x256xf32>
    %c28 = arith.constant 28 : index
    %c0_74 = arith.constant 0 : index
    %153 = vector.load %arg14[%c28, %c0_74] : memref<36x256xf32, #tpu.memory_space<vmem>>, vector<4x256xf32>
    tpu.vector_store %arg14[%c28, %c0_74], %152 {strides = array<i32>} : memref<36x256xf32, #tpu.memory_space<vmem>>, vector<4x256xf32>,
    %c0_75 = arith.constant 0 : index
    %c34 = arith.constant 34 : index
    %154 = vector.load %arg11[%c0_75, %c34] : memref<4x290xf32, #tpu.memory_space<vmem>>, vector<4x256xf32>
    %c1_i32_76 = arith.constant 1 : i32
    %155 = vector.broadcast %c1_i32_76 : i32 to vector<1x256xi32>
    %156 = arith.addi %18, %155 : vector<1x256xi32>
    %c0_i32_77 = arith.constant 0 : i32
    %157 = vector.broadcast %c0_i32_77 : i32 to vector<1x256xi32>
    %158 = arith.cmpi sge, %156, %157 : vector<1x256xi32>
    %c1_i32_78 = arith.constant 1 : i32
    %159 = vector.broadcast %c1_i32_78 : i32 to vector<1x256xi32>
    %160 = arith.addi %18, %159 : vector<1x256xi32>
    %c16_i32_79 = arith.constant 16 : i32
    %161 = vector.broadcast %c16_i32_79 : i32 to vector<1x256xi32>
    %162 = arith.cmpi slt, %160, %161 : vector<1x256xi32>
    %163 = arith.andi %158, %162 : vector<1x256xi1>
    %cst_80 = arith.constant 0.000000e+00 : f32
    %164 = vector.shape_cast %163 : vector<1x256xi1> to vector<1x256xi1>
    %165 = vector.broadcast %164 : vector<1x256xi1> to vector<4x256xi1>
    %166 = vector.broadcast %cst_80 : f32 to vector<4x256xf32>
    %167 = arith.select %165, %154, %166 : vector<4x256xi1>, vector<4x256xf32>
    %c32_81 = arith.constant 32 : index
    %c0_82 = arith.constant 0 : index
    %168 = vector.load %arg14[%c32_81, %c0_82] : memref<36x256xf32, #tpu.memory_space<vmem>>, vector<4x256xf32>
    tpu.vector_store %arg14[%c32_81, %c0_82], %167 {strides = array<i32>} : memref<36x256xf32, #tpu.memory_space<vmem>>, vector<4x256xf32>,
    %c0_83 = arith.constant 0 : index
    %c0_84 = arith.constant 0 : index
    %169 = vector.load %arg4[%c0_83, %c0_84] : memref<8x36xf32, #tpu.memory_space<vmem>>, vector<8x36xf32>
    %c0_85 = arith.constant 0 : index
    %c0_86 = arith.constant 0 : index
    %170 = vector.load %arg14[%c0_85, %c0_86] : memref<36x256xf32, #tpu.memory_space<vmem>>, vector<36x256xf32>
    %cst_87 = arith.constant dense<0.000000e+00> : vector<8x256xf32>
    %171 = tpu.matmul %169, %170, %cst_87 {dimension_numbers = #tpu.dot_dimension_numbers<[1], [0], [0], [1], [0, 0, 1, 1], [], []>} : vector<8x36xf32>, vector<36x256xf32>, vector<8x256xf32> -> vector<8x256xf32>
    %c0_88 = arith.constant 0 : index
    %c0_89 = arith.constant 0 : index
    %172 = vector.load %arg5[%c0_88, %c0_89] : memref<8x1xf32, #tpu.memory_space<vmem>>, vector<8x1xf32>
    %173 = vector.broadcast %172 : vector<8x1xf32> to vector<8x256xf32>
    %174 = arith.addf %171, %173 : vector<8x256xf32>
    %cst_90 = arith.constant 0.000000e+00 : f32
    %175 = vector.broadcast %cst_90 : f32 to vector<8x256xf32>
    %176 = arith.maximumf %174, %175 : vector<8x256xf32>
    %cst_91 = arith.constant 0.000000e+00 : f32
    %177 = vector.broadcast %cst_91 : f32 to vector<2x34xf32>
    %c0_92 = arith.constant 0 : index
    %c0_93 = arith.constant 0 : index
    %178 = vector.load %arg12[%c0_92, %c0_93] : memref<2x324xf32, #tpu.memory_space<vmem>>, vector<2x34xf32>
    tpu.vector_store %arg12[%c0_92, %c0_93], %177 {strides = array<i32>} : memref<2x324xf32, #tpu.memory_space<vmem>>, vector<2x34xf32>,
    %cst_94 = arith.constant 0.000000e+00 : f32
    %179 = vector.broadcast %cst_94 : f32 to vector<2x34xf32>
    %c0_95 = arith.constant 0 : index
    %c290 = arith.constant 290 : index
    %180 = vector.load %arg12[%c0_95, %c290] : memref<2x324xf32, #tpu.memory_space<vmem>>, vector<2x34xf32>
    tpu.vector_store %arg12[%c0_95, %c290], %179 {strides = array<i32>} : memref<2x324xf32, #tpu.memory_space<vmem>>, vector<2x34xf32>,
    %c0_96 = arith.constant 0 : index
    %c34_97 = arith.constant 34 : index
    %181 = vector.load %arg12[%c0_96, %c34_97] : memref<2x324xf32, #tpu.memory_space<vmem>>, vector<2x256xf32>
    tpu.vector_store %arg12[%c0_96, %c34_97], %28 {strides = array<i32>} : memref<2x324xf32, #tpu.memory_space<vmem>>, vector<2x256xf32>,
    %c0_98 = arith.constant 0 : index
    %c0_99 = arith.constant 0 : index
    %182 = vector.load %arg12[%c0_98, %c0_99] : memref<2x324xf32, #tpu.memory_space<vmem>>, vector<2x256xf32>
    %c-2_i32 = arith.constant -2 : i32
    %183 = vector.broadcast %c-2_i32 : i32 to vector<1x256xi32>
    %184 = arith.addi %18, %183 : vector<1x256xi32>
    %c0_i32_100 = arith.constant 0 : i32
    %185 = vector.broadcast %c0_i32_100 : i32 to vector<1x256xi32>
    %186 = arith.cmpi sge, %184, %185 : vector<1x256xi32>
    %c-2_i32_101 = arith.constant -2 : i32
    %187 = vector.broadcast %c-2_i32_101 : i32 to vector<1x256xi32>
    %188 = arith.addi %18, %187 : vector<1x256xi32>
    %c16_i32_102 = arith.constant 16 : i32
    %189 = vector.broadcast %c16_i32_102 : i32 to vector<1x256xi32>
    %190 = arith.cmpi slt, %188, %189 : vector<1x256xi32>
    %191 = arith.andi %186, %190 : vector<1x256xi1>
    %cst_103 = arith.constant 0.000000e+00 : f32
    %192 = vector.shape_cast %191 : vector<1x256xi1> to vector<1x256xi1>
    %193 = vector.broadcast %192 : vector<1x256xi1> to vector<2x256xi1>
    %194 = vector.broadcast %cst_103 : f32 to vector<2x256xf32>
    %195 = arith.select %193, %182, %194 : vector<2x256xi1>, vector<2x256xf32>
    %c0_104 = arith.constant 0 : index
    %c0_105 = arith.constant 0 : index
    %196 = vector.load %arg15[%c0_104, %c0_105] : memref<50x256xf32, #tpu.memory_space<vmem>>, vector<2x256xf32>
    tpu.vector_store %arg15[%c0_104, %c0_105], %195 {strides = array<i32>} : memref<50x256xf32, #tpu.memory_space<vmem>>, vector<2x256xf32>,
    %c0_106 = arith.constant 0 : index
    %c1_107 = arith.constant 1 : index
    %197 = vector.load %arg12[%c0_106, %c1_107] : memref<2x324xf32, #tpu.memory_space<vmem>>, vector<2x256xf32>
    %c-1_i32_108 = arith.constant -1 : i32
    %198 = vector.broadcast %c-1_i32_108 : i32 to vector<1x256xi32>
    %199 = arith.addi %18, %198 : vector<1x256xi32>
    %c0_i32_109 = arith.constant 0 : i32
    %200 = vector.broadcast %c0_i32_109 : i32 to vector<1x256xi32>
    %201 = arith.cmpi sge, %199, %200 : vector<1x256xi32>
    %c-1_i32_110 = arith.constant -1 : i32
    %202 = vector.broadcast %c-1_i32_110 : i32 to vector<1x256xi32>
    %203 = arith.addi %18, %202 : vector<1x256xi32>
    %c16_i32_111 = arith.constant 16 : i32
    %204 = vector.broadcast %c16_i32_111 : i32 to vector<1x256xi32>
    %205 = arith.cmpi slt, %203, %204 : vector<1x256xi32>
    %206 = arith.andi %201, %205 : vector<1x256xi1>
    %cst_112 = arith.constant 0.000000e+00 : f32
    %207 = vector.shape_cast %206 : vector<1x256xi1> to vector<1x256xi1>
    %208 = vector.broadcast %207 : vector<1x256xi1> to vector<2x256xi1>
    %209 = vector.broadcast %cst_112 : f32 to vector<2x256xf32>
    %210 = arith.select %208, %197, %209 : vector<2x256xi1>, vector<2x256xf32>
    %c2_113 = arith.constant 2 : index
    %c0_114 = arith.constant 0 : index
    %211 = vector.load %arg15[%c2_113, %c0_114] : memref<50x256xf32, #tpu.memory_space<vmem>>, vector<2x256xf32>
    tpu.vector_store %arg15[%c2_113, %c0_114], %210 {strides = array<i32>} : memref<50x256xf32, #tpu.memory_space<vmem>>, vector<2x256xf32>,
    %c0_115 = arith.constant 0 : index
    %c2_116 = arith.constant 2 : index
    %212 = vector.load %arg12[%c0_115, %c2_116] : memref<2x324xf32, #tpu.memory_space<vmem>>, vector<2x256xf32>
    %c0_i32_117 = arith.constant 0 : i32
    %213 = vector.broadcast %c0_i32_117 : i32 to vector<1x256xi32>
    %214 = arith.addi %18, %213 : vector<1x256xi32>
    %c0_i32_118 = arith.constant 0 : i32
    %215 = vector.broadcast %c0_i32_118 : i32 to vector<1x256xi32>
    %216 = arith.cmpi sge, %214, %215 : vector<1x256xi32>
    %c0_i32_119 = arith.constant 0 : i32
    %217 = vector.broadcast %c0_i32_119 : i32 to vector<1x256xi32>
    %218 = arith.addi %18, %217 : vector<1x256xi32>
    %c16_i32_120 = arith.constant 16 : i32
    %219 = vector.broadcast %c16_i32_120 : i32 to vector<1x256xi32>
    %220 = arith.cmpi slt, %218, %219 : vector<1x256xi32>
    %221 = arith.andi %216, %220 : vector<1x256xi1>
    %cst_121 = arith.constant 0.000000e+00 : f32
    %222 = vector.shape_cast %221 : vector<1x256xi1> to vector<1x256xi1>
    %223 = vector.broadcast %222 : vector<1x256xi1> to vector<2x256xi1>
    %224 = vector.broadcast %cst_121 : f32 to vector<2x256xf32>
    %225 = arith.select %223, %212, %224 : vector<2x256xi1>, vector<2x256xf32>
    %c4_122 = arith.constant 4 : index
    %c0_123 = arith.constant 0 : index
    %226 = vector.load %arg15[%c4_122, %c0_123] : memref<50x256xf32, #tpu.memory_space<vmem>>, vector<2x256xf32>
    tpu.vector_store %arg15[%c4_122, %c0_123], %225 {strides = array<i32>} : memref<50x256xf32, #tpu.memory_space<vmem>>, vector<2x256xf32>,
    %c0_124 = arith.constant 0 : index
    %c3 = arith.constant 3 : index
    %227 = vector.load %arg12[%c0_124, %c3] : memref<2x324xf32, #tpu.memory_space<vmem>>, vector<2x256xf32>
    %c1_i32_125 = arith.constant 1 : i32
    %228 = vector.broadcast %c1_i32_125 : i32 to vector<1x256xi32>
    %229 = arith.addi %18, %228 : vector<1x256xi32>
    %c0_i32_126 = arith.constant 0 : i32
    %230 = vector.broadcast %c0_i32_126 : i32 to vector<1x256xi32>
    %231 = arith.cmpi sge, %229, %230 : vector<1x256xi32>
    %c1_i32_127 = arith.constant 1 : i32
    %232 = vector.broadcast %c1_i32_127 : i32 to vector<1x256xi32>
    %233 = arith.addi %18, %232 : vector<1x256xi32>
    %c16_i32_128 = arith.constant 16 : i32
    %234 = vector.broadcast %c16_i32_128 : i32 to vector<1x256xi32>
    %235 = arith.cmpi slt, %233, %234 : vector<1x256xi32>
    %236 = arith.andi %231, %235 : vector<1x256xi1>
    %cst_129 = arith.constant 0.000000e+00 : f32
    %237 = vector.shape_cast %236 : vector<1x256xi1> to vector<1x256xi1>
    %238 = vector.broadcast %237 : vector<1x256xi1> to vector<2x256xi1>
    %239 = vector.broadcast %cst_129 : f32 to vector<2x256xf32>
    %240 = arith.select %238, %227, %239 : vector<2x256xi1>, vector<2x256xf32>
    %c6 = arith.constant 6 : index
    %c0_130 = arith.constant 0 : index
    %241 = vector.load %arg15[%c6, %c0_130] : memref<50x256xf32, #tpu.memory_space<vmem>>, vector<2x256xf32>
    tpu.vector_store %arg15[%c6, %c0_130], %240 {strides = array<i32>} : memref<50x256xf32, #tpu.memory_space<vmem>>, vector<2x256xf32>,
    %c0_131 = arith.constant 0 : index
    %c4_132 = arith.constant 4 : index
    %242 = vector.load %arg12[%c0_131, %c4_132] : memref<2x324xf32, #tpu.memory_space<vmem>>, vector<2x256xf32>
    %c2_i32 = arith.constant 2 : i32
    %243 = vector.broadcast %c2_i32 : i32 to vector<1x256xi32>
    %244 = arith.addi %18, %243 : vector<1x256xi32>
    %c0_i32_133 = arith.constant 0 : i32
    %245 = vector.broadcast %c0_i32_133 : i32 to vector<1x256xi32>
    %246 = arith.cmpi sge, %244, %245 : vector<1x256xi32>
    %c2_i32_134 = arith.constant 2 : i32
    %247 = vector.broadcast %c2_i32_134 : i32 to vector<1x256xi32>
    %248 = arith.addi %18, %247 : vector<1x256xi32>
    %c16_i32_135 = arith.constant 16 : i32
    %249 = vector.broadcast %c16_i32_135 : i32 to vector<1x256xi32>
    %250 = arith.cmpi slt, %248, %249 : vector<1x256xi32>
    %251 = arith.andi %246, %250 : vector<1x256xi1>
    %cst_136 = arith.constant 0.000000e+00 : f32
    %252 = vector.shape_cast %251 : vector<1x256xi1> to vector<1x256xi1>
    %253 = vector.broadcast %252 : vector<1x256xi1> to vector<2x256xi1>
    %254 = vector.broadcast %cst_136 : f32 to vector<2x256xf32>
    %255 = arith.select %253, %242, %254 : vector<2x256xi1>, vector<2x256xf32>
    %c8_137 = arith.constant 8 : index
    %c0_138 = arith.constant 0 : index
    %256 = vector.load %arg15[%c8_137, %c0_138] : memref<50x256xf32, #tpu.memory_space<vmem>>, vector<2x256xf32>
    tpu.vector_store %arg15[%c8_137, %c0_138], %255 {strides = array<i32>} : memref<50x256xf32, #tpu.memory_space<vmem>>, vector<2x256xf32>,
    %c0_139 = arith.constant 0 : index
    %c16_140 = arith.constant 16 : index
    %257 = vector.load %arg12[%c0_139, %c16_140] : memref<2x324xf32, #tpu.memory_space<vmem>>, vector<2x256xf32>
    %c-2_i32_141 = arith.constant -2 : i32
    %258 = vector.broadcast %c-2_i32_141 : i32 to vector<1x256xi32>
    %259 = arith.addi %18, %258 : vector<1x256xi32>
    %c0_i32_142 = arith.constant 0 : i32
    %260 = vector.broadcast %c0_i32_142 : i32 to vector<1x256xi32>
    %261 = arith.cmpi sge, %259, %260 : vector<1x256xi32>
    %c-2_i32_143 = arith.constant -2 : i32
    %262 = vector.broadcast %c-2_i32_143 : i32 to vector<1x256xi32>
    %263 = arith.addi %18, %262 : vector<1x256xi32>
    %c16_i32_144 = arith.constant 16 : i32
    %264 = vector.broadcast %c16_i32_144 : i32 to vector<1x256xi32>
    %265 = arith.cmpi slt, %263, %264 : vector<1x256xi32>
    %266 = arith.andi %261, %265 : vector<1x256xi1>
    %cst_145 = arith.constant 0.000000e+00 : f32
    %267 = vector.shape_cast %266 : vector<1x256xi1> to vector<1x256xi1>
    %268 = vector.broadcast %267 : vector<1x256xi1> to vector<2x256xi1>
    %269 = vector.broadcast %cst_145 : f32 to vector<2x256xf32>
    %270 = arith.select %268, %257, %269 : vector<2x256xi1>, vector<2x256xf32>
    %c10 = arith.constant 10 : index
    %c0_146 = arith.constant 0 : index
    %271 = vector.load %arg15[%c10, %c0_146] : memref<50x256xf32, #tpu.memory_space<vmem>>, vector<2x256xf32>
    tpu.vector_store %arg15[%c10, %c0_146], %270 {strides = array<i32>} : memref<50x256xf32, #tpu.memory_space<vmem>>, vector<2x256xf32>,
    %c0_147 = arith.constant 0 : index
    %c17_148 = arith.constant 17 : index
    %272 = vector.load %arg12[%c0_147, %c17_148] : memref<2x324xf32, #tpu.memory_space<vmem>>, vector<2x256xf32>
    %c-1_i32_149 = arith.constant -1 : i32
    %273 = vector.broadcast %c-1_i32_149 : i32 to vector<1x256xi32>
    %274 = arith.addi %18, %273 : vector<1x256xi32>
    %c0_i32_150 = arith.constant 0 : i32
    %275 = vector.broadcast %c0_i32_150 : i32 to vector<1x256xi32>
    %276 = arith.cmpi sge, %274, %275 : vector<1x256xi32>
    %c-1_i32_151 = arith.constant -1 : i32
    %277 = vector.broadcast %c-1_i32_151 : i32 to vector<1x256xi32>
    %278 = arith.addi %18, %277 : vector<1x256xi32>
    %c16_i32_152 = arith.constant 16 : i32
    %279 = vector.broadcast %c16_i32_152 : i32 to vector<1x256xi32>
    %280 = arith.cmpi slt, %278, %279 : vector<1x256xi32>
    %281 = arith.andi %276, %280 : vector<1x256xi1>
    %cst_153 = arith.constant 0.000000e+00 : f32
    %282 = vector.shape_cast %281 : vector<1x256xi1> to vector<1x256xi1>
    %283 = vector.broadcast %282 : vector<1x256xi1> to vector<2x256xi1>
    %284 = vector.broadcast %cst_153 : f32 to vector<2x256xf32>
    %285 = arith.select %283, %272, %284 : vector<2x256xi1>, vector<2x256xf32>
    %c12_154 = arith.constant 12 : index
    %c0_155 = arith.constant 0 : index
    %286 = vector.load %arg15[%c12_154, %c0_155] : memref<50x256xf32, #tpu.memory_space<vmem>>, vector<2x256xf32>
    tpu.vector_store %arg15[%c12_154, %c0_155], %285 {strides = array<i32>} : memref<50x256xf32, #tpu.memory_space<vmem>>, vector<2x256xf32>,
    %c0_156 = arith.constant 0 : index
    %c18_157 = arith.constant 18 : index
    %287 = vector.load %arg12[%c0_156, %c18_157] : memref<2x324xf32, #tpu.memory_space<vmem>>, vector<2x256xf32>
    %c0_i32_158 = arith.constant 0 : i32
    %288 = vector.broadcast %c0_i32_158 : i32 to vector<1x256xi32>
    %289 = arith.addi %18, %288 : vector<1x256xi32>
    %c0_i32_159 = arith.constant 0 : i32
    %290 = vector.broadcast %c0_i32_159 : i32 to vector<1x256xi32>
    %291 = arith.cmpi sge, %289, %290 : vector<1x256xi32>
    %c0_i32_160 = arith.constant 0 : i32
    %292 = vector.broadcast %c0_i32_160 : i32 to vector<1x256xi32>
    %293 = arith.addi %18, %292 : vector<1x256xi32>
    %c16_i32_161 = arith.constant 16 : i32
    %294 = vector.broadcast %c16_i32_161 : i32 to vector<1x256xi32>
    %295 = arith.cmpi slt, %293, %294 : vector<1x256xi32>
    %296 = arith.andi %291, %295 : vector<1x256xi1>
    %cst_162 = arith.constant 0.000000e+00 : f32
    %297 = vector.shape_cast %296 : vector<1x256xi1> to vector<1x256xi1>
    %298 = vector.broadcast %297 : vector<1x256xi1> to vector<2x256xi1>
    %299 = vector.broadcast %cst_162 : f32 to vector<2x256xf32>
    %300 = arith.select %298, %287, %299 : vector<2x256xi1>, vector<2x256xf32>
    %c14 = arith.constant 14 : index
    %c0_163 = arith.constant 0 : index
    %301 = vector.load %arg15[%c14, %c0_163] : memref<50x256xf32, #tpu.memory_space<vmem>>, vector<2x256xf32>
    tpu.vector_store %arg15[%c14, %c0_163], %300 {strides = array<i32>} : memref<50x256xf32, #tpu.memory_space<vmem>>, vector<2x256xf32>,
    %c0_164 = arith.constant 0 : index
    %c19 = arith.constant 19 : index
    %302 = vector.load %arg12[%c0_164, %c19] : memref<2x324xf32, #tpu.memory_space<vmem>>, vector<2x256xf32>
    %c1_i32_165 = arith.constant 1 : i32
    %303 = vector.broadcast %c1_i32_165 : i32 to vector<1x256xi32>
    %304 = arith.addi %18, %303 : vector<1x256xi32>
    %c0_i32_166 = arith.constant 0 : i32
    %305 = vector.broadcast %c0_i32_166 : i32 to vector<1x256xi32>
    %306 = arith.cmpi sge, %304, %305 : vector<1x256xi32>
    %c1_i32_167 = arith.constant 1 : i32
    %307 = vector.broadcast %c1_i32_167 : i32 to vector<1x256xi32>
    %308 = arith.addi %18, %307 : vector<1x256xi32>
    %c16_i32_168 = arith.constant 16 : i32
    %309 = vector.broadcast %c16_i32_168 : i32 to vector<1x256xi32>
    %310 = arith.cmpi slt, %308, %309 : vector<1x256xi32>
    %311 = arith.andi %306, %310 : vector<1x256xi1>
    %cst_169 = arith.constant 0.000000e+00 : f32
    %312 = vector.shape_cast %311 : vector<1x256xi1> to vector<1x256xi1>
    %313 = vector.broadcast %312 : vector<1x256xi1> to vector<2x256xi1>
    %314 = vector.broadcast %cst_169 : f32 to vector<2x256xf32>
    %315 = arith.select %313, %302, %314 : vector<2x256xi1>, vector<2x256xf32>
    %c16_170 = arith.constant 16 : index
    %c0_171 = arith.constant 0 : index
    %316 = vector.load %arg15[%c16_170, %c0_171] : memref<50x256xf32, #tpu.memory_space<vmem>>, vector<2x256xf32>
    tpu.vector_store %arg15[%c16_170, %c0_171], %315 {strides = array<i32>} : memref<50x256xf32, #tpu.memory_space<vmem>>, vector<2x256xf32>,
    %c0_172 = arith.constant 0 : index
    %c20_173 = arith.constant 20 : index
    %317 = vector.load %arg12[%c0_172, %c20_173] : memref<2x324xf32, #tpu.memory_space<vmem>>, vector<2x256xf32>
    %c2_i32_174 = arith.constant 2 : i32
    %318 = vector.broadcast %c2_i32_174 : i32 to vector<1x256xi32>
    %319 = arith.addi %18, %318 : vector<1x256xi32>
    %c0_i32_175 = arith.constant 0 : i32
    %320 = vector.broadcast %c0_i32_175 : i32 to vector<1x256xi32>
    %321 = arith.cmpi sge, %319, %320 : vector<1x256xi32>
    %c2_i32_176 = arith.constant 2 : i32
    %322 = vector.broadcast %c2_i32_176 : i32 to vector<1x256xi32>
    %323 = arith.addi %18, %322 : vector<1x256xi32>
    %c16_i32_177 = arith.constant 16 : i32
    %324 = vector.broadcast %c16_i32_177 : i32 to vector<1x256xi32>
    %325 = arith.cmpi slt, %323, %324 : vector<1x256xi32>
    %326 = arith.andi %321, %325 : vector<1x256xi1>
    %cst_178 = arith.constant 0.000000e+00 : f32
    %327 = vector.shape_cast %326 : vector<1x256xi1> to vector<1x256xi1>
    %328 = vector.broadcast %327 : vector<1x256xi1> to vector<2x256xi1>
    %329 = vector.broadcast %cst_178 : f32 to vector<2x256xf32>
    %330 = arith.select %328, %317, %329 : vector<2x256xi1>, vector<2x256xf32>
    %c18_179 = arith.constant 18 : index
    %c0_180 = arith.constant 0 : index
    %331 = vector.load %arg15[%c18_179, %c0_180] : memref<50x256xf32, #tpu.memory_space<vmem>>, vector<2x256xf32>
    tpu.vector_store %arg15[%c18_179, %c0_180], %330 {strides = array<i32>} : memref<50x256xf32, #tpu.memory_space<vmem>>, vector<2x256xf32>,
    %c0_181 = arith.constant 0 : index
    %c32_182 = arith.constant 32 : index
    %332 = vector.load %arg12[%c0_181, %c32_182] : memref<2x324xf32, #tpu.memory_space<vmem>>, vector<2x256xf32>
    %c-2_i32_183 = arith.constant -2 : i32
    %333 = vector.broadcast %c-2_i32_183 : i32 to vector<1x256xi32>
    %334 = arith.addi %18, %333 : vector<1x256xi32>
    %c0_i32_184 = arith.constant 0 : i32
    %335 = vector.broadcast %c0_i32_184 : i32 to vector<1x256xi32>
    %336 = arith.cmpi sge, %334, %335 : vector<1x256xi32>
    %c-2_i32_185 = arith.constant -2 : i32
    %337 = vector.broadcast %c-2_i32_185 : i32 to vector<1x256xi32>
    %338 = arith.addi %18, %337 : vector<1x256xi32>
    %c16_i32_186 = arith.constant 16 : i32
    %339 = vector.broadcast %c16_i32_186 : i32 to vector<1x256xi32>
    %340 = arith.cmpi slt, %338, %339 : vector<1x256xi32>
    %341 = arith.andi %336, %340 : vector<1x256xi1>
    %cst_187 = arith.constant 0.000000e+00 : f32
    %342 = vector.shape_cast %341 : vector<1x256xi1> to vector<1x256xi1>
    %343 = vector.broadcast %342 : vector<1x256xi1> to vector<2x256xi1>
    %344 = vector.broadcast %cst_187 : f32 to vector<2x256xf32>
    %345 = arith.select %343, %332, %344 : vector<2x256xi1>, vector<2x256xf32>
    %c20_188 = arith.constant 20 : index
    %c0_189 = arith.constant 0 : index
    %346 = vector.load %arg15[%c20_188, %c0_189] : memref<50x256xf32, #tpu.memory_space<vmem>>, vector<2x256xf32>
    tpu.vector_store %arg15[%c20_188, %c0_189], %345 {strides = array<i32>} : memref<50x256xf32, #tpu.memory_space<vmem>>, vector<2x256xf32>,
    %c0_190 = arith.constant 0 : index
    %c33_191 = arith.constant 33 : index
    %347 = vector.load %arg12[%c0_190, %c33_191] : memref<2x324xf32, #tpu.memory_space<vmem>>, vector<2x256xf32>
    %c-1_i32_192 = arith.constant -1 : i32
    %348 = vector.broadcast %c-1_i32_192 : i32 to vector<1x256xi32>
    %349 = arith.addi %18, %348 : vector<1x256xi32>
    %c0_i32_193 = arith.constant 0 : i32
    %350 = vector.broadcast %c0_i32_193 : i32 to vector<1x256xi32>
    %351 = arith.cmpi sge, %349, %350 : vector<1x256xi32>
    %c-1_i32_194 = arith.constant -1 : i32
    %352 = vector.broadcast %c-1_i32_194 : i32 to vector<1x256xi32>
    %353 = arith.addi %18, %352 : vector<1x256xi32>
    %c16_i32_195 = arith.constant 16 : i32
    %354 = vector.broadcast %c16_i32_195 : i32 to vector<1x256xi32>
    %355 = arith.cmpi slt, %353, %354 : vector<1x256xi32>
    %356 = arith.andi %351, %355 : vector<1x256xi1>
    %cst_196 = arith.constant 0.000000e+00 : f32
    %357 = vector.shape_cast %356 : vector<1x256xi1> to vector<1x256xi1>
    %358 = vector.broadcast %357 : vector<1x256xi1> to vector<2x256xi1>
    %359 = vector.broadcast %cst_196 : f32 to vector<2x256xf32>
    %360 = arith.select %358, %347, %359 : vector<2x256xi1>, vector<2x256xf32>
    %c22 = arith.constant 22 : index
    %c0_197 = arith.constant 0 : index
    %361 = vector.load %arg15[%c22, %c0_197] : memref<50x256xf32, #tpu.memory_space<vmem>>, vector<2x256xf32>
    tpu.vector_store %arg15[%c22, %c0_197], %360 {strides = array<i32>} : memref<50x256xf32, #tpu.memory_space<vmem>>, vector<2x256xf32>,
    %c0_198 = arith.constant 0 : index
    %c34_199 = arith.constant 34 : index
    %362 = vector.load %arg12[%c0_198, %c34_199] : memref<2x324xf32, #tpu.memory_space<vmem>>, vector<2x256xf32>
    %c0_i32_200 = arith.constant 0 : i32
    %363 = vector.broadcast %c0_i32_200 : i32 to vector<1x256xi32>
    %364 = arith.addi %18, %363 : vector<1x256xi32>
    %c0_i32_201 = arith.constant 0 : i32
    %365 = vector.broadcast %c0_i32_201 : i32 to vector<1x256xi32>
    %366 = arith.cmpi sge, %364, %365 : vector<1x256xi32>
    %c0_i32_202 = arith.constant 0 : i32
    %367 = vector.broadcast %c0_i32_202 : i32 to vector<1x256xi32>
    %368 = arith.addi %18, %367 : vector<1x256xi32>
    %c16_i32_203 = arith.constant 16 : i32
    %369 = vector.broadcast %c16_i32_203 : i32 to vector<1x256xi32>
    %370 = arith.cmpi slt, %368, %369 : vector<1x256xi32>
    %371 = arith.andi %366, %370 : vector<1x256xi1>
    %cst_204 = arith.constant 0.000000e+00 : f32
    %372 = vector.shape_cast %371 : vector<1x256xi1> to vector<1x256xi1>
    %373 = vector.broadcast %372 : vector<1x256xi1> to vector<2x256xi1>
    %374 = vector.broadcast %cst_204 : f32 to vector<2x256xf32>
    %375 = arith.select %373, %362, %374 : vector<2x256xi1>, vector<2x256xf32>
    %c24_205 = arith.constant 24 : index
    %c0_206 = arith.constant 0 : index
    %376 = vector.load %arg15[%c24_205, %c0_206] : memref<50x256xf32, #tpu.memory_space<vmem>>, vector<2x256xf32>
    tpu.vector_store %arg15[%c24_205, %c0_206], %375 {strides = array<i32>} : memref<50x256xf32, #tpu.memory_space<vmem>>, vector<2x256xf32>,
    %c0_207 = arith.constant 0 : index
    %c35 = arith.constant 35 : index
    %377 = vector.load %arg12[%c0_207, %c35] : memref<2x324xf32, #tpu.memory_space<vmem>>, vector<2x256xf32>
    %c1_i32_208 = arith.constant 1 : i32
    %378 = vector.broadcast %c1_i32_208 : i32 to vector<1x256xi32>
    %379 = arith.addi %18, %378 : vector<1x256xi32>
    %c0_i32_209 = arith.constant 0 : i32
    %380 = vector.broadcast %c0_i32_209 : i32 to vector<1x256xi32>
    %381 = arith.cmpi sge, %379, %380 : vector<1x256xi32>
    %c1_i32_210 = arith.constant 1 : i32
    %382 = vector.broadcast %c1_i32_210 : i32 to vector<1x256xi32>
    %383 = arith.addi %18, %382 : vector<1x256xi32>
    %c16_i32_211 = arith.constant 16 : i32
    %384 = vector.broadcast %c16_i32_211 : i32 to vector<1x256xi32>
    %385 = arith.cmpi slt, %383, %384 : vector<1x256xi32>
    %386 = arith.andi %381, %385 : vector<1x256xi1>
    %cst_212 = arith.constant 0.000000e+00 : f32
    %387 = vector.shape_cast %386 : vector<1x256xi1> to vector<1x256xi1>
    %388 = vector.broadcast %387 : vector<1x256xi1> to vector<2x256xi1>
    %389 = vector.broadcast %cst_212 : f32 to vector<2x256xf32>
    %390 = arith.select %388, %377, %389 : vector<2x256xi1>, vector<2x256xf32>
    %c26 = arith.constant 26 : index
    %c0_213 = arith.constant 0 : index
    %391 = vector.load %arg15[%c26, %c0_213] : memref<50x256xf32, #tpu.memory_space<vmem>>, vector<2x256xf32>
    tpu.vector_store %arg15[%c26, %c0_213], %390 {strides = array<i32>} : memref<50x256xf32, #tpu.memory_space<vmem>>, vector<2x256xf32>,
    %c0_214 = arith.constant 0 : index
    %c36 = arith.constant 36 : index
    %392 = vector.load %arg12[%c0_214, %c36] : memref<2x324xf32, #tpu.memory_space<vmem>>, vector<2x256xf32>
    %c2_i32_215 = arith.constant 2 : i32
    %393 = vector.broadcast %c2_i32_215 : i32 to vector<1x256xi32>
    %394 = arith.addi %18, %393 : vector<1x256xi32>
    %c0_i32_216 = arith.constant 0 : i32
    %395 = vector.broadcast %c0_i32_216 : i32 to vector<1x256xi32>
    %396 = arith.cmpi sge, %394, %395 : vector<1x256xi32>
    %c2_i32_217 = arith.constant 2 : i32
    %397 = vector.broadcast %c2_i32_217 : i32 to vector<1x256xi32>
    %398 = arith.addi %18, %397 : vector<1x256xi32>
    %c16_i32_218 = arith.constant 16 : i32
    %399 = vector.broadcast %c16_i32_218 : i32 to vector<1x256xi32>
    %400 = arith.cmpi slt, %398, %399 : vector<1x256xi32>
    %401 = arith.andi %396, %400 : vector<1x256xi1>
    %cst_219 = arith.constant 0.000000e+00 : f32
    %402 = vector.shape_cast %401 : vector<1x256xi1> to vector<1x256xi1>
    %403 = vector.broadcast %402 : vector<1x256xi1> to vector<2x256xi1>
    %404 = vector.broadcast %cst_219 : f32 to vector<2x256xf32>
    %405 = arith.select %403, %392, %404 : vector<2x256xi1>, vector<2x256xf32>
    %c28_220 = arith.constant 28 : index
    %c0_221 = arith.constant 0 : index
    %406 = vector.load %arg15[%c28_220, %c0_221] : memref<50x256xf32, #tpu.memory_space<vmem>>, vector<2x256xf32>
    tpu.vector_store %arg15[%c28_220, %c0_221], %405 {strides = array<i32>} : memref<50x256xf32, #tpu.memory_space<vmem>>, vector<2x256xf32>,
    %c0_222 = arith.constant 0 : index
    %c48 = arith.constant 48 : index
    %407 = vector.load %arg12[%c0_222, %c48] : memref<2x324xf32, #tpu.memory_space<vmem>>, vector<2x256xf32>
    %c-2_i32_223 = arith.constant -2 : i32
    %408 = vector.broadcast %c-2_i32_223 : i32 to vector<1x256xi32>
    %409 = arith.addi %18, %408 : vector<1x256xi32>
    %c0_i32_224 = arith.constant 0 : i32
    %410 = vector.broadcast %c0_i32_224 : i32 to vector<1x256xi32>
    %411 = arith.cmpi sge, %409, %410 : vector<1x256xi32>
    %c-2_i32_225 = arith.constant -2 : i32
    %412 = vector.broadcast %c-2_i32_225 : i32 to vector<1x256xi32>
    %413 = arith.addi %18, %412 : vector<1x256xi32>
    %c16_i32_226 = arith.constant 16 : i32
    %414 = vector.broadcast %c16_i32_226 : i32 to vector<1x256xi32>
    %415 = arith.cmpi slt, %413, %414 : vector<1x256xi32>
    %416 = arith.andi %411, %415 : vector<1x256xi1>
    %cst_227 = arith.constant 0.000000e+00 : f32
    %417 = vector.shape_cast %416 : vector<1x256xi1> to vector<1x256xi1>
    %418 = vector.broadcast %417 : vector<1x256xi1> to vector<2x256xi1>
    %419 = vector.broadcast %cst_227 : f32 to vector<2x256xf32>
    %420 = arith.select %418, %407, %419 : vector<2x256xi1>, vector<2x256xf32>
    %c30 = arith.constant 30 : index
    %c0_228 = arith.constant 0 : index
    %421 = vector.load %arg15[%c30, %c0_228] : memref<50x256xf32, #tpu.memory_space<vmem>>, vector<2x256xf32>
    tpu.vector_store %arg15[%c30, %c0_228], %420 {strides = array<i32>} : memref<50x256xf32, #tpu.memory_space<vmem>>, vector<2x256xf32>,
    %c0_229 = arith.constant 0 : index
    %c49 = arith.constant 49 : index
    %422 = vector.load %arg12[%c0_229, %c49] : memref<2x324xf32, #tpu.memory_space<vmem>>, vector<2x256xf32>
    %c-1_i32_230 = arith.constant -1 : i32
    %423 = vector.broadcast %c-1_i32_230 : i32 to vector<1x256xi32>
    %424 = arith.addi %18, %423 : vector<1x256xi32>
    %c0_i32_231 = arith.constant 0 : i32
    %425 = vector.broadcast %c0_i32_231 : i32 to vector<1x256xi32>
    %426 = arith.cmpi sge, %424, %425 : vector<1x256xi32>
    %c-1_i32_232 = arith.constant -1 : i32
    %427 = vector.broadcast %c-1_i32_232 : i32 to vector<1x256xi32>
    %428 = arith.addi %18, %427 : vector<1x256xi32>
    %c16_i32_233 = arith.constant 16 : i32
    %429 = vector.broadcast %c16_i32_233 : i32 to vector<1x256xi32>
    %430 = arith.cmpi slt, %428, %429 : vector<1x256xi32>
    %431 = arith.andi %426, %430 : vector<1x256xi1>
    %cst_234 = arith.constant 0.000000e+00 : f32
    %432 = vector.shape_cast %431 : vector<1x256xi1> to vector<1x256xi1>
    %433 = vector.broadcast %432 : vector<1x256xi1> to vector<2x256xi1>
    %434 = vector.broadcast %cst_234 : f32 to vector<2x256xf32>
    %435 = arith.select %433, %422, %434 : vector<2x256xi1>, vector<2x256xf32>
    %c32_235 = arith.constant 32 : index
    %c0_236 = arith.constant 0 : index
    %436 = vector.load %arg15[%c32_235, %c0_236] : memref<50x256xf32, #tpu.memory_space<vmem>>, vector<2x256xf32>
    tpu.vector_store %arg15[%c32_235, %c0_236], %435 {strides = array<i32>} : memref<50x256xf32, #tpu.memory_space<vmem>>, vector<2x256xf32>,
    %c0_237 = arith.constant 0 : index
    %c50 = arith.constant 50 : index
    %437 = vector.load %arg12[%c0_237, %c50] : memref<2x324xf32, #tpu.memory_space<vmem>>, vector<2x256xf32>
    %c0_i32_238 = arith.constant 0 : i32
    %438 = vector.broadcast %c0_i32_238 : i32 to vector<1x256xi32>
    %439 = arith.addi %18, %438 : vector<1x256xi32>
    %c0_i32_239 = arith.constant 0 : i32
    %440 = vector.broadcast %c0_i32_239 : i32 to vector<1x256xi32>
    %441 = arith.cmpi sge, %439, %440 : vector<1x256xi32>
    %c0_i32_240 = arith.constant 0 : i32
    %442 = vector.broadcast %c0_i32_240 : i32 to vector<1x256xi32>
    %443 = arith.addi %18, %442 : vector<1x256xi32>
    %c16_i32_241 = arith.constant 16 : i32
    %444 = vector.broadcast %c16_i32_241 : i32 to vector<1x256xi32>
    %445 = arith.cmpi slt, %443, %444 : vector<1x256xi32>
    %446 = arith.andi %441, %445 : vector<1x256xi1>
    %cst_242 = arith.constant 0.000000e+00 : f32
    %447 = vector.shape_cast %446 : vector<1x256xi1> to vector<1x256xi1>
    %448 = vector.broadcast %447 : vector<1x256xi1> to vector<2x256xi1>
    %449 = vector.broadcast %cst_242 : f32 to vector<2x256xf32>
    %450 = arith.select %448, %437, %449 : vector<2x256xi1>, vector<2x256xf32>
    %c34_243 = arith.constant 34 : index
    %c0_244 = arith.constant 0 : index
    %451 = vector.load %arg15[%c34_243, %c0_244] : memref<50x256xf32, #tpu.memory_space<vmem>>, vector<2x256xf32>
    tpu.vector_store %arg15[%c34_243, %c0_244], %450 {strides = array<i32>} : memref<50x256xf32, #tpu.memory_space<vmem>>, vector<2x256xf32>,
    %c0_245 = arith.constant 0 : index
    %c51 = arith.constant 51 : index
    %452 = vector.load %arg12[%c0_245, %c51] : memref<2x324xf32, #tpu.memory_space<vmem>>, vector<2x256xf32>
    %c1_i32_246 = arith.constant 1 : i32
    %453 = vector.broadcast %c1_i32_246 : i32 to vector<1x256xi32>
    %454 = arith.addi %18, %453 : vector<1x256xi32>
    %c0_i32_247 = arith.constant 0 : i32
    %455 = vector.broadcast %c0_i32_247 : i32 to vector<1x256xi32>
    %456 = arith.cmpi sge, %454, %455 : vector<1x256xi32>
    %c1_i32_248 = arith.constant 1 : i32
    %457 = vector.broadcast %c1_i32_248 : i32 to vector<1x256xi32>
    %458 = arith.addi %18, %457 : vector<1x256xi32>
    %c16_i32_249 = arith.constant 16 : i32
    %459 = vector.broadcast %c16_i32_249 : i32 to vector<1x256xi32>
    %460 = arith.cmpi slt, %458, %459 : vector<1x256xi32>
    %461 = arith.andi %456, %460 : vector<1x256xi1>
    %cst_250 = arith.constant 0.000000e+00 : f32
    %462 = vector.shape_cast %461 : vector<1x256xi1> to vector<1x256xi1>
    %463 = vector.broadcast %462 : vector<1x256xi1> to vector<2x256xi1>
    %464 = vector.broadcast %cst_250 : f32 to vector<2x256xf32>
    %465 = arith.select %463, %452, %464 : vector<2x256xi1>, vector<2x256xf32>
    %c36_251 = arith.constant 36 : index
    %c0_252 = arith.constant 0 : index
    %466 = vector.load %arg15[%c36_251, %c0_252] : memref<50x256xf32, #tpu.memory_space<vmem>>, vector<2x256xf32>
    tpu.vector_store %arg15[%c36_251, %c0_252], %465 {strides = array<i32>} : memref<50x256xf32, #tpu.memory_space<vmem>>, vector<2x256xf32>,
    %c0_253 = arith.constant 0 : index
    %c52 = arith.constant 52 : index
    %467 = vector.load %arg12[%c0_253, %c52] : memref<2x324xf32, #tpu.memory_space<vmem>>, vector<2x256xf32>
    %c2_i32_254 = arith.constant 2 : i32
    %468 = vector.broadcast %c2_i32_254 : i32 to vector<1x256xi32>
    %469 = arith.addi %18, %468 : vector<1x256xi32>
    %c0_i32_255 = arith.constant 0 : i32
    %470 = vector.broadcast %c0_i32_255 : i32 to vector<1x256xi32>
    %471 = arith.cmpi sge, %469, %470 : vector<1x256xi32>
    %c2_i32_256 = arith.constant 2 : i32
    %472 = vector.broadcast %c2_i32_256 : i32 to vector<1x256xi32>
    %473 = arith.addi %18, %472 : vector<1x256xi32>
    %c16_i32_257 = arith.constant 16 : i32
    %474 = vector.broadcast %c16_i32_257 : i32 to vector<1x256xi32>
    %475 = arith.cmpi slt, %473, %474 : vector<1x256xi32>
    %476 = arith.andi %471, %475 : vector<1x256xi1>
    %cst_258 = arith.constant 0.000000e+00 : f32
    %477 = vector.shape_cast %476 : vector<1x256xi1> to vector<1x256xi1>
    %478 = vector.broadcast %477 : vector<1x256xi1> to vector<2x256xi1>
    %479 = vector.broadcast %cst_258 : f32 to vector<2x256xf32>
    %480 = arith.select %478, %467, %479 : vector<2x256xi1>, vector<2x256xf32>
    %c38 = arith.constant 38 : index
    %c0_259 = arith.constant 0 : index
    %481 = vector.load %arg15[%c38, %c0_259] : memref<50x256xf32, #tpu.memory_space<vmem>>, vector<2x256xf32>
    tpu.vector_store %arg15[%c38, %c0_259], %480 {strides = array<i32>} : memref<50x256xf32, #tpu.memory_space<vmem>>, vector<2x256xf32>,
    %c0_260 = arith.constant 0 : index
    %c64 = arith.constant 64 : index
    %482 = vector.load %arg12[%c0_260, %c64] : memref<2x324xf32, #tpu.memory_space<vmem>>, vector<2x256xf32>
    %c-2_i32_261 = arith.constant -2 : i32
    %483 = vector.broadcast %c-2_i32_261 : i32 to vector<1x256xi32>
    %484 = arith.addi %18, %483 : vector<1x256xi32>
    %c0_i32_262 = arith.constant 0 : i32
    %485 = vector.broadcast %c0_i32_262 : i32 to vector<1x256xi32>
    %486 = arith.cmpi sge, %484, %485 : vector<1x256xi32>
    %c-2_i32_263 = arith.constant -2 : i32
    %487 = vector.broadcast %c-2_i32_263 : i32 to vector<1x256xi32>
    %488 = arith.addi %18, %487 : vector<1x256xi32>
    %c16_i32_264 = arith.constant 16 : i32
    %489 = vector.broadcast %c16_i32_264 : i32 to vector<1x256xi32>
    %490 = arith.cmpi slt, %488, %489 : vector<1x256xi32>
    %491 = arith.andi %486, %490 : vector<1x256xi1>
    %cst_265 = arith.constant 0.000000e+00 : f32
    %492 = vector.shape_cast %491 : vector<1x256xi1> to vector<1x256xi1>
    %493 = vector.broadcast %492 : vector<1x256xi1> to vector<2x256xi1>
    %494 = vector.broadcast %cst_265 : f32 to vector<2x256xf32>
    %495 = arith.select %493, %482, %494 : vector<2x256xi1>, vector<2x256xf32>
    %c40 = arith.constant 40 : index
    %c0_266 = arith.constant 0 : index
    %496 = vector.load %arg15[%c40, %c0_266] : memref<50x256xf32, #tpu.memory_space<vmem>>, vector<2x256xf32>
    tpu.vector_store %arg15[%c40, %c0_266], %495 {strides = array<i32>} : memref<50x256xf32, #tpu.memory_space<vmem>>, vector<2x256xf32>,
    %c0_267 = arith.constant 0 : index
    %c65 = arith.constant 65 : index
    %497 = vector.load %arg12[%c0_267, %c65] : memref<2x324xf32, #tpu.memory_space<vmem>>, vector<2x256xf32>
    %c-1_i32_268 = arith.constant -1 : i32
    %498 = vector.broadcast %c-1_i32_268 : i32 to vector<1x256xi32>
    %499 = arith.addi %18, %498 : vector<1x256xi32>
    %c0_i32_269 = arith.constant 0 : i32
    %500 = vector.broadcast %c0_i32_269 : i32 to vector<1x256xi32>
    %501 = arith.cmpi sge, %499, %500 : vector<1x256xi32>
    %c-1_i32_270 = arith.constant -1 : i32
    %502 = vector.broadcast %c-1_i32_270 : i32 to vector<1x256xi32>
    %503 = arith.addi %18, %502 : vector<1x256xi32>
    %c16_i32_271 = arith.constant 16 : i32
    %504 = vector.broadcast %c16_i32_271 : i32 to vector<1x256xi32>
    %505 = arith.cmpi slt, %503, %504 : vector<1x256xi32>
    %506 = arith.andi %501, %505 : vector<1x256xi1>
    %cst_272 = arith.constant 0.000000e+00 : f32
    %507 = vector.shape_cast %506 : vector<1x256xi1> to vector<1x256xi1>
    %508 = vector.broadcast %507 : vector<1x256xi1> to vector<2x256xi1>
    %509 = vector.broadcast %cst_272 : f32 to vector<2x256xf32>
    %510 = arith.select %508, %497, %509 : vector<2x256xi1>, vector<2x256xf32>
    %c42 = arith.constant 42 : index
    %c0_273 = arith.constant 0 : index
    %511 = vector.load %arg15[%c42, %c0_273] : memref<50x256xf32, #tpu.memory_space<vmem>>, vector<2x256xf32>
    tpu.vector_store %arg15[%c42, %c0_273], %510 {strides = array<i32>} : memref<50x256xf32, #tpu.memory_space<vmem>>, vector<2x256xf32>,
    %c0_274 = arith.constant 0 : index
    %c66 = arith.constant 66 : index
    %512 = vector.load %arg12[%c0_274, %c66] : memref<2x324xf32, #tpu.memory_space<vmem>>, vector<2x256xf32>
    %c0_i32_275 = arith.constant 0 : i32
    %513 = vector.broadcast %c0_i32_275 : i32 to vector<1x256xi32>
    %514 = arith.addi %18, %513 : vector<1x256xi32>
    %c0_i32_276 = arith.constant 0 : i32
    %515 = vector.broadcast %c0_i32_276 : i32 to vector<1x256xi32>
    %516 = arith.cmpi sge, %514, %515 : vector<1x256xi32>
    %c0_i32_277 = arith.constant 0 : i32
    %517 = vector.broadcast %c0_i32_277 : i32 to vector<1x256xi32>
    %518 = arith.addi %18, %517 : vector<1x256xi32>
    %c16_i32_278 = arith.constant 16 : i32
    %519 = vector.broadcast %c16_i32_278 : i32 to vector<1x256xi32>
    %520 = arith.cmpi slt, %518, %519 : vector<1x256xi32>
    %521 = arith.andi %516, %520 : vector<1x256xi1>
    %cst_279 = arith.constant 0.000000e+00 : f32
    %522 = vector.shape_cast %521 : vector<1x256xi1> to vector<1x256xi1>
    %523 = vector.broadcast %522 : vector<1x256xi1> to vector<2x256xi1>
    %524 = vector.broadcast %cst_279 : f32 to vector<2x256xf32>
    %525 = arith.select %523, %512, %524 : vector<2x256xi1>, vector<2x256xf32>
    %c44 = arith.constant 44 : index
    %c0_280 = arith.constant 0 : index
    %526 = vector.load %arg15[%c44, %c0_280] : memref<50x256xf32, #tpu.memory_space<vmem>>, vector<2x256xf32>
    tpu.vector_store %arg15[%c44, %c0_280], %525 {strides = array<i32>} : memref<50x256xf32, #tpu.memory_space<vmem>>, vector<2x256xf32>,
    %c0_281 = arith.constant 0 : index
    %c67 = arith.constant 67 : index
    %527 = vector.load %arg12[%c0_281, %c67] : memref<2x324xf32, #tpu.memory_space<vmem>>, vector<2x256xf32>
    %c1_i32_282 = arith.constant 1 : i32
    %528 = vector.broadcast %c1_i32_282 : i32 to vector<1x256xi32>
    %529 = arith.addi %18, %528 : vector<1x256xi32>
    %c0_i32_283 = arith.constant 0 : i32
    %530 = vector.broadcast %c0_i32_283 : i32 to vector<1x256xi32>
    %531 = arith.cmpi sge, %529, %530 : vector<1x256xi32>
    %c1_i32_284 = arith.constant 1 : i32
    %532 = vector.broadcast %c1_i32_284 : i32 to vector<1x256xi32>
    %533 = arith.addi %18, %532 : vector<1x256xi32>
    %c16_i32_285 = arith.constant 16 : i32
    %534 = vector.broadcast %c16_i32_285 : i32 to vector<1x256xi32>
    %535 = arith.cmpi slt, %533, %534 : vector<1x256xi32>
    %536 = arith.andi %531, %535 : vector<1x256xi1>
    %cst_286 = arith.constant 0.000000e+00 : f32
    %537 = vector.shape_cast %536 : vector<1x256xi1> to vector<1x256xi1>
    %538 = vector.broadcast %537 : vector<1x256xi1> to vector<2x256xi1>
    %539 = vector.broadcast %cst_286 : f32 to vector<2x256xf32>
    %540 = arith.select %538, %527, %539 : vector<2x256xi1>, vector<2x256xf32>
    %c46 = arith.constant 46 : index
    %c0_287 = arith.constant 0 : index
    %541 = vector.load %arg15[%c46, %c0_287] : memref<50x256xf32, #tpu.memory_space<vmem>>, vector<2x256xf32>
    tpu.vector_store %arg15[%c46, %c0_287], %540 {strides = array<i32>} : memref<50x256xf32, #tpu.memory_space<vmem>>, vector<2x256xf32>,
    %c0_288 = arith.constant 0 : index
    %c68 = arith.constant 68 : index
    %542 = vector.load %arg12[%c0_288, %c68] : memref<2x324xf32, #tpu.memory_space<vmem>>, vector<2x256xf32>
    %c2_i32_289 = arith.constant 2 : i32
    %543 = vector.broadcast %c2_i32_289 : i32 to vector<1x256xi32>
    %544 = arith.addi %18, %543 : vector<1x256xi32>
    %c0_i32_290 = arith.constant 0 : i32
    %545 = vector.broadcast %c0_i32_290 : i32 to vector<1x256xi32>
    %546 = arith.cmpi sge, %544, %545 : vector<1x256xi32>
    %c2_i32_291 = arith.constant 2 : i32
    %547 = vector.broadcast %c2_i32_291 : i32 to vector<1x256xi32>
    %548 = arith.addi %18, %547 : vector<1x256xi32>
    %c16_i32_292 = arith.constant 16 : i32
    %549 = vector.broadcast %c16_i32_292 : i32 to vector<1x256xi32>
    %550 = arith.cmpi slt, %548, %549 : vector<1x256xi32>
    %551 = arith.andi %546, %550 : vector<1x256xi1>
    %cst_293 = arith.constant 0.000000e+00 : f32
    %552 = vector.shape_cast %551 : vector<1x256xi1> to vector<1x256xi1>
    %553 = vector.broadcast %552 : vector<1x256xi1> to vector<2x256xi1>
    %554 = vector.broadcast %cst_293 : f32 to vector<2x256xf32>
    %555 = arith.select %553, %542, %554 : vector<2x256xi1>, vector<2x256xf32>
    %c48_294 = arith.constant 48 : index
    %c0_295 = arith.constant 0 : index
    %556 = vector.load %arg15[%c48_294, %c0_295] : memref<50x256xf32, #tpu.memory_space<vmem>>, vector<2x256xf32>
    tpu.vector_store %arg15[%c48_294, %c0_295], %555 {strides = array<i32>} : memref<50x256xf32, #tpu.memory_space<vmem>>, vector<2x256xf32>,
    %c0_296 = arith.constant 0 : index
    %c0_297 = arith.constant 0 : index
    %557 = vector.load %arg6[%c0_296, %c0_297] : memref<4x50xf32, #tpu.memory_space<vmem>>, vector<4x50xf32>
    %c0_298 = arith.constant 0 : index
    %c0_299 = arith.constant 0 : index
    %558 = vector.load %arg15[%c0_298, %c0_299] : memref<50x256xf32, #tpu.memory_space<vmem>>, vector<50x256xf32>
    %cst_300 = arith.constant dense<0.000000e+00> : vector<4x256xf32>
    %559 = tpu.matmul %557, %558, %cst_300 {dimension_numbers = #tpu.dot_dimension_numbers<[1], [0], [0], [1], [0, 0, 1, 1], [], []>} : vector<4x50xf32>, vector<50x256xf32>, vector<4x256xf32> -> vector<4x256xf32>
    %c0_301 = arith.constant 0 : index
    %c0_302 = arith.constant 0 : index
    %560 = vector.load %arg7[%c0_301, %c0_302] : memref<4x1xf32, #tpu.memory_space<vmem>>, vector<4x1xf32>
    %561 = vector.broadcast %560 : vector<4x1xf32> to vector<4x256xf32>
    %562 = arith.addf %559, %561 : vector<4x256xf32>
    %cst_303 = arith.constant 0.000000e+00 : f32
    %563 = vector.broadcast %cst_303 : f32 to vector<4x256xf32>
    %564 = arith.maximumf %562, %563 : vector<4x256xf32>
    %cst_304 = arith.constant -1.000000e+30 : f32
    %565 = vector.broadcast %cst_304 : f32 to vector<4x17xf32>
    %c0_305 = arith.constant 0 : index
    %c0_306 = arith.constant 0 : index
    %566 = vector.load %arg13[%c0_305, %c0_306] : memref<4x290xf32, #tpu.memory_space<vmem>>, vector<4x17xf32>
    tpu.vector_store %arg13[%c0_305, %c0_306], %565 {strides = array<i32>} : memref<4x290xf32, #tpu.memory_space<vmem>>, vector<4x17xf32>,
    %cst_307 = arith.constant -1.000000e+30 : f32
    %567 = vector.broadcast %cst_307 : f32 to vector<4x17xf32>
    %c0_308 = arith.constant 0 : index
    %c273_309 = arith.constant 273 : index
    %568 = vector.load %arg13[%c0_308, %c273_309] : memref<4x290xf32, #tpu.memory_space<vmem>>, vector<4x17xf32>
    tpu.vector_store %arg13[%c0_308, %c273_309], %567 {strides = array<i32>} : memref<4x290xf32, #tpu.memory_space<vmem>>, vector<4x17xf32>,
    %c0_310 = arith.constant 0 : index
    %c17_311 = arith.constant 17 : index
    %569 = vector.load %arg13[%c0_310, %c17_311] : memref<4x290xf32, #tpu.memory_space<vmem>>, vector<4x256xf32>
    tpu.vector_store %arg13[%c0_310, %c17_311], %1 {strides = array<i32>} : memref<4x290xf32, #tpu.memory_space<vmem>>, vector<4x256xf32>,
    %c0_312 = arith.constant 0 : index
    %c0_313 = arith.constant 0 : index
    %570 = vector.load %arg13[%c0_312, %c0_313] : memref<4x290xf32, #tpu.memory_space<vmem>>, vector<4x256xf32>
    %c-1_i32_314 = arith.constant -1 : i32
    %571 = vector.broadcast %c-1_i32_314 : i32 to vector<1x256xi32>
    %572 = arith.addi %18, %571 : vector<1x256xi32>
    %c0_i32_315 = arith.constant 0 : i32
    %573 = vector.broadcast %c0_i32_315 : i32 to vector<1x256xi32>
    %574 = arith.cmpi sge, %572, %573 : vector<1x256xi32>
    %c-1_i32_316 = arith.constant -1 : i32
    %575 = vector.broadcast %c-1_i32_316 : i32 to vector<1x256xi32>
    %576 = arith.addi %18, %575 : vector<1x256xi32>
    %c16_i32_317 = arith.constant 16 : i32
    %577 = vector.broadcast %c16_i32_317 : i32 to vector<1x256xi32>
    %578 = arith.cmpi slt, %576, %577 : vector<1x256xi32>
    %579 = arith.andi %574, %578 : vector<1x256xi1>
    %cst_318 = arith.constant -1.000000e+30 : f32
    %580 = vector.shape_cast %579 : vector<1x256xi1> to vector<1x256xi1>
    %581 = vector.broadcast %580 : vector<1x256xi1> to vector<4x256xi1>
    %582 = vector.broadcast %cst_318 : f32 to vector<4x256xf32>
    %583 = arith.select %581, %570, %582 : vector<4x256xi1>, vector<4x256xf32>
    %c0_319 = arith.constant 0 : index
    %c1_320 = arith.constant 1 : index
    %584 = vector.load %arg13[%c0_319, %c1_320] : memref<4x290xf32, #tpu.memory_space<vmem>>, vector<4x256xf32>
    %c0_i32_321 = arith.constant 0 : i32
    %585 = vector.broadcast %c0_i32_321 : i32 to vector<1x256xi32>
    %586 = arith.addi %18, %585 : vector<1x256xi32>
    %c0_i32_322 = arith.constant 0 : i32
    %587 = vector.broadcast %c0_i32_322 : i32 to vector<1x256xi32>
    %588 = arith.cmpi sge, %586, %587 : vector<1x256xi32>
    %c0_i32_323 = arith.constant 0 : i32
    %589 = vector.broadcast %c0_i32_323 : i32 to vector<1x256xi32>
    %590 = arith.addi %18, %589 : vector<1x256xi32>
    %c16_i32_324 = arith.constant 16 : i32
    %591 = vector.broadcast %c16_i32_324 : i32 to vector<1x256xi32>
    %592 = arith.cmpi slt, %590, %591 : vector<1x256xi32>
    %593 = arith.andi %588, %592 : vector<1x256xi1>
    %cst_325 = arith.constant -1.000000e+30 : f32
    %594 = vector.shape_cast %593 : vector<1x256xi1> to vector<1x256xi1>
    %595 = vector.broadcast %594 : vector<1x256xi1> to vector<4x256xi1>
    %596 = vector.broadcast %cst_325 : f32 to vector<4x256xf32>
    %597 = arith.select %595, %584, %596 : vector<4x256xi1>, vector<4x256xf32>
    %598 = arith.maximumf %583, %597 : vector<4x256xf32>
    %c0_326 = arith.constant 0 : index
    %c2_327 = arith.constant 2 : index
    %599 = vector.load %arg13[%c0_326, %c2_327] : memref<4x290xf32, #tpu.memory_space<vmem>>, vector<4x256xf32>
    %c1_i32_328 = arith.constant 1 : i32
    %600 = vector.broadcast %c1_i32_328 : i32 to vector<1x256xi32>
    %601 = arith.addi %18, %600 : vector<1x256xi32>
    %c0_i32_329 = arith.constant 0 : i32
    %602 = vector.broadcast %c0_i32_329 : i32 to vector<1x256xi32>
    %603 = arith.cmpi sge, %601, %602 : vector<1x256xi32>
    %c1_i32_330 = arith.constant 1 : i32
    %604 = vector.broadcast %c1_i32_330 : i32 to vector<1x256xi32>
    %605 = arith.addi %18, %604 : vector<1x256xi32>
    %c16_i32_331 = arith.constant 16 : i32
    %606 = vector.broadcast %c16_i32_331 : i32 to vector<1x256xi32>
    %607 = arith.cmpi slt, %605, %606 : vector<1x256xi32>
    %608 = arith.andi %603, %607 : vector<1x256xi1>
    %cst_332 = arith.constant -1.000000e+30 : f32
    %609 = vector.shape_cast %608 : vector<1x256xi1> to vector<1x256xi1>
    %610 = vector.broadcast %609 : vector<1x256xi1> to vector<4x256xi1>
    %611 = vector.broadcast %cst_332 : f32 to vector<4x256xf32>
    %612 = arith.select %610, %599, %611 : vector<4x256xi1>, vector<4x256xf32>
    %613 = arith.maximumf %598, %612 : vector<4x256xf32>
    %c0_333 = arith.constant 0 : index
    %c16_334 = arith.constant 16 : index
    %614 = vector.load %arg13[%c0_333, %c16_334] : memref<4x290xf32, #tpu.memory_space<vmem>>, vector<4x256xf32>
    %c-1_i32_335 = arith.constant -1 : i32
    %615 = vector.broadcast %c-1_i32_335 : i32 to vector<1x256xi32>
    %616 = arith.addi %18, %615 : vector<1x256xi32>
    %c0_i32_336 = arith.constant 0 : i32
    %617 = vector.broadcast %c0_i32_336 : i32 to vector<1x256xi32>
    %618 = arith.cmpi sge, %616, %617 : vector<1x256xi32>
    %c-1_i32_337 = arith.constant -1 : i32
    %619 = vector.broadcast %c-1_i32_337 : i32 to vector<1x256xi32>
    %620 = arith.addi %18, %619 : vector<1x256xi32>
    %c16_i32_338 = arith.constant 16 : i32
    %621 = vector.broadcast %c16_i32_338 : i32 to vector<1x256xi32>
    %622 = arith.cmpi slt, %620, %621 : vector<1x256xi32>
    %623 = arith.andi %618, %622 : vector<1x256xi1>
    %cst_339 = arith.constant -1.000000e+30 : f32
    %624 = vector.shape_cast %623 : vector<1x256xi1> to vector<1x256xi1>
    %625 = vector.broadcast %624 : vector<1x256xi1> to vector<4x256xi1>
    %626 = vector.broadcast %cst_339 : f32 to vector<4x256xf32>
    %627 = arith.select %625, %614, %626 : vector<4x256xi1>, vector<4x256xf32>
    %628 = arith.maximumf %613, %627 : vector<4x256xf32>
    %c0_340 = arith.constant 0 : index
    %c17_341 = arith.constant 17 : index
    %629 = vector.load %arg13[%c0_340, %c17_341] : memref<4x290xf32, #tpu.memory_space<vmem>>, vector<4x256xf32>
    %c0_i32_342 = arith.constant 0 : i32
    %630 = vector.broadcast %c0_i32_342 : i32 to vector<1x256xi32>
    %631 = arith.addi %18, %630 : vector<1x256xi32>
    %c0_i32_343 = arith.constant 0 : i32
    %632 = vector.broadcast %c0_i32_343 : i32 to vector<1x256xi32>
    %633 = arith.cmpi sge, %631, %632 : vector<1x256xi32>
    %c0_i32_344 = arith.constant 0 : i32
    %634 = vector.broadcast %c0_i32_344 : i32 to vector<1x256xi32>
    %635 = arith.addi %18, %634 : vector<1x256xi32>
    %c16_i32_345 = arith.constant 16 : i32
    %636 = vector.broadcast %c16_i32_345 : i32 to vector<1x256xi32>
    %637 = arith.cmpi slt, %635, %636 : vector<1x256xi32>
    %638 = arith.andi %633, %637 : vector<1x256xi1>
    %cst_346 = arith.constant -1.000000e+30 : f32
    %639 = vector.shape_cast %638 : vector<1x256xi1> to vector<1x256xi1>
    %640 = vector.broadcast %639 : vector<1x256xi1> to vector<4x256xi1>
    %641 = vector.broadcast %cst_346 : f32 to vector<4x256xf32>
    %642 = arith.select %640, %629, %641 : vector<4x256xi1>, vector<4x256xf32>
    %643 = arith.maximumf %628, %642 : vector<4x256xf32>
    %c0_347 = arith.constant 0 : index
    %c18_348 = arith.constant 18 : index
    %644 = vector.load %arg13[%c0_347, %c18_348] : memref<4x290xf32, #tpu.memory_space<vmem>>, vector<4x256xf32>
    %c1_i32_349 = arith.constant 1 : i32
    %645 = vector.broadcast %c1_i32_349 : i32 to vector<1x256xi32>
    %646 = arith.addi %18, %645 : vector<1x256xi32>
    %c0_i32_350 = arith.constant 0 : i32
    %647 = vector.broadcast %c0_i32_350 : i32 to vector<1x256xi32>
    %648 = arith.cmpi sge, %646, %647 : vector<1x256xi32>
    %c1_i32_351 = arith.constant 1 : i32
    %649 = vector.broadcast %c1_i32_351 : i32 to vector<1x256xi32>
    %650 = arith.addi %18, %649 : vector<1x256xi32>
    %c16_i32_352 = arith.constant 16 : i32
    %651 = vector.broadcast %c16_i32_352 : i32 to vector<1x256xi32>
    %652 = arith.cmpi slt, %650, %651 : vector<1x256xi32>
    %653 = arith.andi %648, %652 : vector<1x256xi1>
    %cst_353 = arith.constant -1.000000e+30 : f32
    %654 = vector.shape_cast %653 : vector<1x256xi1> to vector<1x256xi1>
    %655 = vector.broadcast %654 : vector<1x256xi1> to vector<4x256xi1>
    %656 = vector.broadcast %cst_353 : f32 to vector<4x256xf32>
    %657 = arith.select %655, %644, %656 : vector<4x256xi1>, vector<4x256xf32>
    %658 = arith.maximumf %643, %657 : vector<4x256xf32>
    %c0_354 = arith.constant 0 : index
    %c32_355 = arith.constant 32 : index
    %659 = vector.load %arg13[%c0_354, %c32_355] : memref<4x290xf32, #tpu.memory_space<vmem>>, vector<4x256xf32>
    %c-1_i32_356 = arith.constant -1 : i32
    %660 = vector.broadcast %c-1_i32_356 : i32 to vector<1x256xi32>
    %661 = arith.addi %18, %660 : vector<1x256xi32>
    %c0_i32_357 = arith.constant 0 : i32
    %662 = vector.broadcast %c0_i32_357 : i32 to vector<1x256xi32>
    %663 = arith.cmpi sge, %661, %662 : vector<1x256xi32>
    %c-1_i32_358 = arith.constant -1 : i32
    %664 = vector.broadcast %c-1_i32_358 : i32 to vector<1x256xi32>
    %665 = arith.addi %18, %664 : vector<1x256xi32>
    %c16_i32_359 = arith.constant 16 : i32
    %666 = vector.broadcast %c16_i32_359 : i32 to vector<1x256xi32>
    %667 = arith.cmpi slt, %665, %666 : vector<1x256xi32>
    %668 = arith.andi %663, %667 : vector<1x256xi1>
    %cst_360 = arith.constant -1.000000e+30 : f32
    %669 = vector.shape_cast %668 : vector<1x256xi1> to vector<1x256xi1>
    %670 = vector.broadcast %669 : vector<1x256xi1> to vector<4x256xi1>
    %671 = vector.broadcast %cst_360 : f32 to vector<4x256xf32>
    %672 = arith.select %670, %659, %671 : vector<4x256xi1>, vector<4x256xf32>
    %673 = arith.maximumf %658, %672 : vector<4x256xf32>
    %c0_361 = arith.constant 0 : index
    %c33_362 = arith.constant 33 : index
    %674 = vector.load %arg13[%c0_361, %c33_362] : memref<4x290xf32, #tpu.memory_space<vmem>>, vector<4x256xf32>
    %c0_i32_363 = arith.constant 0 : i32
    %675 = vector.broadcast %c0_i32_363 : i32 to vector<1x256xi32>
    %676 = arith.addi %18, %675 : vector<1x256xi32>
    %c0_i32_364 = arith.constant 0 : i32
    %677 = vector.broadcast %c0_i32_364 : i32 to vector<1x256xi32>
    %678 = arith.cmpi sge, %676, %677 : vector<1x256xi32>
    %c0_i32_365 = arith.constant 0 : i32
    %679 = vector.broadcast %c0_i32_365 : i32 to vector<1x256xi32>
    %680 = arith.addi %18, %679 : vector<1x256xi32>
    %c16_i32_366 = arith.constant 16 : i32
    %681 = vector.broadcast %c16_i32_366 : i32 to vector<1x256xi32>
    %682 = arith.cmpi slt, %680, %681 : vector<1x256xi32>
    %683 = arith.andi %678, %682 : vector<1x256xi1>
    %cst_367 = arith.constant -1.000000e+30 : f32
    %684 = vector.shape_cast %683 : vector<1x256xi1> to vector<1x256xi1>
    %685 = vector.broadcast %684 : vector<1x256xi1> to vector<4x256xi1>
    %686 = vector.broadcast %cst_367 : f32 to vector<4x256xf32>
    %687 = arith.select %685, %674, %686 : vector<4x256xi1>, vector<4x256xf32>
    %688 = arith.maximumf %673, %687 : vector<4x256xf32>
    %c0_368 = arith.constant 0 : index
    %c34_369 = arith.constant 34 : index
    %689 = vector.load %arg13[%c0_368, %c34_369] : memref<4x290xf32, #tpu.memory_space<vmem>>, vector<4x256xf32>
    %c1_i32_370 = arith.constant 1 : i32
    %690 = vector.broadcast %c1_i32_370 : i32 to vector<1x256xi32>
    %691 = arith.addi %18, %690 : vector<1x256xi32>
    %c0_i32_371 = arith.constant 0 : i32
    %692 = vector.broadcast %c0_i32_371 : i32 to vector<1x256xi32>
    %693 = arith.cmpi sge, %691, %692 : vector<1x256xi32>
    %c1_i32_372 = arith.constant 1 : i32
    %694 = vector.broadcast %c1_i32_372 : i32 to vector<1x256xi32>
    %695 = arith.addi %18, %694 : vector<1x256xi32>
    %c16_i32_373 = arith.constant 16 : i32
    %696 = vector.broadcast %c16_i32_373 : i32 to vector<1x256xi32>
    %697 = arith.cmpi slt, %695, %696 : vector<1x256xi32>
    %698 = arith.andi %693, %697 : vector<1x256xi1>
    %cst_374 = arith.constant -1.000000e+30 : f32
    %699 = vector.shape_cast %698 : vector<1x256xi1> to vector<1x256xi1>
    %700 = vector.broadcast %699 : vector<1x256xi1> to vector<4x256xi1>
    %701 = vector.broadcast %cst_374 : f32 to vector<4x256xf32>
    %702 = arith.select %700, %689, %701 : vector<4x256xi1>, vector<4x256xf32>
    %703 = arith.maximumf %688, %702 : vector<4x256xf32>
    %c0_375 = arith.constant 0 : index
    %c0_376 = arith.constant 0 : index
    %704 = vector.load %arg8[%c0_375, %c0_376] : memref<4x4xf32, #tpu.memory_space<vmem>>, vector<4x4xf32>
    %cst_377 = arith.constant dense<0.000000e+00> : vector<4x256xf32>
    %705 = tpu.matmul %704, %703, %cst_377 {dimension_numbers = #tpu.dot_dimension_numbers<[1], [0], [0], [1], [0, 0, 1, 1], [], []>} : vector<4x4xf32>, vector<4x256xf32>, vector<4x256xf32> -> vector<4x256xf32>
    %c0_378 = arith.constant 0 : index
    %c0_379 = arith.constant 0 : index
    %706 = vector.load %arg9[%c0_378, %c0_379] : memref<4x1xf32, #tpu.memory_space<vmem>>, vector<4x1xf32>
    %707 = vector.broadcast %706 : vector<4x1xf32> to vector<4x256xf32>
    %708 = arith.addf %705, %707 : vector<4x256xf32>
    %cst_380 = arith.constant 0.000000e+00 : f32
    %709 = vector.broadcast %cst_380 : f32 to vector<4x256xf32>
    %710 = arith.maximumf %708, %709 : vector<4x256xf32>
    %c0_381 = arith.constant 0 : index
    %c0_382 = arith.constant 0 : index
    %c0_383 = arith.constant 0 : index
    %711 = vector.load %arg10[%c0_381, %c0_382, %c0_383] : memref<1x20x256xf32, #tpu.memory_space<vmem>>, vector<1x4x256xf32>
    %712 = vector.shape_cast %711 : vector<1x4x256xf32> to vector<4x256xf32>
    %713 = vector.shape_cast %26 : vector<4x256xf32> to vector<1x4x256xf32>
    tpu.vector_store %arg10[%c0_381, %c0_382, %c0_383], %713 {strides = array<i32>} : memref<1x20x256xf32, #tpu.memory_space<vmem>>, vector<1x4x256xf32>,
    %c0_384 = arith.constant 0 : index
    %c4_385 = arith.constant 4 : index
    %c0_386 = arith.constant 0 : index
    %714 = vector.load %arg10[%c0_384, %c4_385, %c0_386] : memref<1x20x256xf32, #tpu.memory_space<vmem>>, vector<1x8x256xf32>
    %715 = vector.shape_cast %714 : vector<1x8x256xf32> to vector<8x256xf32>
    %716 = vector.shape_cast %176 : vector<8x256xf32> to vector<1x8x256xf32>
    tpu.vector_store %arg10[%c0_384, %c4_385, %c0_386], %716 {strides = array<i32>} : memref<1x20x256xf32, #tpu.memory_space<vmem>>, vector<1x8x256xf32>,
    %c0_387 = arith.constant 0 : index
    %c12_388 = arith.constant 12 : index
    %c0_389 = arith.constant 0 : index
    %717 = vector.load %arg10[%c0_387, %c12_388, %c0_389] : memref<1x20x256xf32, #tpu.memory_space<vmem>>, vector<1x4x256xf32>
    %718 = vector.shape_cast %717 : vector<1x4x256xf32> to vector<4x256xf32>
    %719 = vector.shape_cast %564 : vector<4x256xf32> to vector<1x4x256xf32>
    tpu.vector_store %arg10[%c0_387, %c12_388, %c0_389], %719 {strides = array<i32>} : memref<1x20x256xf32, #tpu.memory_space<vmem>>, vector<1x4x256xf32>,
    %c0_390 = arith.constant 0 : index
    %c16_391 = arith.constant 16 : index
    %c0_392 = arith.constant 0 : index
    %720 = vector.load %arg10[%c0_390, %c16_391, %c0_392] : memref<1x20x256xf32, #tpu.memory_space<vmem>>, vector<1x4x256xf32>
    %721 = vector.shape_cast %720 : vector<1x4x256xf32> to vector<4x256xf32>
    %722 = vector.shape_cast %710 : vector<4x256xf32> to vector<1x4x256xf32>
    tpu.vector_store %arg10[%c0_390, %c16_391, %c0_392], %722 {strides = array<i32>} : memref<1x20x256xf32, #tpu.memory_space<vmem>>, vector<1x4x256xf32>,
    return
  }
  func.func @transform_0(%arg0: i32) -> (i32, i32, i32) {
    %c0_i32 = arith.constant 0 : i32
    %c0_i32_0 = arith.constant 0 : i32
    %c0_i32_1 = arith.constant 0 : i32
    return %arg0, %c0_i32, %c0_i32_0 : i32, i32, i32
  }
  func.func @transform_1(%arg0: i32) -> (i32, i32) {
    %c0_i32 = arith.constant 0 : i32
    %c0_i32_0 = arith.constant 0 : i32
    %c0_i32_1 = arith.constant 0 : i32
    return %c0_i32, %c0_i32_0 : i32, i32
  }
  func.func @transform_2(%arg0: i32) -> (i32, i32) {
    %c0_i32 = arith.constant 0 : i32
    %c0_i32_0 = arith.constant 0 : i32
    %c0_i32_1 = arith.constant 0 : i32
    return %c0_i32, %c0_i32_0 : i32, i32
  }
  func.func @transform_3(%arg0: i32) -> (i32, i32) {
    %c0_i32 = arith.constant 0 : i32
    %c0_i32_0 = arith.constant 0 : i32
    %c0_i32_1 = arith.constant 0 : i32
    return %c0_i32, %c0_i32_0 : i32, i32
  }
  func.func @transform_4(%arg0: i32) -> (i32, i32) {
    %c0_i32 = arith.constant 0 : i32
    %c0_i32_0 = arith.constant 0 : i32
    %c0_i32_1 = arith.constant 0 : i32
    return %c0_i32, %c0_i32_0 : i32, i32
  }
  func.func @transform_5(%arg0: i32) -> (i32, i32) {
    %c0_i32 = arith.constant 0 : i32
    %c0_i32_0 = arith.constant 0 : i32
    %c0_i32_1 = arith.constant 0 : i32
    return %c0_i32, %c0_i32_0 : i32, i32
  }
  func.func @transform_6(%arg0: i32) -> (i32, i32) {
    %c0_i32 = arith.constant 0 : i32
    %c0_i32_0 = arith.constant 0 : i32
    %c0_i32_1 = arith.constant 0 : i32
    return %c0_i32, %c0_i32_0 : i32, i32
  }
  func.func @transform_7(%arg0: i32) -> (i32, i32) {
    %c0_i32 = arith.constant 0 : i32
    %c0_i32_0 = arith.constant 0 : i32
    %c0_i32_1 = arith.constant 0 : i32
    return %c0_i32, %c0_i32_0 : i32, i32
  }
  func.func @transform_8(%arg0: i32) -> (i32, i32) {
    %c0_i32 = arith.constant 0 : i32
    %c0_i32_0 = arith.constant 0 : i32
    %c0_i32_1 = arith.constant 0 : i32
    return %c0_i32, %c0_i32_0 : i32, i32
  }
  func.func @transform_9(%arg0: i32) -> (i32, i32, i32) {
    %c0_i32 = arith.constant 0 : i32
    %c0_i32_0 = arith.constant 0 : i32
    %c0_i32_1 = arith.constant 0 : i32
    return %arg0, %c0_i32, %c0_i32_0 : i32, i32, i32
  }
}

</mosaic_0001>

<llo_original>
// kernel: tpu_custom_call.1
$region0: #{tpu_custom_call.1}
  #allocation0 [shape = 'u32[]', space=smem, size = 0x4, offset = 0x4, fixed_abs, tag = 'smem constant byte address 0x4 - core index']
  #allocation1 [shape = 'u32[72,128]{1,0:T(1,128)}', space=vmem, size = 0x9000, scoped, tag = 'internal scratch']
  #allocation2 [shape = 'f32[4,290]{1,0:T(4,128)}', space=vmem, size = 0x1800, scoped, tag = 'scratch operand']
  #allocation3 [shape = 'f32[2,324]{1,0:T(2,128)}', space=vmem, size = 0xc00, scoped, tag = 'scratch operand']
  #allocation4 [shape = 'f32[4,290]{1,0:T(4,128)}', space=vmem, size = 0x1800, scoped, tag = 'scratch operand']
  #allocation5 [shape = 'f32[36,256]{1,0:T(8,128)}', space=vmem, size = 0xa000, scoped, tag = 'scratch operand']
  #allocation6 [shape = 'f32[50,256]{1,0:T(8,128)}', space=vmem, size = 0xe000, scoped, tag = 'scratch operand']
  %s0 = inlined_call_operand.vmem [shape: f32[2,4,256], index: 0, kind: input, shape index: {}]
  %s1 = inlined_call_operand.vmem [shape: f32[10,4], index: 1, kind: input, shape index: {}]
  %s2 = inlined_call_operand.vmem [shape: f32[10,1], index: 2, kind: input, shape index: {}]
  %s3 = inlined_call_operand.vmem [shape: f32[8,36], index: 3, kind: input, shape index: {}]
  %s4 = inlined_call_operand.vmem [shape: f32[8,1], index: 4, kind: input, shape index: {}]
  %s5 = inlined_call_operand.vmem [shape: f32[4,50], index: 5, kind: input, shape index: {}]
  %s6 = inlined_call_operand.vmem [shape: f32[4,1], index: 6, kind: input, shape index: {}]
  %s7 = inlined_call_operand.vmem [shape: f32[4,4], index: 7, kind: input, shape index: {}]
  %s8 = inlined_call_operand.vmem [shape: f32[4,1], index: 8, kind: input, shape index: {}]
  %s9 = inlined_call_operand.vmem [shape: f32[2,20,256], index: 9, kind: output, shape index: {}]
  %s10 = sld [smem:[#allocation0]]
  $region69: #{tpu_custom_call.1} parent=0
    _
  %s12 = ssub.s32 1, %s10
  %s13 = scalar_select 0, %s12, %s10
  loop: start=0, step=1, limit=4
  $region2: #{tpu_custom_call.1} parent=0 // loop_pre_header
    _
  $region3: #{tpu_custom_call.1} parent=0 // loop_header
    %s15 = sphi 0, %s19
    %p16 = scmp.ge.s32.totalorder %s15, 4
    %s25 = sphi 0, %s27
    %s28 = sphi 0, %s25
    %s29 = sphi 0, %s28
    %s45 = sphi 0, %s29
    %s49 = sphi 0, %s49
    %s51 = sphi 0, %s49
    %s52 = sphi 0, %s51
    %s66 = sphi 0, %s52
    %s70 = sphi 0, %s70
    %s72 = sphi 0, %s70
    %s73 = sphi 0, %s72
    %s87 = sphi 0, %s73
    %s91 = sphi 0, %s91
    %s93 = sphi 0, %s91
    %s94 = sphi 0, %s93
    %s108 = sphi 0, %s94
    %s112 = sphi 0, %s112
    %s114 = sphi 0, %s112
    %s115 = sphi 0, %s114
    %s129 = sphi 0, %s115
    %s133 = sphi 0, %s133
    %s135 = sphi 0, %s133
    %s136 = sphi 0, %s135
    %s150 = sphi 0, %s136
    %s154 = sphi 0, %s154
    %s156 = sphi 0, %s154
    %s157 = sphi 0, %s156
    %s171 = sphi 0, %s157
    %s175 = sphi 0, %s175
    %s177 = sphi 0, %s175
    %s178 = sphi 0, %s177
    %s192 = sphi 0, %s178
    %s196 = sphi 0, %s196
    %s198 = sphi 0, %s196
    %s199 = sphi 0, %s198
    %s213 = sphi 0, %s199
    %s219 = sphi 0, %s221
    %s222 = sphi 0, %s219
    %s223 = sphi 0, %s222
    %s239 = sphi 0, %s223
  $region4: #{tpu_custom_call.1} parent=0 // loop_header_branch
    %18 = sbr.rel (%p16) target = $region8
  $region5: #{tpu_custom_call.1} parent=0 // loop_body
    %s20 = ssub.s32 %s15, 1
    %s21 = ssub.s32 %s15, 2
    %s22 = sadd.s32 %s15, 1
    %s23 = ssub.s32 %s15, %s22
    %p24 = scmp.eq.s32.totalorder %s23, 0
    %s26 = sadd.s32 %s25, 1
    %s27 = scalar_select %p24, %s25, %s26
    %p30 = pneg %p24
    %p31 = scmp.eq.s32.totalorder %s15, 1
    %p32 = por %p30, %p31
    %p33 = scmp.ne.s32.totalorder %s25, %s28
    %p34 = scmp.eq.s32.totalorder %s15, 0
    %p35 = por %p33, %p34
    %p36 = scmp.ne.s32.totalorder %s25, %s28
    %p37 = scmp.eq.s32.totalorder %s20, 1
    %p38 = por %p36, %p37
    %p39 = scmp.ne.s32.totalorder %s28, %s29
    %p40 = scmp.eq.s32.totalorder %s20, 0
    %p41 = por %p39, %p40
    %p42 = scmp.ne.s32.totalorder %s28, %s29
    %p43 = scmp.eq.s32.totalorder %s21, 1
    %p44 = por %p42, %p43
    %p46 = scmp.ne.s32.totalorder %s29, %s45
    %p47 = scmp.eq.s32.totalorder %s21, 0
    %p48 = por %p46, %p47
    %s50 = sadd.s32 %s49, 1
    %p53 = scmp.eq.s32.totalorder %s15, 1
    %p54 = scmp.ne.s32.totalorder %s49, %s51
    %p55 = scmp.eq.s32.totalorder %s15, 0
    %p56 = por %p54, %p55
    %p57 = scmp.ne.s32.totalorder %s49, %s51
    %p58 = scmp.eq.s32.totalorder %s20, 1
    %p59 = por %p57, %p58
    %p60 = scmp.ne.s32.totalorder %s51, %s52
    %p61 = scmp.eq.s32.totalorder %s20, 0
    %p62 = por %p60, %p61
    %p63 = scmp.ne.s32.totalorder %s51, %s52
    %p64 = scmp.eq.s32.totalorder %s21, 1
    %p65 = por %p63, %p64
    %p67 = scmp.ne.s32.totalorder %s52, %s66
    %p68 = scmp.eq.s32.totalorder %s21, 0
    %p69 = por %p67, %p68
    %s71 = sadd.s32 %s70, 1
    %p74 = scmp.eq.s32.totalorder %s15, 1
    %p75 = scmp.ne.s32.totalorder %s70, %s72
    %p76 = scmp.eq.s32.totalorder %s15, 0
    %p77 = por %p75, %p76
    %p78 = scmp.ne.s32.totalorder %s70, %s72
    %p79 = scmp.eq.s32.totalorder %s20, 1
    %p80 = por %p78, %p79
    %p81 = scmp.ne.s32.totalorder %s72, %s73
    %p82 = scmp.eq.s32.totalorder %s20, 0
    %p83 = por %p81, %p82
    %p84 = scmp.ne.s32.totalorder %s72, %s73
    %p85 = scmp.eq.s32.totalorder %s21, 1
    %p86 = por %p84, %p85
    %p88 = scmp.ne.s32.totalorder %s73, %s87
    %p89 = scmp.eq.s32.totalorder %s21, 0
    %p90 = por %p88, %p89
    %s92 = sadd.s32 %s91, 1
    %p95 = scmp.eq.s32.totalorder %s15, 1
    %p96 = scmp.ne.s32.totalorder %s91, %s93
    %p97 = scmp.eq.s32.totalorder %s15, 0
    %p98 = por %p96, %p97
    %p99 = scmp.ne.s32.totalorder %s91, %s93
    %p100 = scmp.eq.s32.totalorder %s20, 1
    %p101 = por %p99, %p100
    %p102 = scmp.ne.s32.totalorder %s93, %s94
    %p103 = scmp.eq.s32.totalorder %s20, 0
    %p104 = por %p102, %p103
    %p105 = scmp.ne.s32.totalorder %s93, %s94
    %p106 = scmp.eq.s32.totalorder %s21, 1
    %p107 = por %p105, %p106
    %p109 = scmp.ne.s32.totalorder %s94, %s108
    %p110 = scmp.eq.s32.totalorder %s21, 0
    %p111 = por %p109, %p110
    %s113 = sadd.s32 %s112, 1
    %p116 = scmp.eq.s32.totalorder %s15, 1
    %p117 = scmp.ne.s32.totalorder %s112, %s114
    %p118 = scmp.eq.s32.totalorder %s15, 0
    %p119 = por %p117, %p118
    %p120 = scmp.ne.s32.totalorder %s112, %s114
    %p121 = scmp.eq.s32.totalorder %s20, 1
    %p122 = por %p120, %p121
    %p123 = scmp.ne.s32.totalorder %s114, %s115
    %p124 = scmp.eq.s32.totalorder %s20, 0
    %p125 = por %p123, %p124
    %p126 = scmp.ne.s32.totalorder %s114, %s115
    %p127 = scmp.eq.s32.totalorder %s21, 1
    %p128 = por %p126, %p127
    %p130 = scmp.ne.s32.totalorder %s115, %s129
    %p131 = scmp.eq.s32.totalorder %s21, 0
    %p132 = por %p130, %p131
    %s134 = sadd.s32 %s133, 1
    %p137 = scmp.eq.s32.totalorder %s15, 1
    %p138 = scmp.ne.s32.totalorder %s133, %s135
    %p139 = scmp.eq.s32.totalorder %s15, 0
    %p140 = por %p138, %p139
    %p141 = scmp.ne.s32.totalorder %s133, %s135
    %p142 = scmp.eq.s32.totalorder %s20, 1
    %p143 = por %p141, %p142
    %p144 = scmp.ne.s32.totalorder %s135, %s136
    %p145 = scmp.eq.s32.totalorder %s20, 0
    %p146 = por %p144, %p145
    %p147 = scmp.ne.s32.totalorder %s135, %s136
    %p148 = scmp.eq.s32.totalorder %s21, 1
    %p149 = por %p147, %p148
    %p151 = scmp.ne.s32.totalorder %s136, %s150
    %p152 = scmp.eq.s32.totalorder %s21, 0
    %p153 = por %p151, %p152
    %s155 = sadd.s32 %s154, 1
    %p158 = scmp.eq.s32.totalorder %s15, 1
    %p159 = scmp.ne.s32.totalorder %s154, %s156
    %p160 = scmp.eq.s32.totalorder %s15, 0
    %p161 = por %p159, %p160
    %p162 = scmp.ne.s32.totalorder %s154, %s156
    %p163 = scmp.eq.s32.totalorder %s20, 1
    %p164 = por %p162, %p163
    %p165 = scmp.ne.s32.totalorder %s156, %s157
    %p166 = scmp.eq.s32.totalorder %s20, 0
    %p167 = por %p165, %p166
    %p168 = scmp.ne.s32.totalorder %s156, %s157
    %p169 = scmp.eq.s32.totalorder %s21, 1
    %p170 = por %p168, %p169
    %p172 = scmp.ne.s32.totalorder %s157, %s171
    %p173 = scmp.eq.s32.totalorder %s21, 0
    %p174 = por %p172, %p173
    %s176 = sadd.s32 %s175, 1
    %p179 = scmp.eq.s32.totalorder %s15, 1
    %p180 = scmp.ne.s32.totalorder %s175, %s177
    %p181 = scmp.eq.s32.totalorder %s15, 0
    %p182 = por %p180, %p181
    %p183 = scmp.ne.s32.totalorder %s175, %s177
    %p184 = scmp.eq.s32.totalorder %s20, 1
    %p185 = por %p183, %p184
    %p186 = scmp.ne.s32.totalorder %s177, %s178
    %p187 = scmp.eq.s32.totalorder %s20, 0
    %p188 = por %p186, %p187
    %p189 = scmp.ne.s32.totalorder %s177, %s178
    %p190 = scmp.eq.s32.totalorder %s21, 1
    %p191 = por %p189, %p190
    %p193 = scmp.ne.s32.totalorder %s178, %s192
    %p194 = scmp.eq.s32.totalorder %s21, 0
    %p195 = por %p193, %p194
    %s197 = sadd.s32 %s196, 1
    %p200 = scmp.eq.s32.totalorder %s15, 1
    %p201 = scmp.ne.s32.totalorder %s196, %s198
    %p202 = scmp.eq.s32.totalorder %s15, 0
    %p203 = por %p201, %p202
    %p204 = scmp.ne.s32.totalorder %s196, %s198
    %p205 = scmp.eq.s32.totalorder %s20, 1
    %p206 = por %p204, %p205
    %p207 = scmp.ne.s32.totalorder %s198, %s199
    %p208 = scmp.eq.s32.totalorder %s20, 0
    %p209 = por %p207, %p208
    %p210 = scmp.ne.s32.totalorder %s198, %s199
    %p211 = scmp.eq.s32.totalorder %s21, 1
    %p212 = por %p210, %p211
    %p214 = scmp.ne.s32.totalorder %s199, %s213
    %p215 = scmp.eq.s32.totalorder %s21, 0
    %p216 = por %p214, %p215
    %s217 = ssub.s32 %s15, %s22
    %p218 = scmp.eq.s32.totalorder %s217, 0
    %s220 = sadd.s32 %s219, 1
    %s221 = scalar_select %p218, %s219, %s220
    %p224 = pneg %p218
    %p225 = scmp.eq.s32.totalorder %s15, 1
    %p226 = por %p224, %p225
    %p227 = scmp.ne.s32.totalorder %s219, %s222
    %p228 = scmp.eq.s32.totalorder %s15, 0
    %p229 = por %p227, %p228
    %p230 = scmp.ne.s32.totalorder %s219, %s222
    %p231 = scmp.eq.s32.totalorder %s20, 1
    %p232 = por %p230, %p231
    %p233 = scmp.ne.s32.totalorder %s222, %s223
    %p234 = scmp.eq.s32.totalorder %s20, 0
    %p235 = por %p233, %p234
    %p236 = scmp.ne.s32.totalorder %s222, %s223
    %p237 = scmp.eq.s32.totalorder %s21, 1
    %p238 = por %p236, %p237
    %p240 = scmp.ne.s32.totalorder %s223, %s239
    %p241 = scmp.eq.s32.totalorder %s21, 0
    %p242 = por %p240, %p241
    %p243 = scmp.le.s32.totalorder 1, %s15
    %p244 = scmp.lt.s32.totalorder %s15, 3
    %p245 = pnand %p243, %p244
    %p246 = pneg %p245
    // Predicated region
    $region9: #{tpu_custom_call.1} parent=5 // pred_check
      _
    $region10: #{tpu_custom_call.1} parent=5 // pred_check_branch
      %248 = sbr.rel (%p245) target = $region12
    $region11: #{tpu_custom_call.1} parent=5 // pred_region
      %s249 = ssub.s32 %s15, 1
      // Predicated region
      $region13: #{tpu_custom_call.1} parent=11 // pred_check
        %p250 = pneg %p62
      $region14: #{tpu_custom_call.1} parent=11 // pred_check_branch
        %252 = sbr.rel (%p250) target = $region16
      $region15: #{tpu_custom_call.1} parent=11 // pred_region
        _
      $region16: #{tpu_custom_call.1} parent=11 // pred_fallthru
        _
      // Predicated region
      $region17: #{tpu_custom_call.1} parent=11 // pred_check
        %p253 = pneg %p83
      $region18: #{tpu_custom_call.1} parent=11 // pred_check_branch
        %255 = sbr.rel (%p253) target = $region20
      $region19: #{tpu_custom_call.1} parent=11 // pred_region
        _
      $region20: #{tpu_custom_call.1} parent=11 // pred_fallthru
        _
      // Predicated region
      $region21: #{tpu_custom_call.1} parent=11 // pred_check
        %p256 = pneg %p104
      $region22: #{tpu_custom_call.1} parent=11 // pred_check_branch
        %258 = sbr.rel (%p256) target = $region24
      $region23: #{tpu_custom_call.1} parent=11 // pred_region
        _
      $region24: #{tpu_custom_call.1} parent=11 // pred_fallthru
        _
      // Predicated region
      $region25: #{tpu_custom_call.1} parent=11 // pred_check
        %p259 = pneg %p125
      $region26: #{tpu_custom_call.1} parent=11 // pred_check_branch
        %261 = sbr.rel (%p259) target = $region28
      $region27: #{tpu_custom_call.1} parent=11 // pred_region
        _
      $region28: #{tpu_custom_call.1} parent=11 // pred_fallthru
        _
      // Predicated region
      $region29: #{tpu_custom_call.1} parent=11 // pred_check
        %p262 = pneg %p146
      $region30: #{tpu_custom_call.1} parent=11 // pred_check_branch
        %264 = sbr.rel (%p262) target = $region32
      $region31: #{tpu_custom_call.1} parent=11 // pred_region
        _
      $region32: #{tpu_custom_call.1} parent=11 // pred_fallthru
        _
      // Predicated region
      $region33: #{tpu_custom_call.1} parent=11 // pred_check
        %p265 = pneg %p167
      $region34: #{tpu_custom_call.1} parent=11 // pred_check_branch
        %267 = sbr.rel (%p265) target = $region36
      $region35: #{tpu_custom_call.1} parent=11 // pred_region
        _
      $region36: #{tpu_custom_call.1} parent=11 // pred_fallthru
        _
      // Predicated region
      $region37: #{tpu_custom_call.1} parent=11 // pred_check
        %p268 = pneg %p188
      $region38: #{tpu_custom_call.1} parent=11 // pred_check_branch
        %270 = sbr.rel (%p268) target = $region40
      $region39: #{tpu_custom_call.1} parent=11 // pred_region
        _
      $region40: #{tpu_custom_call.1} parent=11 // pred_fallthru
        _
      // Predicated region
      $region41: #{tpu_custom_call.1} parent=11 // pred_check
        %p271 = pneg %p209
      $region42: #{tpu_custom_call.1} parent=11 // pred_check_branch
        %273 = sbr.rel (%p271) target = $region44
      $region43: #{tpu_custom_call.1} parent=11 // pred_region
        _
      $region44: #{tpu_custom_call.1} parent=11 // pred_fallthru
        _
    $region12: #{tpu_custom_call.1} parent=5 // pred_fallthru
      _
    %p274 = scmp.lt.s32.totalorder %s15, 2
    // Predicated region
    $region45: #{tpu_custom_call.1} parent=5 // pred_check
      %p275 = pneg %p274
    $region46: #{tpu_custom_call.1} parent=5 // pred_check_branch
      %277 = sbr.rel (%p275) target = $region48
    $region47: #{tpu_custom_call.1} parent=5 // pred_region
      // Predicated region
      $region49: #{tpu_custom_call.1} parent=47 // pred_check
        %p278 = pneg %p35
      $region50: #{tpu_custom_call.1} parent=47 // pred_check_branch
        %280 = sbr.rel (%p278) target = $region52
      $region51: #{tpu_custom_call.1} parent=47 // pred_region
        %p281 = scmp.lt.s32.totalorder %s15, 1
        %s282 = scalar_select %p281, %s15, 1
        %s283 = smul.addr %s282, 2
        %s284 = smul.addr %s283, 4
        %s285 = scalar_lea.vmem %s0, %s284
      $region52: #{tpu_custom_call.1} parent=47 // pred_fallthru
        _
    $region48: #{tpu_custom_call.1} parent=5 // pred_fallthru
      _
    %p286 = scmp.le.s32.totalorder 1, %s15
    %p287 = scmp.lt.s32.totalorder %s15, 3
    %p288 = pnand %p286, %p287
    %p289 = pneg %p288
    // Predicated region
    $region53: #{tpu_custom_call.1} parent=5 // pred_check
      _
    $region54: #{tpu_custom_call.1} parent=5 // pred_check_branch
      %291 = sbr.rel (%p288) target = $region56
    $region55: #{tpu_custom_call.1} parent=5 // pred_region
      %s292 = ssub.s32 %s15, 1
      %p293 = scmp.lt.s32.totalorder %s20, 1
      %s294 = scalar_select %p293, %s20, 1
      %s295 = smul.addr %s294, 2
      %s296 = smul.addr %s295, 4
      %s297 = scalar_lea.vmem %s0, %s296
      %p298 = pneg %p41
      %p299 = pneg %p38
      %p300 = pneg %p62
      %p301 = pneg %p59
      %p302 = pneg %p83
      %p303 = pneg %p80
      %p304 = pneg %p104
      %p305 = pneg %p101
      %p306 = pneg %p125
      %p307 = pneg %p122
      %p308 = pneg %p146
      %p309 = pneg %p143
      %p310 = pneg %p167
      %p311 = pneg %p164
      %p312 = pneg %p188
      %p313 = pneg %p185
      %p314 = pneg %p209
      %p315 = pneg %p206
      %p316 = pneg %p235
      %p317 = pneg %p232
      %p318 = scmp.lt.s32.totalorder %s20, 1
      %s319 = scalar_select %p318, %s20, 1
      %s320 = smul.addr %s319, 6
      %s321 = smul.addr %s320, 8
      %s322 = scalar_lea.vmem %s9, %s321
      %p323 = scmp.lt.s32.totalorder %s20, 1
      %s324 = scalar_select %p323, %s20, 1
      %s325 = smul.addr %s324, 2
      %s326 = smul.addr %s325, 4
      %s327 = scalar_lea.vmem %s0, %s326
      %p328 = scmp.lt.s32.totalorder %s20, 1
      %s329 = scalar_select %p328, %s20, 1
      %s330 = smul.addr %s329, 6
      %s331 = smul.addr %s330, 8
      %s332 = scalar_lea.vmem %s9, %s331
      %v333 = vld [vmem:[%s327] sm:$0xff]
      %v334 = vlaneseq
      %v335 = vand.u32 %v334, 127
      %v336 = vadd.s32 %v335, 128
      %vm337 = vcmp.lt.s32.totalorder %v335, 0
      %v338 = vsub.s32 0, %v335
      %v339 = vsel %vm337, %v338, %v335
      %v340 = vshrl.u32 %v339, 4
      %v341 = vand.u32 %v339, 15
      %v342 = vsub.s32 0, %v341
      %v343 = vsel %vm337, %v342, %v341
      %vm344 = vcmp.lt.s32.totalorder %v336, 0
      %v345 = vsub.s32 0, %v336
      %v346 = vsel %vm344, %v345, %v336
      %v347 = vshrl.u32 %v346, 4
      %v348 = vand.u32 %v346, 15
      %v349 = vsub.s32 0, %v348
      %v350 = vsel %vm344, %v349, %v348
      %vm351 = vcmp.ne.s32.totalorder %v343, 0
      %vm352 = vcmp.ne.s32.totalorder %v350, 0
      %vm353 = vcmp.lt.s32.totalorder %v343, 0
      %vm354 = vcmp.lt.s32.totalorder %v350, 0
      %vm355 = vmand %vm353, %vm351
      %vm356 = vmand %vm354, %vm352
      %v357 = vadd.s32 %v343, 16
      %v358 = vadd.s32 %v350, 16
      %v359 = vsel %vm355, %v357, %v343
      %v360 = vsel %vm356, %v358, %v350
      %v361 = vld [vmem:[%s1] sm:$0xff]
      %v362 = vld [vmem:[%s1 + $0x8] sm:$0x3]
      %v363 = vld [vmem:[%s2] sm:$0xff]
      %v364 = vld [vmem:[%s2 + $0x8] sm:$0x3]
      %366 = vset.pattern.permute.xlu0 0
      %367 = vperm.xlu0 %366, %v363
      %v368 = vpop.permute.xlu0 %367
      %371 = vset.pattern.permute.xlu0 0
      %372 = vperm.xlu0 %371, %v364
      %v373 = vpop.permute.xlu0 %372
      %376 = vst [vmem:[#allocation1] ss:$2 sm:$0xff] %v333
      %v377 = vld.sshfl [vmem:[#allocation1] sm:$0xff pattern:$0x75316420]
      %v378 = vld.sshfl [vmem:[#allocation1 + $0x8] sm:$0xff pattern:$0x75316420]
      %vm379 = vcmask 31744
      %v381 = vsel %vm379, %v361, 0
      %v384 = vsel %vm379, %v362, 0
      %vm386 = vcmask 1043456
      %v387 = vsel %vm386, %v377, 0
      %v389 = vsel %vm386, %v378, 0
      %391 = vmatpush.msra.mxu0 0.0
      %392 = vmatpush.msra.mxu0 0.0
      %393 = vmatpush.msra.mxu0 0.0
      %394 = vmatpush.msra.mxu0 0.0
      %395 = vmatpush.msra.mxu0 0.0
      %396 = vmatpush.msra.mxu0 0.0
      %397 = vmatpush.msra.mxu0 0.0
      %398 = vmatpush.msra.mxu0 0.0
      %399 = vmatpush.msra.mxu0 0.0
      %400 = vmatpush.msra.mxu0 0.0
      %401 = vmatpush.msra.mxu0 0.0
      %402 = vmatpush.msra.mxu0 0.0
      %403 = vmatpush.msra.mxu0 0.0
      %404 = vmatpush.msra.mxu0 0.0
      %405 = vmatpush.msra.mxu0 0.0
      %406 = vmatpush.msra.mxu0 %v387
      %407 = vmatmul.f32.gmra.mxu0 %v381
      %v408 = vpop.f32.mrf.mxu0
      %v409 = vadd.f32 %v368, %v408
      %410 = vmatmul.f32.gmra.mxu0 %v384
      %v411 = vpop.f32.mrf.mxu0
      %v412 = vadd.f32 %v373, %v411
      %413 = vdwg.mxu0
      %414 = vmatpush.msra.mxu0 0.0
      %415 = vmatpush.msra.mxu0 0.0
      %416 = vmatpush.msra.mxu0 0.0
      %417 = vmatpush.msra.mxu0 0.0
      %418 = vmatpush.msra.mxu0 0.0
      %419 = vmatpush.msra.mxu0 0.0
      %420 = vmatpush.msra.mxu0 0.0
      %421 = vmatpush.msra.mxu0 0.0
      %422 = vmatpush.msra.mxu0 0.0
      %423 = vmatpush.msra.mxu0 0.0
      %424 = vmatpush.msra.mxu0 0.0
      %425 = vmatpush.msra.mxu0 0.0
      %426 = vmatpush.msra.mxu0 0.0
      %427 = vmatpush.msra.mxu0 0.0
      %428 = vmatpush.msra.mxu0 0.0
      %429 = vmatpush.msra.mxu0 %v389
      %430 = vmatmul.f32.gmra.mxu0 %v381
      %v431 = vpop.f32.mrf.mxu0
      %v432 = vadd.f32 %v368, %v431
      %433 = vmatmul.f32.gmra.mxu0 %v384
      %v434 = vpop.f32.mrf.mxu0
      %v435 = vadd.f32 %v373, %v434
      %436 = vdwg.mxu0
      %v437 = vmax.f32 %v409, 0.0
      %v438 = vmax.f32 %v432, 0.0
      %v439 = vmax.f32 %v412, 0.0
      %v440 = vmax.f32 %v435, 0.0
      %vm441 = vcmask 134144
      %442 = vst.msk [vmem:[#allocation2] sm:$0xf] %vm441, 0.0
      %vm443 = vcmask 273544
      %444 = vst.msk [vmem:[#allocation2 + $0x8] sm:$0xf] %vm443, 0.0
      %447 = vst.sshfl [vmem:[#allocation1] sm:$0xff pattern:$0x75316420] %v437
      %448 = vst.sshfl [vmem:[#allocation1 + $0x8] sm:$0xff pattern:$0x75316420] %v438
      %s449 = scalar_lea.vmem [#allocation1], 1
      %v450 = vld [vmem:[%s449] ss:$2 sm:$0xff]
      %451 = vrot.lane.b32.xlu0 %v450, 17
      %v452 = vpop.permute.xlu0 %451
      %v453 = vrot.slane %v452, 4
      %vm454 = vcmask 138240
      %v455 = vsel %vm454, %v453, %v452
      %vm458 = vcmask 1043592
      %vm459 = vcmask 1047556
      %vm460 = vmor %vm459, %vm458
      %461 = vst.msk [vmem:[#allocation2] sm:$0xff] %vm460, %v455
      %462 = vst.msk [vmem:[#allocation2 + $0x8] sm:$0xf] %vm441, %v453
      %v463 = vld [vmem:[#allocation2] sm:$0xff]
      %v464 = vadd.s32 %v359, 4294967295
      %v465 = vadd.s32 %v360, 4294967295
      %vm466 = vcmp.ge.s32.totalorder %v464, 0
      %vm467 = vcmp.ge.s32.totalorder %v465, 0
      %vm468 = vcmp.lt.s32.totalorder %v464, 16
      %vm469 = vcmp.lt.s32.totalorder %v465, 16
      %vm470 = vmand %vm466, %vm468
      %vm471 = vmand %vm467, %vm469
      %v472 = vsel %vm470, 1, 0
      %v473 = vsel %vm471, 1, 0
      %vm474 = vcmp.eq.s32.totalorder %v472, 1
      %vm475 = vcmp.eq.s32.totalorder %v473, 1
      %477 = vst [vmem:[#allocation1] ss:$2 sm:$0xff] %v463
      %v478 = vld.sshfl [vmem:[#allocation1] sm:$0xff pattern:$0x75316420]
      %v479 = vld.sshfl [vmem:[#allocation1 + $0x8] sm:$0xff pattern:$0x75316420]
      %v482 = vsel %vm474, %v478, 0.0
      %v483 = vsel %vm475, %v479, 0.0
      %484 = vst [vmem:[#allocation5] sm:$0xf] %v482
      %485 = vst [vmem:[#allocation5 + $0x8] sm:$0xf] %v483
      %v486 = vld [vmem:[#allocation2] sm:$0xff]
      %v487 = vld [vmem:[#allocation2 + $0x8] sm:$0xf]
      %vm488 = vcmp.ge.s32.totalorder %v359, 0
      %vm489 = vcmp.ge.s32.totalorder %v360, 0
      %vm490 = vcmp.lt.s32.totalorder %v359, 16
      %vm491 = vcmp.lt.s32.totalorder %v360, 16
      %vm492 = vmand %vm488, %vm490
      %vm493 = vmand %vm489, %vm491
      %v494 = vsel %vm492, 1, 0
      %v495 = vsel %vm493, 1, 0
      %vm496 = vcmp.eq.s32.totalorder %v494, 1
      %vm497 = vcmp.eq.s32.totalorder %v495, 1
      %500 = vst [vmem:[#allocation1] ss:$2 sm:$0xff] %v486
      %s501 = scalar_lea.vmem [#allocation1], 16
      %502 = vst [vmem:[%s501] ss:$2 sm:$0xff] %v487
      %v503 = vld.sshfl [vmem:[#allocation1] sm:$0xff pattern:$0x75316420]
      %v504 = vld.sshfl [vmem:[#allocation1 + $0x8] sm:$0xff pattern:$0x75316420]
      %v505 = vld.sshfl [vmem:[#allocation1 + $0x10] sm:$0xff pattern:$0x75316420]
      %506 = vrot.lane.b32.xlu0 %v503, 127
      %v507 = vpop.permute.xlu0 %506
      %508 = vrot.lane.b32.xlu0 %v504, 127
      %v509 = vpop.permute.xlu0 %508
      %510 = vrot.lane.b32.xlu0 %v505, 127
      %v511 = vpop.permute.xlu0 %510
      %vm512 = vcmask 1039360
      %v513 = vsel %vm512, %v507, %v509
      %v514 = vsel %vm512, %v509, %v511
      %v517 = vsel %vm496, %v513, 0.0
      %v518 = vsel %vm497, %v514, 0.0
      %v521 = vrot.slane %v517, 4
      %v522 = vrot.slane %v518, 4
      %525 = vst [vmem:[#allocation5] sm:$0xf0] %v521
      %526 = vst [vmem:[#allocation5 + $0x8] sm:$0xf0] %v522
      %v527 = vld [vmem:[#allocation2] sm:$0xff]
      %v528 = vld [vmem:[#allocation2 + $0x8] sm:$0xf]
      %v529 = vadd.s32 %v359, 1
      %v530 = vadd.s32 %v360, 1
      %vm531 = vcmp.ge.s32.totalorder %v529, 0
      %vm532 = vcmp.ge.s32.totalorder %v530, 0
      %vm533 = vcmp.lt.s32.totalorder %v529, 16
      %vm534 = vcmp.lt.s32.totalorder %v530, 16
      %vm535 = vmand %vm531, %vm533
      %vm536 = vmand %vm532, %vm534
      %v537 = vsel %vm535, 1, 0
      %v538 = vsel %vm536, 1, 0
      %vm539 = vcmp.eq.s32.totalorder %v537, 1
      %vm540 = vcmp.eq.s32.totalorder %v538, 1
      %543 = vst [vmem:[#allocation1] ss:$2 sm:$0xff] %v527
      %s544 = scalar_lea.vmem [#allocation1], 16
      %545 = vst [vmem:[%s544] ss:$2 sm:$0xff] %v528
      %v546 = vld.sshfl [vmem:[#allocation1] sm:$0xff pattern:$0x75316420]
      %v547 = vld.sshfl [vmem:[#allocation1 + $0x8] sm:$0xff pattern:$0x75316420]
      %v548 = vld.sshfl [vmem:[#allocation1 + $0x10] sm:$0xff pattern:$0x75316420]
      %549 = vrot.lane.b32.xlu0 %v546, 126
      %v550 = vpop.permute.xlu0 %549
      %551 = vrot.lane.b32.xlu0 %v547, 126
      %v552 = vpop.permute.xlu0 %551
      %553 = vrot.lane.b32.xlu0 %v548, 126
      %v554 = vpop.permute.xlu0 %553
      %vm555 = vcmask 1031168
      %v556 = vsel %vm555, %v550, %v552
      %v557 = vsel %vm555, %v552, %v554
      %v560 = vsel %vm539, %v556, 0.0
      %v561 = vsel %vm540, %v557, 0.0
      %562 = vst [vmem:[#allocation5 + $0x10] sm:$0xf] %v560
      %563 = vst [vmem:[#allocation5 + $0x18] sm:$0xf] %v561
      %v564 = vld [vmem:[#allocation2] sm:$0xff]
      %v565 = vld [vmem:[#allocation2 + $0x8] sm:$0xf]
      %568 = vst [vmem:[#allocation1] ss:$2 sm:$0xff] %v564
      %s569 = scalar_lea.vmem [#allocation1], 16
      %570 = vst [vmem:[%s569] ss:$2 sm:$0xff] %v565
      %v571 = vld.sshfl [vmem:[#allocation1] sm:$0xff pattern:$0x75316420]
      %v572 = vld.sshfl [vmem:[#allocation1 + $0x8] sm:$0xff pattern:$0x75316420]
      %v573 = vld.sshfl [vmem:[#allocation1 + $0x10] sm:$0xff pattern:$0x75316420]
      %574 = vrot.lane.b32.xlu0 %v571, 112
      %v575 = vpop.permute.xlu0 %574
      %576 = vrot.lane.b32.xlu0 %v572, 112
      %v577 = vpop.permute.xlu0 %576
      %578 = vrot.lane.b32.xlu0 %v573, 112
      %v579 = vpop.permute.xlu0 %578
      %vm580 = vcmask 916480
      %v581 = vsel %vm580, %v575, %v577
      %v582 = vsel %vm580, %v577, %v579
      %v585 = vsel %vm474, %v581, 0.0
      %v586 = vsel %vm475, %v582, 0.0
      %v589 = vrot.slane %v585, 4
      %v590 = vrot.slane %v586, 4
      %593 = vst [vmem:[#allocation5 + $0x10] sm:$0xf0] %v589
      %594 = vst [vmem:[#allocation5 + $0x18] sm:$0xf0] %v590
      %v595 = vld [vmem:[#allocation2] sm:$0xff]
      %v596 = vld [vmem:[#allocation2 + $0x8] sm:$0xf]
      %599 = vst [vmem:[#allocation1] ss:$2 sm:$0xff] %v595
      %s600 = scalar_lea.vmem [#allocation1], 16
      %601 = vst [vmem:[%s600] ss:$2 sm:$0xff] %v596
      %v602 = vld.sshfl [vmem:[#allocation1] sm:$0xff pattern:$0x75316420]
      %v603 = vld.sshfl [vmem:[#allocation1 + $0x8] sm:$0xff pattern:$0x75316420]
      %v604 = vld.sshfl [vmem:[#allocation1 + $0x10] sm:$0xff pattern:$0x75316420]
      %605 = vrot.lane.b32.xlu0 %v602, 111
      %v606 = vpop.permute.xlu0 %605
      %607 = vrot.lane.b32.xlu0 %v603, 111
      %v608 = vpop.permute.xlu0 %607
      %609 = vrot.lane.b32.xlu0 %v604, 111
      %v610 = vpop.permute.xlu0 %609
      %vm611 = vcmask 908288
      %v612 = vsel %vm611, %v606, %v608
      %v613 = vsel %vm611, %v608, %v610
      %v616 = vsel %vm496, %v612, 0.0
      %v617 = vsel %vm497, %v613, 0.0
      %618 = vst [vmem:[#allocation5 + $0x20] sm:$0xf] %v616
      %619 = vst [vmem:[#allocation5 + $0x28] sm:$0xf] %v617
      %v620 = vld [vmem:[#allocation2] sm:$0xff]
      %v621 = vld [vmem:[#allocation2 + $0x8] sm:$0xf]
      %624 = vst [vmem:[#allocation1] ss:$2 sm:$0xff] %v620
      %s625 = scalar_lea.vmem [#allocation1], 16
      %626 = vst [vmem:[%s625] ss:$2 sm:$0xff] %v621
      %v627 = vld.sshfl [vmem:[#allocation1] sm:$0xff pattern:$0x75316420]
      %v628 = vld.sshfl [vmem:[#allocation1 + $0x8] sm:$0xff pattern:$0x75316420]
      %v629 = vld.sshfl [vmem:[#allocation1 + $0x10] sm:$0xff pattern:$0x75316420]
      %630 = vrot.lane.b32.xlu0 %v627, 110
      %v631 = vpop.permute.xlu0 %630
      %632 = vrot.lane.b32.xlu0 %v628, 110
      %v633 = vpop.permute.xlu0 %632
      %634 = vrot.lane.b32.xlu0 %v629, 110
      %v635 = vpop.permute.xlu0 %634
      %vm636 = vcmask 900096
      %v637 = vsel %vm636, %v631, %v633
      %v638 = vsel %vm636, %v633, %v635
      %v641 = vsel %vm539, %v637, 0.0
      %v642 = vsel %vm540, %v638, 0.0
      %v645 = vrot.slane %v641, 4
      %v646 = vrot.slane %v642, 4
      %649 = vst [vmem:[#allocation5 + $0x20] sm:$0xf0] %v645
      %650 = vst [vmem:[#allocation5 + $0x28] sm:$0xf0] %v646
      %v651 = vld [vmem:[#allocation2] sm:$0xff]
      %v652 = vld [vmem:[#allocation2 + $0x8] sm:$0xf]
      %655 = vst [vmem:[#allocation1] ss:$2 sm:$0xff] %v651
      %s656 = scalar_lea.vmem [#allocation1], 16
      %657 = vst [vmem:[%s656] ss:$2 sm:$0xff] %v652
      %v658 = vld.sshfl [vmem:[#allocation1] sm:$0xff pattern:$0x75316420]
      %v659 = vld.sshfl [vmem:[#allocation1 + $0x8] sm:$0xff pattern:$0x75316420]
      %v660 = vld.sshfl [vmem:[#allocation1 + $0x10] sm:$0xff pattern:$0x75316420]
      %661 = vrot.lane.b32.xlu0 %v658, 96
      %v662 = vpop.permute.xlu0 %661
      %663 = vrot.lane.b32.xlu0 %v659, 96
      %v664 = vpop.permute.xlu0 %663
      %665 = vrot.lane.b32.xlu0 %v660, 96
      %v666 = vpop.permute.xlu0 %665
      %vm667 = vcmask 785408
      %v668 = vsel %vm667, %v662, %v664
      %v669 = vsel %vm667, %v664, %v666
      %v672 = vsel %vm474, %v668, 0.0
      %v673 = vsel %vm475, %v669, 0.0
      %674 = vst [vmem:[#allocation5 + $0x30] sm:$0xf] %v672
      %675 = vst [vmem:[#allocation5 + $0x38] sm:$0xf] %v673
      %v676 = vld [vmem:[#allocation2] sm:$0xff]
      %v677 = vld [vmem:[#allocation2 + $0x8] sm:$0xf]
      %680 = vst [vmem:[#allocation1] ss:$2 sm:$0xff] %v676
      %s681 = scalar_lea.vmem [#allocation1], 16
      %682 = vst [vmem:[%s681] ss:$2 sm:$0xff] %v677
      %v683 = vld.sshfl [vmem:[#allocation1] sm:$0xff pattern:$0x75316420]
      %v684 = vld.sshfl [vmem:[#allocation1 + $0x8] sm:$0xff pattern:$0x75316420]
      %v685 = vld.sshfl [vmem:[#allocation1 + $0x10] sm:$0xff pattern:$0x75316420]
      %686 = vrot.lane.b32.xlu0 %v683, 95
      %v687 = vpop.permute.xlu0 %686
      %688 = vrot.lane.b32.xlu0 %v684, 95
      %v689 = vpop.permute.xlu0 %688
      %690 = vrot.lane.b32.xlu0 %v685, 95
      %v691 = vpop.permute.xlu0 %690
      %vm692 = vcmask 777216
      %v693 = vsel %vm692, %v687, %v689
      %v694 = vsel %vm692, %v689, %v691
      %v697 = vsel %vm496, %v693, 0.0
      %v698 = vsel %vm497, %v694, 0.0
      %v701 = vrot.slane %v697, 4
      %v702 = vrot.slane %v698, 4
      %705 = vst [vmem:[#allocation5 + $0x30] sm:$0xf0] %v701
      %706 = vst [vmem:[#allocation5 + $0x38] sm:$0xf0] %v702
      %v707 = vld [vmem:[#allocation2] sm:$0xff]
      %v708 = vld [vmem:[#allocation2 + $0x8] sm:$0xf]
      %711 = vst [vmem:[#allocation1] ss:$2 sm:$0xff] %v707
      %s712 = scalar_lea.vmem [#allocation1], 16
      %713 = vst [vmem:[%s712] ss:$2 sm:$0xff] %v708
      %v714 = vld.sshfl [vmem:[#allocation1] sm:$0xff pattern:$0x75316420]
      %v715 = vld.sshfl [vmem:[#allocation1 + $0x8] sm:$0xff pattern:$0x75316420]
      %v716 = vld.sshfl [vmem:[#allocation1 + $0x10] sm:$0xff pattern:$0x75316420]
      %717 = vrot.lane.b32.xlu0 %v714, 94
      %v718 = vpop.permute.xlu0 %717
      %719 = vrot.lane.b32.xlu0 %v715, 94
      %v720 = vpop.permute.xlu0 %719
      %721 = vrot.lane.b32.xlu0 %v716, 94
      %v722 = vpop.permute.xlu0 %721
      %vm723 = vcmask 769024
      %v724 = vsel %vm723, %v718, %v720
      %v725 = vsel %vm723, %v720, %v722
      %v728 = vsel %vm539, %v724, 0.0
      %v729 = vsel %vm540, %v725, 0.0
      %730 = vst [vmem:[#allocation5 + $0x40] sm:$0xf] %v728
      %731 = vst [vmem:[#allocation5 + $0x48] sm:$0xf] %v729
      %v732 = vld [vmem:[%s3] sm:$0xff]
      %v733 = vld [vmem:[#allocation5] sm:$0xff]
      %v734 = vld [vmem:[#allocation5 + $0x8] sm:$0xff]
      %v735 = vld [vmem:[#allocation5 + $0x10] sm:$0xff]
      %v736 = vld [vmem:[#allocation5 + $0x18] sm:$0xff]
      %v737 = vld [vmem:[#allocation5 + $0x20] sm:$0xff]
      %v738 = vld [vmem:[#allocation5 + $0x28] sm:$0xff]
      %v739 = vld [vmem:[#allocation5 + $0x30] sm:$0xff]
      %v740 = vld [vmem:[#allocation5 + $0x38] sm:$0xff]
      %v741 = vld [vmem:[#allocation5 + $0x40] sm:$0xf]
      %v742 = vld [vmem:[#allocation5 + $0x48] sm:$0xf]
      %v743 = vld [vmem:[%s4] sm:$0xff]
      %745 = vset.pattern.permute.xlu0 0
      %746 = vperm.xlu0 %745, %v743
      %v747 = vpop.permute.xlu0 %746
      %vm749 = vcmask 293888
      %v751 = vsel %vm749, %v732, 0
      %v754 = vsel %vm386, %v741, 0
      %v757 = vsel %vm386, %v742, 0
      %759 = vmatpush.msra.mxu0 0.0
      %760 = vmatpush.msra.mxu0 0.0
      %761 = vmatpush.msra.mxu0 0.0
      %762 = vmatpush.msra.mxu0 0.0
      %763 = vmatpush.msra.mxu0 0.0
      %764 = vmatpush.msra.mxu0 0.0
      %765 = vmatpush.msra.mxu0 0.0
      %766 = vmatpush.msra.mxu0 0.0
      %767 = vmatpush.msra.mxu0 0.0
      %768 = vmatpush.msra.mxu0 0.0
      %769 = vmatpush.msra.mxu0 0.0
      %770 = vmatpush.msra.mxu0 %v754
      %771 = vmatpush.msra.mxu0 %v739
      %772 = vmatpush.msra.mxu0 %v737
      %773 = vmatpush.msra.mxu0 %v735
      %774 = vmatpush.msra.mxu0 %v733
      %775 = vmatmul.f32.gmra.mxu0 %v751
      %v776 = vpop.f32.mrf.mxu0
      %v777 = vadd.f32 %v747, %v776
      %778 = vdwg.mxu0
      %779 = vmatpush.msra.mxu0 0.0
      %780 = vmatpush.msra.mxu0 0.0
      %781 = vmatpush.msra.mxu0 0.0
      %782 = vmatpush.msra.mxu0 0.0
      %783 = vmatpush.msra.mxu0 0.0
      %784 = vmatpush.msra.mxu0 0.0
      %785 = vmatpush.msra.mxu0 0.0
      %786 = vmatpush.msra.mxu0 0.0
      %787 = vmatpush.msra.mxu0 0.0
      %788 = vmatpush.msra.mxu0 0.0
      %789 = vmatpush.msra.mxu0 0.0
      %790 = vmatpush.msra.mxu0 %v757
      %791 = vmatpush.msra.mxu0 %v740
      %792 = vmatpush.msra.mxu0 %v738
      %793 = vmatpush.msra.mxu0 %v736
      %794 = vmatpush.msra.mxu0 %v734
      %795 = vmatmul.f32.gmra.mxu0 %v751
      %v796 = vpop.f32.mrf.mxu0
      %v797 = vadd.f32 %v747, %v796
      %798 = vdwg.mxu0
      %v799 = vmax.f32 %v777, 0.0
      %v800 = vmax.f32 %v797, 0.0
      %vm801 = vcmask 271360
      %802 = vst.msk [vmem:[#allocation3] sm:$0x3] %vm801, 0.0
      %vm803 = vcmask 550160
      %804 = vst.msk [vmem:[#allocation3 + $0x4] sm:$0x3] %vm803, 0.0
      %v807 = vrot.slane %v440, 6
      %vm808 = vcmask 1041408
      %v809 = vsel %vm808, %v439, %v807
      %810 = vrot.lane.b32.xlu0 %v809, 34
      %v811 = vpop.permute.xlu0 %810
      %v812 = vrot.slane %v811, 6
      %vm813 = vcmask 277504
      %v814 = vsel %vm813, %v812, %v811
      %vm816 = vcmask 1041680
      %vm817 = vcmask 1043458
      %vm818 = vmor %vm817, %vm816
      %vm819 = vcmask 275460
      %vm820 = vmor %vm819, %vm818
      %821 = vst.msk [vmem:[#allocation3] sm:$0x3f] %vm820, %v814
      %v822 = vld [vmem:[#allocation3] sm:$0xf]
      %v823 = vadd.s32 %v359, 4294967294
      %v824 = vadd.s32 %v360, 4294967294
      %vm825 = vcmp.ge.s32.totalorder %v823, 0
      %vm826 = vcmp.ge.s32.totalorder %v824, 0
      %vm827 = vcmp.lt.s32.totalorder %v823, 16
      %vm828 = vcmp.lt.s32.totalorder %v824, 16
      %vm829 = vmand %vm825, %vm827
      %vm830 = vmand %vm826, %vm828
      %v831 = vsel %vm829, 1, 0
      %v832 = vsel %vm830, 1, 0
      %vm833 = vcmp.eq.s32.totalorder %v831, 1
      %vm834 = vcmp.eq.s32.totalorder %v832, 1
      %836 = vst [vmem:[#allocation1] ss:$4 sm:$0xff] %v822
      %v837 = vld.sshfl [vmem:[#allocation1] sm:$0xff pattern:$0x73625140]
      %v838 = vld.sshfl [vmem:[#allocation1 + $0x8] sm:$0xff pattern:$0x73625140]
      %v841 = vsel %vm833, %v837, 0.0
      %v842 = vsel %vm834, %v838, 0.0
      %843 = vst [vmem:[#allocation6] sm:$0x3] %v841
      %844 = vst [vmem:[#allocation6 + $0x8] sm:$0x3] %v842
      %v845 = vld [vmem:[#allocation3] sm:$0x3f]
      %847 = vst [vmem:[#allocation1] ss:$4 sm:$0xff] %v845
      %v848 = vld.sshfl [vmem:[#allocation1] sm:$0xff pattern:$0x73625140]
      %v849 = vld.sshfl [vmem:[#allocation1 + $0x8] sm:$0xff pattern:$0x73625140]
      %v850 = vld.sshfl [vmem:[#allocation1 + $0x10] sm:$0xff pattern:$0x73625140]
      %851 = vrot.lane.b32.xlu0 %v848, 127
      %v852 = vpop.permute.xlu0 %851
      %853 = vrot.lane.b32.xlu0 %v849, 127
      %v854 = vpop.permute.xlu0 %853
      %855 = vrot.lane.b32.xlu0 %v850, 127
      %v856 = vpop.permute.xlu0 %855
      %v857 = vsel %vm512, %v852, %v854
      %v858 = vsel %vm512, %v854, %v856
      %v861 = vsel %vm474, %v857, 0.0
      %v862 = vsel %vm475, %v858, 0.0
      %v865 = vrot.slane %v861, 6
      %v866 = vrot.slane %v862, 6
      %869 = vst [vmem:[#allocation6] sm:$0xc] %v865
      %870 = vst [vmem:[#allocation6 + $0x8] sm:$0xc] %v866
      %v871 = vld [vmem:[#allocation3] sm:$0x3f]
      %873 = vst [vmem:[#allocation1] ss:$4 sm:$0xff] %v871
      %v874 = vld.sshfl [vmem:[#allocation1] sm:$0xff pattern:$0x73625140]
      %v875 = vld.sshfl [vmem:[#allocation1 + $0x8] sm:$0xff pattern:$0x73625140]
      %v876 = vld.sshfl [vmem:[#allocation1 + $0x10] sm:$0xff pattern:$0x73625140]
      %877 = vrot.lane.b32.xlu0 %v874, 126
      %v878 = vpop.permute.xlu0 %877
      %879 = vrot.lane.b32.xlu0 %v875, 126
      %v880 = vpop.permute.xlu0 %879
      %881 = vrot.lane.b32.xlu0 %v876, 126
      %v882 = vpop.permute.xlu0 %881
      %v883 = vsel %vm555, %v878, %v880
      %v884 = vsel %vm555, %v880, %v882
      %v887 = vsel %vm496, %v883, 0.0
      %v888 = vsel %vm497, %v884, 0.0
      %v891 = vrot.slane %v887, 4
      %v892 = vrot.slane %v888, 4
      %895 = vst [vmem:[#allocation6] sm:$0x30] %v891
      %896 = vst [vmem:[#allocation6 + $0x8] sm:$0x30] %v892
      %v897 = vld [vmem:[#allocation3] sm:$0x3f]
      %899 = vst [vmem:[#allocation1] ss:$4 sm:$0xff] %v897
      %v900 = vld.sshfl [vmem:[#allocation1] sm:$0xff pattern:$0x73625140]
      %v901 = vld.sshfl [vmem:[#allocation1 + $0x8] sm:$0xff pattern:$0x73625140]
      %v902 = vld.sshfl [vmem:[#allocation1 + $0x10] sm:$0xff pattern:$0x73625140]
      %903 = vrot.lane.b32.xlu0 %v900, 125
      %v904 = vpop.permute.xlu0 %903
      %905 = vrot.lane.b32.xlu0 %v901, 125
      %v906 = vpop.permute.xlu0 %905
      %907 = vrot.lane.b32.xlu0 %v902, 125
      %v908 = vpop.permute.xlu0 %907
      %vm909 = vcmask 1022976
      %v910 = vsel %vm909, %v904, %v906
      %v911 = vsel %vm909, %v906, %v908
      %v914 = vsel %vm539, %v910, 0.0
      %v915 = vsel %vm540, %v911, 0.0
      %v918 = vrot.slane %v914, 2
      %v919 = vrot.slane %v915, 2
      %922 = vst [vmem:[#allocation6] sm:$0xc0] %v918
      %923 = vst [vmem:[#allocation6 + $0x8] sm:$0xc0] %v919
      %v924 = vld [vmem:[#allocation3] sm:$0x3f]
      %v925 = vadd.s32 %v359, 2
      %v926 = vadd.s32 %v360, 2
      %vm927 = vcmp.ge.s32.totalorder %v925, 0
      %vm928 = vcmp.ge.s32.totalorder %v926, 0
      %vm929 = vcmp.lt.s32.totalorder %v925, 16
      %vm930 = vcmp.lt.s32.totalorder %v926, 16
      %vm931 = vmand %vm927, %vm929
      %vm932 = vmand %vm928, %vm930
      %v933 = vsel %vm931, 1, 0
      %v934 = vsel %vm932, 1, 0
      %vm935 = vcmp.eq.s32.totalorder %v933, 1
      %vm936 = vcmp.eq.s32.totalorder %v934, 1
      %938 = vst [vmem:[#allocation1] ss:$4 sm:$0xff] %v924
      %v939 = vld.sshfl [vmem:[#allocation1] sm:$0xff pattern:$0x73625140]
      %v940 = vld.sshfl [vmem:[#allocation1 + $0x8] sm:$0xff pattern:$0x73625140]
      %v941 = vld.sshfl [vmem:[#allocation1 + $0x10] sm:$0xff pattern:$0x73625140]
      %942 = vrot.lane.b32.xlu0 %v939, 124
      %v943 = vpop.permute.xlu0 %942
      %944 = vrot.lane.b32.xlu0 %v940, 124
      %v945 = vpop.permute.xlu0 %944
      %946 = vrot.lane.b32.xlu0 %v941, 124
      %v947 = vpop.permute.xlu0 %946
      %vm948 = vcmask 1014784
      %v949 = vsel %vm948, %v943, %v945
      %v950 = vsel %vm948, %v945, %v947
      %v953 = vsel %vm935, %v949, 0.0
      %v954 = vsel %vm936, %v950, 0.0
      %955 = vst [vmem:[#allocation6 + $0x10] sm:$0x3] %v953
      %956 = vst [vmem:[#allocation6 + $0x18] sm:$0x3] %v954
      %v957 = vld [vmem:[#allocation3] sm:$0x3f]
      %959 = vst [vmem:[#allocation1] ss:$4 sm:$0xff] %v957
      %v960 = vld.sshfl [vmem:[#allocation1] sm:$0xff pattern:$0x73625140]
      %v961 = vld.sshfl [vmem:[#allocation1 + $0x8] sm:$0xff pattern:$0x73625140]
      %v962 = vld.sshfl [vmem:[#allocation1 + $0x10] sm:$0xff pattern:$0x73625140]
      %963 = vrot.lane.b32.xlu0 %v960, 112
      %v964 = vpop.permute.xlu0 %963
      %965 = vrot.lane.b32.xlu0 %v961, 112
      %v966 = vpop.permute.xlu0 %965
      %967 = vrot.lane.b32.xlu0 %v962, 112
      %v968 = vpop.permute.xlu0 %967
      %v969 = vsel %vm580, %v964, %v966
      %v970 = vsel %vm580, %v966, %v968
      %v973 = vsel %vm833, %v969, 0.0
      %v974 = vsel %vm834, %v970, 0.0
      %v977 = vrot.slane %v973, 6
      %v978 = vrot.slane %v974, 6
      %981 = vst [vmem:[#allocation6 + $0x10] sm:$0xc] %v977
      %982 = vst [vmem:[#allocation6 + $0x18] sm:$0xc] %v978
      %v983 = vld [vmem:[#allocation3] sm:$0x3f]
      %985 = vst [vmem:[#allocation1] ss:$4 sm:$0xff] %v983
      %v986 = vld.sshfl [vmem:[#allocation1] sm:$0xff pattern:$0x73625140]
      %v987 = vld.sshfl [vmem:[#allocation1 + $0x8] sm:$0xff pattern:$0x73625140]
      %v988 = vld.sshfl [vmem:[#allocation1 + $0x10] sm:$0xff pattern:$0x73625140]
      %989 = vrot.lane.b32.xlu0 %v986, 111
      %v990 = vpop.permute.xlu0 %989
      %991 = vrot.lane.b32.xlu0 %v987, 111
      %v992 = vpop.permute.xlu0 %991
      %993 = vrot.lane.b32.xlu0 %v988, 111
      %v994 = vpop.permute.xlu0 %993
      %v995 = vsel %vm611, %v990, %v992
      %v996 = vsel %vm611, %v992, %v994
      %v999 = vsel %vm474, %v995, 0.0
      %v1000 = vsel %vm475, %v996, 0.0
      %v1003 = vrot.slane %v999, 4
      %v1004 = vrot.slane %v1000, 4
      %1007 = vst [vmem:[#allocation6 + $0x10] sm:$0x30] %v1003
      %1008 = vst [vmem:[#allocation6 + $0x18] sm:$0x30] %v1004
      %v1009 = vld [vmem:[#allocation3] sm:$0x3f]
      %1011 = vst [vmem:[#allocation1] ss:$4 sm:$0xff] %v1009
      %v1012 = vld.sshfl [vmem:[#allocation1] sm:$0xff pattern:$0x73625140]
      %v1013 = vld.sshfl [vmem:[#allocation1 + $0x8] sm:$0xff pattern:$0x73625140]
      %v1014 = vld.sshfl [vmem:[#allocation1 + $0x10] sm:$0xff pattern:$0x73625140]
      %1015 = vrot.lane.b32.xlu0 %v1012, 110
      %v1016 = vpop.permute.xlu0 %1015
      %1017 = vrot.lane.b32.xlu0 %v1013, 110
      %v1018 = vpop.permute.xlu0 %1017
      %1019 = vrot.lane.b32.xlu0 %v1014, 110
      %v1020 = vpop.permute.xlu0 %1019
      %v1021 = vsel %vm636, %v1016, %v1018
      %v1022 = vsel %vm636, %v1018, %v1020
      %v1025 = vsel %vm496, %v1021, 0.0
      %v1026 = vsel %vm497, %v1022, 0.0
      %v1029 = vrot.slane %v1025, 2
      %v1030 = vrot.slane %v1026, 2
      %1033 = vst [vmem:[#allocation6 + $0x10] sm:$0xc0] %v1029
      %1034 = vst [vmem:[#allocation6 + $0x18] sm:$0xc0] %v1030
      %v1035 = vld [vmem:[#allocation3] sm:$0x3f]
      %1037 = vst [vmem:[#allocation1] ss:$4 sm:$0xff] %v1035
      %v1038 = vld.sshfl [vmem:[#allocation1] sm:$0xff pattern:$0x73625140]
      %v1039 = vld.sshfl [vmem:[#allocation1 + $0x8] sm:$0xff pattern:$0x73625140]
      %v1040 = vld.sshfl [vmem:[#allocation1 + $0x10] sm:$0xff pattern:$0x73625140]
      %1041 = vrot.lane.b32.xlu0 %v1038, 109
      %v1042 = vpop.permute.xlu0 %1041
      %1043 = vrot.lane.b32.xlu0 %v1039, 109
      %v1044 = vpop.permute.xlu0 %1043
      %1045 = vrot.lane.b32.xlu0 %v1040, 109
      %v1046 = vpop.permute.xlu0 %1045
      %vm1047 = vcmask 891904
      %v1048 = vsel %vm1047, %v1042, %v1044
      %v1049 = vsel %vm1047, %v1044, %v1046
      %v1052 = vsel %vm539, %v1048, 0.0
      %v1053 = vsel %vm540, %v1049, 0.0
      %1054 = vst [vmem:[#allocation6 + $0x20] sm:$0x3] %v1052
      %1055 = vst [vmem:[#allocation6 + $0x28] sm:$0x3] %v1053
      %v1056 = vld [vmem:[#allocation3] sm:$0x3f]
      %1058 = vst [vmem:[#allocation1] ss:$4 sm:$0xff] %v1056
      %v1059 = vld.sshfl [vmem:[#allocation1] sm:$0xff pattern:$0x73625140]
      %v1060 = vld.sshfl [vmem:[#allocation1 + $0x8] sm:$0xff pattern:$0x73625140]
      %v1061 = vld.sshfl [vmem:[#allocation1 + $0x10] sm:$0xff pattern:$0x73625140]
      %1062 = vrot.lane.b32.xlu0 %v1059, 108
      %v1063 = vpop.permute.xlu0 %1062
      %1064 = vrot.lane.b32.xlu0 %v1060, 108
      %v1065 = vpop.permute.xlu0 %1064
      %1066 = vrot.lane.b32.xlu0 %v1061, 108
      %v1067 = vpop.permute.xlu0 %1066
      %vm1068 = vcmask 883712
      %v1069 = vsel %vm1068, %v1063, %v1065
      %v1070 = vsel %vm1068, %v1065, %v1067
      %v1073 = vsel %vm935, %v1069, 0.0
      %v1074 = vsel %vm936, %v1070, 0.0
      %v1077 = vrot.slane %v1073, 6
      %v1078 = vrot.slane %v1074, 6
      %1081 = vst [vmem:[#allocation6 + $0x20] sm:$0xc] %v1077
      %1082 = vst [vmem:[#allocation6 + $0x28] sm:$0xc] %v1078
      %v1083 = vld [vmem:[#allocation3] sm:$0x3f]
      %1085 = vst [vmem:[#allocation1] ss:$4 sm:$0xff] %v1083
      %v1086 = vld.sshfl [vmem:[#allocation1] sm:$0xff pattern:$0x73625140]
      %v1087 = vld.sshfl [vmem:[#allocation1 + $0x8] sm:$0xff pattern:$0x73625140]
      %v1088 = vld.sshfl [vmem:[#allocation1 + $0x10] sm:$0xff pattern:$0x73625140]
      %1089 = vrot.lane.b32.xlu0 %v1086, 96
      %v1090 = vpop.permute.xlu0 %1089
      %1091 = vrot.lane.b32.xlu0 %v1087, 96
      %v1092 = vpop.permute.xlu0 %1091
      %1093 = vrot.lane.b32.xlu0 %v1088, 96
      %v1094 = vpop.permute.xlu0 %1093
      %v1095 = vsel %vm667, %v1090, %v1092
      %v1096 = vsel %vm667, %v1092, %v1094
      %v1099 = vsel %vm833, %v1095, 0.0
      %v1100 = vsel %vm834, %v1096, 0.0
      %v1103 = vrot.slane %v1099, 4
      %v1104 = vrot.slane %v1100, 4
      %1107 = vst [vmem:[#allocation6 + $0x20] sm:$0x30] %v1103
      %1108 = vst [vmem:[#allocation6 + $0x28] sm:$0x30] %v1104
      %v1109 = vld [vmem:[#allocation3] sm:$0x3f]
      %1111 = vst [vmem:[#allocation1] ss:$4 sm:$0xff] %v1109
      %v1112 = vld.sshfl [vmem:[#allocation1] sm:$0xff pattern:$0x73625140]
      %v1113 = vld.sshfl [vmem:[#allocation1 + $0x8] sm:$0xff pattern:$0x73625140]
      %v1114 = vld.sshfl [vmem:[#allocation1 + $0x10] sm:$0xff pattern:$0x73625140]
      %1115 = vrot.lane.b32.xlu0 %v1112, 95
      %v1116 = vpop.permute.xlu0 %1115
      %1117 = vrot.lane.b32.xlu0 %v1113, 95
      %v1118 = vpop.permute.xlu0 %1117
      %1119 = vrot.lane.b32.xlu0 %v1114, 95
      %v1120 = vpop.permute.xlu0 %1119
      %v1121 = vsel %vm692, %v1116, %v1118
      %v1122 = vsel %vm692, %v1118, %v1120
      %v1125 = vsel %vm474, %v1121, 0.0
      %v1126 = vsel %vm475, %v1122, 0.0
      %v1129 = vrot.slane %v1125, 2
      %v1130 = vrot.slane %v1126, 2
      %1133 = vst [vmem:[#allocation6 + $0x20] sm:$0xc0] %v1129
      %1134 = vst [vmem:[#allocation6 + $0x28] sm:$0xc0] %v1130
      %v1135 = vld [vmem:[#allocation3] sm:$0x3f]
      %1137 = vst [vmem:[#allocation1] ss:$4 sm:$0xff] %v1135
      %v1138 = vld.sshfl [vmem:[#allocation1] sm:$0xff pattern:$0x73625140]
      %v1139 = vld.sshfl [vmem:[#allocation1 + $0x8] sm:$0xff pattern:$0x73625140]
      %v1140 = vld.sshfl [vmem:[#allocation1 + $0x10] sm:$0xff pattern:$0x73625140]
      %1141 = vrot.lane.b32.xlu0 %v1138, 94
      %v1142 = vpop.permute.xlu0 %1141
      %1143 = vrot.lane.b32.xlu0 %v1139, 94
      %v1144 = vpop.permute.xlu0 %1143
      %1145 = vrot.lane.b32.xlu0 %v1140, 94
      %v1146 = vpop.permute.xlu0 %1145
      %v1147 = vsel %vm723, %v1142, %v1144
      %v1148 = vsel %vm723, %v1144, %v1146
      %v1151 = vsel %vm496, %v1147, 0.0
      %v1152 = vsel %vm497, %v1148, 0.0
      %1153 = vst [vmem:[#allocation6 + $0x30] sm:$0x3] %v1151
      %1154 = vst [vmem:[#allocation6 + $0x38] sm:$0x3] %v1152
      %v1155 = vld [vmem:[#allocation3] sm:$0x3f]
      %1157 = vst [vmem:[#allocation1] ss:$4 sm:$0xff] %v1155
      %v1158 = vld.sshfl [vmem:[#allocation1] sm:$0xff pattern:$0x73625140]
      %v1159 = vld.sshfl [vmem:[#allocation1 + $0x8] sm:$0xff pattern:$0x73625140]
      %v1160 = vld.sshfl [vmem:[#allocation1 + $0x10] sm:$0xff pattern:$0x73625140]
      %1161 = vrot.lane.b32.xlu0 %v1158, 93
      %v1162 = vpop.permute.xlu0 %1161
      %1163 = vrot.lane.b32.xlu0 %v1159, 93
      %v1164 = vpop.permute.xlu0 %1163
      %1165 = vrot.lane.b32.xlu0 %v1160, 93
      %v1166 = vpop.permute.xlu0 %1165
      %vm1167 = vcmask 760832
      %v1168 = vsel %vm1167, %v1162, %v1164
      %v1169 = vsel %vm1167, %v1164, %v1166
      %v1172 = vsel %vm539, %v1168, 0.0
      %v1173 = vsel %vm540, %v1169, 0.0
      %v1176 = vrot.slane %v1172, 6
      %v1177 = vrot.slane %v1173, 6
      %1180 = vst [vmem:[#allocation6 + $0x30] sm:$0xc] %v1176
      %1181 = vst [vmem:[#allocation6 + $0x38] sm:$0xc] %v1177
      %v1182 = vld [vmem:[#allocation3] sm:$0x3f]
      %1184 = vst [vmem:[#allocation1] ss:$4 sm:$0xff] %v1182
      %v1185 = vld.sshfl [vmem:[#allocation1] sm:$0xff pattern:$0x73625140]
      %v1186 = vld.sshfl [vmem:[#allocation1 + $0x8] sm:$0xff pattern:$0x73625140]
      %v1187 = vld.sshfl [vmem:[#allocation1 + $0x10] sm:$0xff pattern:$0x73625140]
      %1188 = vrot.lane.b32.xlu0 %v1185, 92
      %v1189 = vpop.permute.xlu0 %1188
      %1190 = vrot.lane.b32.xlu0 %v1186, 92
      %v1191 = vpop.permute.xlu0 %1190
      %1192 = vrot.lane.b32.xlu0 %v1187, 92
      %v1193 = vpop.permute.xlu0 %1192
      %vm1194 = vcmask 752640
      %v1195 = vsel %vm1194, %v1189, %v1191
      %v1196 = vsel %vm1194, %v1191, %v1193
      %v1199 = vsel %vm935, %v1195, 0.0
      %v1200 = vsel %vm936, %v1196, 0.0
      %v1203 = vrot.slane %v1199, 4
      %v1204 = vrot.slane %v1200, 4
      %1207 = vst [vmem:[#allocation6 + $0x30] sm:$0x30] %v1203
      %1208 = vst [vmem:[#allocation6 + $0x38] sm:$0x30] %v1204
      %v1209 = vld [vmem:[#allocation3] sm:$0x3f]
      %1211 = vst [vmem:[#allocation1] ss:$4 sm:$0xff] %v1209
      %v1212 = vld.sshfl [vmem:[#allocation1] sm:$0xff pattern:$0x73625140]
      %v1213 = vld.sshfl [vmem:[#allocation1 + $0x8] sm:$0xff pattern:$0x73625140]
      %v1214 = vld.sshfl [vmem:[#allocation1 + $0x10] sm:$0xff pattern:$0x73625140]
      %1215 = vrot.lane.b32.xlu0 %v1212, 80
      %v1216 = vpop.permute.xlu0 %1215
      %1217 = vrot.lane.b32.xlu0 %v1213, 80
      %v1218 = vpop.permute.xlu0 %1217
      %1219 = vrot.lane.b32.xlu0 %v1214, 80
      %v1220 = vpop.permute.xlu0 %1219
      %vm1221 = vcmask 654336
      %v1222 = vsel %vm1221, %v1216, %v1218
      %v1223 = vsel %vm1221, %v1218, %v1220
      %v1226 = vsel %vm833, %v1222, 0.0
      %v1227 = vsel %vm834, %v1223, 0.0
      %v1230 = vrot.slane %v1226, 2
      %v1231 = vrot.slane %v1227, 2
      %1234 = vst [vmem:[#allocation6 + $0x30] sm:$0xc0] %v1230
      %1235 = vst [vmem:[#allocation6 + $0x38] sm:$0xc0] %v1231
      %v1236 = vld [vmem:[#allocation3] sm:$0x3f]
      %1238 = vst [vmem:[#allocation1] ss:$4 sm:$0xff] %v1236
      %v1239 = vld.sshfl [vmem:[#allocation1] sm:$0xff pattern:$0x73625140]
      %v1240 = vld.sshfl [vmem:[#allocation1 + $0x8] sm:$0xff pattern:$0x73625140]
      %v1241 = vld.sshfl [vmem:[#allocation1 + $0x10] sm:$0xff pattern:$0x73625140]
      %1242 = vrot.lane.b32.xlu0 %v1239, 79
      %v1243 = vpop.permute.xlu0 %1242
      %1244 = vrot.lane.b32.xlu0 %v1240, 79
      %v1245 = vpop.permute.xlu0 %1244
      %1246 = vrot.lane.b32.xlu0 %v1241, 79
      %v1247 = vpop.permute.xlu0 %1246
      %vm1248 = vcmask 646144
      %v1249 = vsel %vm1248, %v1243, %v1245
      %v1250 = vsel %vm1248, %v1245, %v1247
      %v1253 = vsel %vm474, %v1249, 0.0
      %v1254 = vsel %vm475, %v1250, 0.0
      %1255 = vst [vmem:[#allocation6 + $0x40] sm:$0x3] %v1253
      %1256 = vst [vmem:[#allocation6 + $0x48] sm:$0x3] %v1254
      %v1257 = vld [vmem:[#allocation3] sm:$0x3f]
      %1259 = vst [vmem:[#allocation1] ss:$4 sm:$0xff] %v1257
      %v1260 = vld.sshfl [vmem:[#allocation1] sm:$0xff pattern:$0x73625140]
      %v1261 = vld.sshfl [vmem:[#allocation1 + $0x8] sm:$0xff pattern:$0x73625140]
      %v1262 = vld.sshfl [vmem:[#allocation1 + $0x10] sm:$0xff pattern:$0x73625140]
      %1263 = vrot.lane.b32.xlu0 %v1260, 78
      %v1264 = vpop.permute.xlu0 %1263
      %1265 = vrot.lane.b32.xlu0 %v1261, 78
      %v1266 = vpop.permute.xlu0 %1265
      %1267 = vrot.lane.b32.xlu0 %v1262, 78
      %v1268 = vpop.permute.xlu0 %1267
      %vm1269 = vcmask 637952
      %v1270 = vsel %vm1269, %v1264, %v1266
      %v1271 = vsel %vm1269, %v1266, %v1268
      %v1274 = vsel %vm496, %v1270, 0.0
      %v1275 = vsel %vm497, %v1271, 0.0
      %v1278 = vrot.slane %v1274, 6
      %v1279 = vrot.slane %v1275, 6
      %1282 = vst [vmem:[#allocation6 + $0x40] sm:$0xc] %v1278
      %1283 = vst [vmem:[#allocation6 + $0x48] sm:$0xc] %v1279
      %v1284 = vld [vmem:[#allocation3] sm:$0x3f]
      %1286 = vst [vmem:[#allocation1] ss:$4 sm:$0xff] %v1284
      %v1287 = vld.sshfl [vmem:[#allocation1] sm:$0xff pattern:$0x73625140]
      %v1288 = vld.sshfl [vmem:[#allocation1 + $0x8] sm:$0xff pattern:$0x73625140]
      %v1289 = vld.sshfl [vmem:[#allocation1 + $0x10] sm:$0xff pattern:$0x73625140]
      %1290 = vrot.lane.b32.xlu0 %v1287, 77
      %v1291 = vpop.permute.xlu0 %1290
      %1292 = vrot.lane.b32.xlu0 %v1288, 77
      %v1293 = vpop.permute.xlu0 %1292
      %1294 = vrot.lane.b32.xlu0 %v1289, 77
      %v1295 = vpop.permute.xlu0 %1294
      %vm1296 = vcmask 629760
      %v1297 = vsel %vm1296, %v1291, %v1293
      %v1298 = vsel %vm1296, %v1293, %v1295
      %v1301 = vsel %vm539, %v1297, 0.0
      %v1302 = vsel %vm540, %v1298, 0.0
      %v1305 = vrot.slane %v1301, 4
      %v1306 = vrot.slane %v1302, 4
      %1309 = vst [vmem:[#allocation6 + $0x40] sm:$0x30] %v1305
      %1310 = vst [vmem:[#allocation6 + $0x48] sm:$0x30] %v1306
      %v1311 = vld [vmem:[#allocation3] sm:$0x3f]
      %1313 = vst [vmem:[#allocation1] ss:$4 sm:$0xff] %v1311
      %v1314 = vld.sshfl [vmem:[#allocation1] sm:$0xff pattern:$0x73625140]
      %v1315 = vld.sshfl [vmem:[#allocation1 + $0x8] sm:$0xff pattern:$0x73625140]
      %v1316 = vld.sshfl [vmem:[#allocation1 + $0x10] sm:$0xff pattern:$0x73625140]
      %1317 = vrot.lane.b32.xlu0 %v1314, 76
      %v1318 = vpop.permute.xlu0 %1317
      %1319 = vrot.lane.b32.xlu0 %v1315, 76
      %v1320 = vpop.permute.xlu0 %1319
      %1321 = vrot.lane.b32.xlu0 %v1316, 76
      %v1322 = vpop.permute.xlu0 %1321
      %vm1323 = vcmask 621568
      %v1324 = vsel %vm1323, %v1318, %v1320
      %v1325 = vsel %vm1323, %v1320, %v1322
      %v1328 = vsel %vm935, %v1324, 0.0
      %v1329 = vsel %vm936, %v1325, 0.0
      %v1332 = vrot.slane %v1328, 2
      %v1333 = vrot.slane %v1329, 2
      %1336 = vst [vmem:[#allocation6 + $0x40] sm:$0xc0] %v1332
      %1337 = vst [vmem:[#allocation6 + $0x48] sm:$0xc0] %v1333
      %v1338 = vld [vmem:[#allocation3] sm:$0x3f]
      %1340 = vst [vmem:[#allocation1] ss:$4 sm:$0xff] %v1338
      %v1341 = vld.sshfl [vmem:[#allocation1] sm:$0xff pattern:$0x73625140]
      %v1342 = vld.sshfl [vmem:[#allocation1 + $0x8] sm:$0xff pattern:$0x73625140]
      %v1343 = vld.sshfl [vmem:[#allocation1 + $0x10] sm:$0xff pattern:$0x73625140]
      %1344 = vrot.lane.b32.xlu0 %v1341, 64
      %v1345 = vpop.permute.xlu0 %1344
      %1346 = vrot.lane.b32.xlu0 %v1342, 64
      %v1347 = vpop.permute.xlu0 %1346
      %1348 = vrot.lane.b32.xlu0 %v1343, 64
      %v1349 = vpop.permute.xlu0 %1348
      %vm1350 = vcmask 523264
      %v1351 = vsel %vm1350, %v1345, %v1347
      %v1352 = vsel %vm1350, %v1347, %v1349
      %v1355 = vsel %vm833, %v1351, 0.0
      %v1356 = vsel %vm834, %v1352, 0.0
      %1357 = vst [vmem:[#allocation6 + $0x50] sm:$0x3] %v1355
      %1358 = vst [vmem:[#allocation6 + $0x58] sm:$0x3] %v1356
      %v1359 = vld [vmem:[#allocation3] sm:$0x3f]
      %1361 = vst [vmem:[#allocation1] ss:$4 sm:$0xff] %v1359
      %v1362 = vld.sshfl [vmem:[#allocation1] sm:$0xff pattern:$0x73625140]
      %v1363 = vld.sshfl [vmem:[#allocation1 + $0x8] sm:$0xff pattern:$0x73625140]
      %v1364 = vld.sshfl [vmem:[#allocation1 + $0x10] sm:$0xff pattern:$0x73625140]
      %1365 = vrot.lane.b32.xlu0 %v1362, 63
      %v1366 = vpop.permute.xlu0 %1365
      %1367 = vrot.lane.b32.xlu0 %v1363, 63
      %v1368 = vpop.permute.xlu0 %1367
      %1369 = vrot.lane.b32.xlu0 %v1364, 63
      %v1370 = vpop.permute.xlu0 %1369
      %vm1371 = vcmask 515072
      %v1372 = vsel %vm1371, %v1366, %v1368
      %v1373 = vsel %vm1371, %v1368, %v1370
      %v1376 = vsel %vm474, %v1372, 0.0
      %v1377 = vsel %vm475, %v1373, 0.0
      %v1380 = vrot.slane %v1376, 6
      %v1381 = vrot.slane %v1377, 6
      %1384 = vst [vmem:[#allocation6 + $0x50] sm:$0xc] %v1380
      %1385 = vst [vmem:[#allocation6 + $0x58] sm:$0xc] %v1381
      %v1386 = vld [vmem:[#allocation3] sm:$0x3f]
      %1388 = vst [vmem:[#allocation1] ss:$4 sm:$0xff] %v1386
      %v1389 = vld.sshfl [vmem:[#allocation1] sm:$0xff pattern:$0x73625140]
      %v1390 = vld.sshfl [vmem:[#allocation1 + $0x8] sm:$0xff pattern:$0x73625140]
      %v1391 = vld.sshfl [vmem:[#allocation1 + $0x10] sm:$0xff pattern:$0x73625140]
      %1392 = vrot.lane.b32.xlu0 %v1389, 62
      %v1393 = vpop.permute.xlu0 %1392
      %1394 = vrot.lane.b32.xlu0 %v1390, 62
      %v1395 = vpop.permute.xlu0 %1394
      %1396 = vrot.lane.b32.xlu0 %v1391, 62
      %v1397 = vpop.permute.xlu0 %1396
      %vm1398 = vcmask 506880
      %v1399 = vsel %vm1398, %v1393, %v1395
      %v1400 = vsel %vm1398, %v1395, %v1397
      %v1403 = vsel %vm496, %v1399, 0.0
      %v1404 = vsel %vm497, %v1400, 0.0
      %v1407 = vrot.slane %v1403, 4
      %v1408 = vrot.slane %v1404, 4
      %1411 = vst [vmem:[#allocation6 + $0x50] sm:$0x30] %v1407
      %1412 = vst [vmem:[#allocation6 + $0x58] sm:$0x30] %v1408
      %v1413 = vld [vmem:[#allocation3] sm:$0x3f]
      %1415 = vst [vmem:[#allocation1] ss:$4 sm:$0xff] %v1413
      %v1416 = vld.sshfl [vmem:[#allocation1] sm:$0xff pattern:$0x73625140]
      %v1417 = vld.sshfl [vmem:[#allocation1 + $0x8] sm:$0xff pattern:$0x73625140]
      %v1418 = vld.sshfl [vmem:[#allocation1 + $0x10] sm:$0xff pattern:$0x73625140]
      %1419 = vrot.lane.b32.xlu0 %v1416, 61
      %v1420 = vpop.permute.xlu0 %1419
      %1421 = vrot.lane.b32.xlu0 %v1417, 61
      %v1422 = vpop.permute.xlu0 %1421
      %1423 = vrot.lane.b32.xlu0 %v1418, 61
      %v1424 = vpop.permute.xlu0 %1423
      %vm1425 = vcmask 498688
      %v1426 = vsel %vm1425, %v1420, %v1422
      %v1427 = vsel %vm1425, %v1422, %v1424
      %v1430 = vsel %vm539, %v1426, 0.0
      %v1431 = vsel %vm540, %v1427, 0.0
      %v1434 = vrot.slane %v1430, 2
      %v1435 = vrot.slane %v1431, 2
      %1438 = vst [vmem:[#allocation6 + $0x50] sm:$0xc0] %v1434
      %1439 = vst [vmem:[#allocation6 + $0x58] sm:$0xc0] %v1435
      %v1440 = vld [vmem:[#allocation3] sm:$0x3f]
      %1442 = vst [vmem:[#allocation1] ss:$4 sm:$0xff] %v1440
      %v1443 = vld.sshfl [vmem:[#allocation1] sm:$0xff pattern:$0x73625140]
      %v1444 = vld.sshfl [vmem:[#allocation1 + $0x8] sm:$0xff pattern:$0x73625140]
      %v1445 = vld.sshfl [vmem:[#allocation1 + $0x10] sm:$0xff pattern:$0x73625140]
      %1446 = vrot.lane.b32.xlu0 %v1443, 60
      %v1447 = vpop.permute.xlu0 %1446
      %1448 = vrot.lane.b32.xlu0 %v1444, 60
      %v1449 = vpop.permute.xlu0 %1448
      %1450 = vrot.lane.b32.xlu0 %v1445, 60
      %v1451 = vpop.permute.xlu0 %1450
      %vm1452 = vcmask 490496
      %v1453 = vsel %vm1452, %v1447, %v1449
      %v1454 = vsel %vm1452, %v1449, %v1451
      %v1457 = vsel %vm935, %v1453, 0.0
      %v1458 = vsel %vm936, %v1454, 0.0
      %1459 = vst [vmem:[#allocation6 + $0x60] sm:$0x3] %v1457
      %1460 = vst [vmem:[#allocation6 + $0x68] sm:$0x3] %v1458
      %v1461 = vld [vmem:[%s5] sm:$0xf]
      %v1462 = vld [vmem:[#allocation6] sm:$0xff]
      %v1463 = vld [vmem:[#allocation6 + $0x8] sm:$0xff]
      %v1464 = vld [vmem:[#allocation6 + $0x10] sm:$0xff]
      %v1465 = vld [vmem:[#allocation6 + $0x18] sm:$0xff]
      %v1466 = vld [vmem:[#allocation6 + $0x20] sm:$0xff]
      %v1467 = vld [vmem:[#allocation6 + $0x28] sm:$0xff]
      %v1468 = vld [vmem:[#allocation6 + $0x30] sm:$0xff]
      %v1469 = vld [vmem:[#allocation6 + $0x38] sm:$0xff]
      %v1470 = vld [vmem:[#allocation6 + $0x40] sm:$0xff]
      %v1471 = vld [vmem:[#allocation6 + $0x48] sm:$0xff]
      %v1472 = vld [vmem:[#allocation6 + $0x50] sm:$0xff]
      %v1473 = vld [vmem:[#allocation6 + $0x58] sm:$0xff]
      %v1474 = vld [vmem:[#allocation6 + $0x60] sm:$0x3]
      %v1475 = vld [vmem:[#allocation6 + $0x68] sm:$0x3]
      %v1476 = vld [vmem:[%s6] sm:$0xf]
      %1478 = vset.pattern.permute.xlu0 0
      %1479 = vperm.xlu0 %1478, %v1476
      %v1480 = vpop.permute.xlu0 %1479
      %vm1482 = vcmask 408576
      %v1484 = vsel %vm1482, %v1461, 0
      %v1487 = vsel %vm808, %v1474, 0
      %v1490 = vsel %vm808, %v1475, 0
      %1492 = vmatpush.msra.mxu0 0.0
      %1493 = vmatpush.msra.mxu0 0.0
      %1494 = vmatpush.msra.mxu0 0.0
      %1495 = vmatpush.msra.mxu0 0.0
      %1496 = vmatpush.msra.mxu0 0.0
      %1497 = vmatpush.msra.mxu0 0.0
      %1498 = vmatpush.msra.mxu0 0.0
      %1499 = vmatpush.msra.mxu0 0.0
      %1500 = vmatpush.msra.mxu0 0.0
      %1501 = vmatpush.msra.mxu0 %v1487
      %1502 = vmatpush.msra.mxu0 %v1472
      %1503 = vmatpush.msra.mxu0 %v1470
      %1504 = vmatpush.msra.mxu0 %v1468
      %1505 = vmatpush.msra.mxu0 %v1466
      %1506 = vmatpush.msra.mxu0 %v1464
      %1507 = vmatpush.msra.mxu0 %v1462
      %1508 = vmatmul.f32.gmra.mxu0 %v1484
      %v1509 = vpop.f32.mrf.mxu0
      %v1510 = vadd.f32 %v1480, %v1509
      %1511 = vdwg.mxu0
      %1512 = vmatpush.msra.mxu0 0.0
      %1513 = vmatpush.msra.mxu0 0.0
      %1514 = vmatpush.msra.mxu0 0.0
      %1515 = vmatpush.msra.mxu0 0.0
      %1516 = vmatpush.msra.mxu0 0.0
      %1517 = vmatpush.msra.mxu0 0.0
      %1518 = vmatpush.msra.mxu0 0.0
      %1519 = vmatpush.msra.mxu0 0.0
      %1520 = vmatpush.msra.mxu0 0.0
      %1521 = vmatpush.msra.mxu0 %v1490
      %1522 = vmatpush.msra.mxu0 %v1473
      %1523 = vmatpush.msra.mxu0 %v1471
      %1524 = vmatpush.msra.mxu0 %v1469
      %1525 = vmatpush.msra.mxu0 %v1467
      %1526 = vmatpush.msra.mxu0 %v1465
      %1527 = vmatpush.msra.mxu0 %v1463
      %1528 = vmatmul.f32.gmra.mxu0 %v1484
      %v1529 = vpop.f32.mrf.mxu0
      %v1530 = vadd.f32 %v1480, %v1529
      %1531 = vdwg.mxu0
      %v1532 = vmax.f32 %v1510, 0.0
      %v1533 = vmax.f32 %v1530, 0.0
      %1534 = vst.msk [vmem:[#allocation4] sm:$0xf] %vm441, -1e+30
      %1535 = vst.msk [vmem:[#allocation4 + $0x8] sm:$0xf] %vm443, -1e+30
      %1536 = vrot.lane.b32.xlu0 %v333, 17
      %v1537 = vpop.permute.xlu0 %1536
      %v1538 = vrot.slane %v1537, 4
      %v1539 = vsel %vm454, %v1538, %v1537
      %1542 = vst.msk [vmem:[#allocation4] sm:$0xff] %vm460, %v1539
      %1543 = vst.msk [vmem:[#allocation4 + $0x8] sm:$0xf] %vm441, %v1538
      %v1544 = vld [vmem:[#allocation4] sm:$0xff]
      %1546 = vst [vmem:[#allocation1] ss:$2 sm:$0xff] %v1544
      %v1547 = vld.sshfl [vmem:[#allocation1] sm:$0xff pattern:$0x75316420]
      %v1548 = vld.sshfl [vmem:[#allocation1 + $0x8] sm:$0xff pattern:$0x75316420]
      %v1551 = vsel %vm474, %v1547, -1e+30
      %v1552 = vsel %vm475, %v1548, -1e+30
      %v1553 = vld [vmem:[#allocation4] sm:$0xff]
      %v1554 = vld [vmem:[#allocation4 + $0x8] sm:$0xf]
      %1557 = vst [vmem:[#allocation1] ss:$2 sm:$0xff] %v1553
      %s1558 = scalar_lea.vmem [#allocation1], 16
      %1559 = vst [vmem:[%s1558] ss:$2 sm:$0xff] %v1554
      %v1560 = vld.sshfl [vmem:[#allocation1] sm:$0xff pattern:$0x75316420]
      %v1561 = vld.sshfl [vmem:[#allocation1 + $0x8] sm:$0xff pattern:$0x75316420]
      %v1562 = vld.sshfl [vmem:[#allocation1 + $0x10] sm:$0xff pattern:$0x75316420]
      %1563 = vrot.lane.b32.xlu0 %v1560, 127
      %v1564 = vpop.permute.xlu0 %1563
      %1565 = vrot.lane.b32.xlu0 %v1561, 127
      %v1566 = vpop.permute.xlu0 %1565
      %1567 = vrot.lane.b32.xlu0 %v1562, 127
      %v1568 = vpop.permute.xlu0 %1567
      %v1569 = vsel %vm512, %v1564, %v1566
      %v1570 = vsel %vm512, %v1566, %v1568
      %v1573 = vsel %vm496, %v1569, -1e+30
      %v1574 = vsel %vm497, %v1570, -1e+30
      %v1575 = vmax.f32 %v1551, %v1573
      %v1576 = vmax.f32 %v1552, %v1574
      %v1577 = vld [vmem:[#allocation4] sm:$0xff]
      %v1578 = vld [vmem:[#allocation4 + $0x8] sm:$0xf]
      %1581 = vst [vmem:[#allocation1] ss:$2 sm:$0xff] %v1577
      %s1582 = scalar_lea.vmem [#allocation1], 16
      %1583 = vst [vmem:[%s1582] ss:$2 sm:$0xff] %v1578
      %v1584 = vld.sshfl [vmem:[#allocation1] sm:$0xff pattern:$0x75316420]
      %v1585 = vld.sshfl [vmem:[#allocation1 + $0x8] sm:$0xff pattern:$0x75316420]
      %v1586 = vld.sshfl [vmem:[#allocation1 + $0x10] sm:$0xff pattern:$0x75316420]
      %1587 = vrot.lane.b32.xlu0 %v1584, 126
      %v1588 = vpop.permute.xlu0 %1587
      %1589 = vrot.lane.b32.xlu0 %v1585, 126
      %v1590 = vpop.permute.xlu0 %1589
      %1591 = vrot.lane.b32.xlu0 %v1586, 126
      %v1592 = vpop.permute.xlu0 %1591
      %v1593 = vsel %vm555, %v1588, %v1590
      %v1594 = vsel %vm555, %v1590, %v1592
      %v1597 = vsel %vm539, %v1593, -1e+30
      %v1598 = vsel %vm540, %v1594, -1e+30
      %v1599 = vmax.f32 %v1575, %v1597
      %v1600 = vmax.f32 %v1576, %v1598
      %v1601 = vld [vmem:[#allocation4] sm:$0xff]
      %v1602 = vld [vmem:[#allocation4 + $0x8] sm:$0xf]
      %1605 = vst [vmem:[#allocation1] ss:$2 sm:$0xff] %v1601
      %s1606 = scalar_lea.vmem [#allocation1], 16
      %1607 = vst [vmem:[%s1606] ss:$2 sm:$0xff] %v1602
      %v1608 = vld.sshfl [vmem:[#allocation1] sm:$0xff pattern:$0x75316420]
      %v1609 = vld.sshfl [vmem:[#allocation1 + $0x8] sm:$0xff pattern:$0x75316420]
      %v1610 = vld.sshfl [vmem:[#allocation1 + $0x10] sm:$0xff pattern:$0x75316420]
      %1611 = vrot.lane.b32.xlu0 %v1608, 112
      %v1612 = vpop.permute.xlu0 %1611
      %1613 = vrot.lane.b32.xlu0 %v1609, 112
      %v1614 = vpop.permute.xlu0 %1613
      %1615 = vrot.lane.b32.xlu0 %v1610, 112
      %v1616 = vpop.permute.xlu0 %1615
      %v1617 = vsel %vm580, %v1612, %v1614
      %v1618 = vsel %vm580, %v1614, %v1616
      %v1621 = vsel %vm474, %v1617, -1e+30
      %v1622 = vsel %vm475, %v1618, -1e+30
      %v1623 = vmax.f32 %v1599, %v1621
      %v1624 = vmax.f32 %v1600, %v1622
      %v1625 = vld [vmem:[#allocation4] sm:$0xff]
      %v1626 = vld [vmem:[#allocation4 + $0x8] sm:$0xf]
      %1629 = vst [vmem:[#allocation1] ss:$2 sm:$0xff] %v1625
      %s1630 = scalar_lea.vmem [#allocation1], 16
      %1631 = vst [vmem:[%s1630] ss:$2 sm:$0xff] %v1626
      %v1632 = vld.sshfl [vmem:[#allocation1] sm:$0xff pattern:$0x75316420]
      %v1633 = vld.sshfl [vmem:[#allocation1 + $0x8] sm:$0xff pattern:$0x75316420]
      %v1634 = vld.sshfl [vmem:[#allocation1 + $0x10] sm:$0xff pattern:$0x75316420]
      %1635 = vrot.lane.b32.xlu0 %v1632, 111
      %v1636 = vpop.permute.xlu0 %1635
      %1637 = vrot.lane.b32.xlu0 %v1633, 111
      %v1638 = vpop.permute.xlu0 %1637
      %1639 = vrot.lane.b32.xlu0 %v1634, 111
      %v1640 = vpop.permute.xlu0 %1639
      %v1641 = vsel %vm611, %v1636, %v1638
      %v1642 = vsel %vm611, %v1638, %v1640
      %v1645 = vsel %vm496, %v1641, -1e+30
      %v1646 = vsel %vm497, %v1642, -1e+30
      %v1647 = vmax.f32 %v1623, %v1645
      %v1648 = vmax.f32 %v1624, %v1646
      %v1649 = vld [vmem:[#allocation4] sm:$0xff]
      %v1650 = vld [vmem:[#allocation4 + $0x8] sm:$0xf]
      %1653 = vst [vmem:[#allocation1] ss:$2 sm:$0xff] %v1649
      %s1654 = scalar_lea.vmem [#allocation1], 16
      %1655 = vst [vmem:[%s1654] ss:$2 sm:$0xff] %v1650
      %v1656 = vld.sshfl [vmem:[#allocation1] sm:$0xff pattern:$0x75316420]
      %v1657 = vld.sshfl [vmem:[#allocation1 + $0x8] sm:$0xff pattern:$0x75316420]
      %v1658 = vld.sshfl [vmem:[#allocation1 + $0x10] sm:$0xff pattern:$0x75316420]
      %1659 = vrot.lane.b32.xlu0 %v1656, 110
      %v1660 = vpop.permute.xlu0 %1659
      %1661 = vrot.lane.b32.xlu0 %v1657, 110
      %v1662 = vpop.permute.xlu0 %1661
      %1663 = vrot.lane.b32.xlu0 %v1658, 110
      %v1664 = vpop.permute.xlu0 %1663
      %v1665 = vsel %vm636, %v1660, %v1662
      %v1666 = vsel %vm636, %v1662, %v1664
      %v1669 = vsel %vm539, %v1665, -1e+30
      %v1670 = vsel %vm540, %v1666, -1e+30
      %v1671 = vmax.f32 %v1647, %v1669
      %v1672 = vmax.f32 %v1648, %v1670
      %v1673 = vld [vmem:[#allocation4] sm:$0xff]
      %v1674 = vld [vmem:[#allocation4 + $0x8] sm:$0xf]
      %1677 = vst [vmem:[#allocation1] ss:$2 sm:$0xff] %v1673
      %s1678 = scalar_lea.vmem [#allocation1], 16
      %1679 = vst [vmem:[%s1678] ss:$2 sm:$0xff] %v1674
      %v1680 = vld.sshfl [vmem:[#allocation1] sm:$0xff pattern:$0x75316420]
      %v1681 = vld.sshfl [vmem:[#allocation1 + $0x8] sm:$0xff pattern:$0x75316420]
      %v1682 = vld.sshfl [vmem:[#allocation1 + $0x10] sm:$0xff pattern:$0x75316420]
      %1683 = vrot.lane.b32.xlu0 %v1680, 96
      %v1684 = vpop.permute.xlu0 %1683
      %1685 = vrot.lane.b32.xlu0 %v1681, 96
      %v1686 = vpop.permute.xlu0 %1685
      %1687 = vrot.lane.b32.xlu0 %v1682, 96
      %v1688 = vpop.permute.xlu0 %1687
      %v1689 = vsel %vm667, %v1684, %v1686
      %v1690 = vsel %vm667, %v1686, %v1688
      %v1693 = vsel %vm474, %v1689, -1e+30
      %v1694 = vsel %vm475, %v1690, -1e+30
      %v1695 = vmax.f32 %v1671, %v1693
      %v1696 = vmax.f32 %v1672, %v1694
      %v1697 = vld [vmem:[#allocation4] sm:$0xff]
      %v1698 = vld [vmem:[#allocation4 + $0x8] sm:$0xf]
      %1701 = vst [vmem:[#allocation1] ss:$2 sm:$0xff] %v1697
      %s1702 = scalar_lea.vmem [#allocation1], 16
      %1703 = vst [vmem:[%s1702] ss:$2 sm:$0xff] %v1698
      %v1704 = vld.sshfl [vmem:[#allocation1] sm:$0xff pattern:$0x75316420]
      %v1705 = vld.sshfl [vmem:[#allocation1 + $0x8] sm:$0xff pattern:$0x75316420]
      %v1706 = vld.sshfl [vmem:[#allocation1 + $0x10] sm:$0xff pattern:$0x75316420]
      %1707 = vrot.lane.b32.xlu0 %v1704, 95
      %v1708 = vpop.permute.xlu0 %1707
      %1709 = vrot.lane.b32.xlu0 %v1705, 95
      %v1710 = vpop.permute.xlu0 %1709
      %1711 = vrot.lane.b32.xlu0 %v1706, 95
      %v1712 = vpop.permute.xlu0 %1711
      %v1713 = vsel %vm692, %v1708, %v1710
      %v1714 = vsel %vm692, %v1710, %v1712
      %v1717 = vsel %vm496, %v1713, -1e+30
      %v1718 = vsel %vm497, %v1714, -1e+30
      %v1719 = vmax.f32 %v1695, %v1717
      %v1720 = vmax.f32 %v1696, %v1718
      %v1721 = vld [vmem:[#allocation4] sm:$0xff]
      %v1722 = vld [vmem:[#allocation4 + $0x8] sm:$0xf]
      %1725 = vst [vmem:[#allocation1] ss:$2 sm:$0xff] %v1721
      %s1726 = scalar_lea.vmem [#allocation1], 16
      %1727 = vst [vmem:[%s1726] ss:$2 sm:$0xff] %v1722
      %v1728 = vld.sshfl [vmem:[#allocation1] sm:$0xff pattern:$0x75316420]
      %v1729 = vld.sshfl [vmem:[#allocation1 + $0x8] sm:$0xff pattern:$0x75316420]
      %v1730 = vld.sshfl [vmem:[#allocation1 + $0x10] sm:$0xff pattern:$0x75316420]
      %1731 = vrot.lane.b32.xlu0 %v1728, 94
      %v1732 = vpop.permute.xlu0 %1731
      %1733 = vrot.lane.b32.xlu0 %v1729, 94
      %v1734 = vpop.permute.xlu0 %1733
      %1735 = vrot.lane.b32.xlu0 %v1730, 94
      %v1736 = vpop.permute.xlu0 %1735
      %v1737 = vsel %vm723, %v1732, %v1734
      %v1738 = vsel %vm723, %v1734, %v1736
      %v1741 = vsel %vm539, %v1737, -1e+30
      %v1742 = vsel %vm540, %v1738, -1e+30
      %v1743 = vmax.f32 %v1719, %v1741
      %v1744 = vmax.f32 %v1720, %v1742
      %v1745 = vld [vmem:[%s7] sm:$0xf]
      %v1746 = vld [vmem:[%s8] sm:$0xf]
      %1748 = vset.pattern.permute.xlu0 0
      %1749 = vperm.xlu0 %1748, %v1746
      %v1750 = vpop.permute.xlu0 %1749
      %v1753 = vsel %vm379, %v1745, 0
      %v1756 = vsel %vm386, %v1743, 0
      %v1759 = vsel %vm386, %v1744, 0
      %1761 = vmatpush.msra.mxu0 0.0
      %1762 = vmatpush.msra.mxu0 0.0
      %1763 = vmatpush.msra.mxu0 0.0
      %1764 = vmatpush.msra.mxu0 0.0
      %1765 = vmatpush.msra.mxu0 0.0
      %1766 = vmatpush.msra.mxu0 0.0
      %1767 = vmatpush.msra.mxu0 0.0
      %1768 = vmatpush.msra.mxu0 0.0
      %1769 = vmatpush.msra.mxu0 0.0
      %1770 = vmatpush.msra.mxu0 0.0
      %1771 = vmatpush.msra.mxu0 0.0
      %1772 = vmatpush.msra.mxu0 0.0
      %1773 = vmatpush.msra.mxu0 0.0
      %1774 = vmatpush.msra.mxu0 0.0
      %1775 = vmatpush.msra.mxu0 0.0
      %1776 = vmatpush.msra.mxu0 %v1756
      %1777 = vmatmul.f32.gmra.mxu0 %v1753
      %v1778 = vpop.f32.mrf.mxu0
      %v1779 = vadd.f32 %v1750, %v1778
      %1780 = vdwg.mxu0
      %1781 = vmatpush.msra.mxu0 0.0
      %1782 = vmatpush.msra.mxu0 0.0
      %1783 = vmatpush.msra.mxu0 0.0
      %1784 = vmatpush.msra.mxu0 0.0
      %1785 = vmatpush.msra.mxu0 0.0
      %1786 = vmatpush.msra.mxu0 0.0
      %1787 = vmatpush.msra.mxu0 0.0
      %1788 = vmatpush.msra.mxu0 0.0
      %1789 = vmatpush.msra.mxu0 0.0
      %1790 = vmatpush.msra.mxu0 0.0
      %1791 = vmatpush.msra.mxu0 0.0
      %1792 = vmatpush.msra.mxu0 0.0
      %1793 = vmatpush.msra.mxu0 0.0
      %1794 = vmatpush.msra.mxu0 0.0
      %1795 = vmatpush.msra.mxu0 0.0
      %1796 = vmatpush.msra.mxu0 %v1759
      %1797 = vmatmul.f32.gmra.mxu0 %v1753
      %v1798 = vpop.f32.mrf.mxu0
      %v1799 = vadd.f32 %v1750, %v1798
      %1800 = vdwg.mxu0
      %v1801 = vmax.f32 %v1779, 0.0
      %v1802 = vmax.f32 %v1799, 0.0
      %1803 = vst [vmem:[%s332] sm:$0xf] %v437
      %1804 = vst [vmem:[%s332 + $0x8] sm:$0xf] %v438
      %v1807 = vrot.slane %v799, 4
      %v1808 = vrot.slane %v800, 4
      %1811 = vst [vmem:[%s332] sm:$0xf0] %v1807
      %1812 = vst [vmem:[%s332 + $0x8] sm:$0xf0] %v1808
      %1813 = vst [vmem:[%s332 + $0x10] sm:$0xf] %v1807
      %1814 = vst [vmem:[%s332 + $0x18] sm:$0xf] %v1808
      %v1817 = vrot.slane %v1532, 4
      %v1818 = vrot.slane %v1533, 4
      %1821 = vst [vmem:[%s332 + $0x10] sm:$0xf0] %v1817
      %1822 = vst [vmem:[%s332 + $0x18] sm:$0xf0] %v1818
      %1823 = vst [vmem:[%s332 + $0x20] sm:$0xf] %v1801
      %1824 = vst [vmem:[%s332 + $0x28] sm:$0xf] %v1802
      %p1825 = scmp.lt.s32.totalorder %s20, 1
      %s1826 = scalar_select %p1825, %s20, 1
      %s1827 = smul.addr %s1826, 6
      %s1828 = smul.addr %s1827, 8
      %s1829 = scalar_lea.vmem %s9, %s1828
      // Predicated region
      $region57: #{tpu_custom_call.1} parent=55 // pred_check
        %p1830 = pneg %p232
      $region58: #{tpu_custom_call.1} parent=55 // pred_check_branch
        %1832 = sbr.rel (%p1830) target = $region60
      $region59: #{tpu_custom_call.1} parent=55 // pred_region
        _
      $region60: #{tpu_custom_call.1} parent=55 // pred_fallthru
        _
    $region56: #{tpu_custom_call.1} parent=5 // pred_fallthru
      _
    %p1833 = scmp.le.s32.totalorder 2, %s15
    // Predicated region
    $region61: #{tpu_custom_call.1} parent=5 // pred_check
      %p1834 = pneg %p1833
    $region62: #{tpu_custom_call.1} parent=5 // pred_check_branch
      %1836 = sbr.rel (%p1834) target = $region64
    $region63: #{tpu_custom_call.1} parent=5 // pred_region
      %s1837 = ssub.s32 %s15, 2
      // Predicated region
      $region65: #{tpu_custom_call.1} parent=63 // pred_check
        %p1838 = pneg %p238
      $region66: #{tpu_custom_call.1} parent=63 // pred_check_branch
        %1840 = sbr.rel (%p1838) target = $region68
      $region67: #{tpu_custom_call.1} parent=63 // pred_region
        %p1841 = scmp.lt.s32.totalorder %s21, 1
        %s1842 = scalar_select %p1841, %s21, 1
        %s1843 = smul.addr %s1842, 6
        %s1844 = smul.addr %s1843, 8
        %s1845 = scalar_lea.vmem %s9, %s1844
      $region68: #{tpu_custom_call.1} parent=63 // pred_fallthru
        _
    $region64: #{tpu_custom_call.1} parent=5 // pred_fallthru
      _
  $region6: #{tpu_custom_call.1} parent=0 // loop_footer
    %s19 = sadd.s32 1, %s15
  $region7: #{tpu_custom_call.1} parent=0 // loop_footer_branch
    %14 = sbr.rel target = $region3
  $region8: #{tpu_custom_call.1} parent=0 // loop_exit
    _

</llo_original>
